<compile_context>
chip_gen: v5e
topology: v5e:2x2
jax: 0.10.0
libtpu: 0.0.40
codegen_flags: <defaults>
</compile_context>

<pallas_src>
import numpy as np
import jax
import jax.numpy as jnp
from jax import lax
from jax.experimental import pallas as pl
from jax.experimental.pallas import tpu as pltpu


def _cdiv(a, b):
    return -(-a // b)


def _batch_tiling(batch, max_imgs_per_tile, img_multiple):
    """Split `batch` images into an even number (>=2) of equal-size tiles.

    Returns (imgs_per_tile, num_tiles).  imgs_per_tile is rounded up to
    `img_multiple`; the caller pads the batch to imgs_per_tile * num_tiles.
    >=2 steps keep the auto pipeline busy; an even count feeds both v7x TCs.
    """
    t = max(2, _cdiv(batch, max_imgs_per_tile))
    if t % 2:
        t += 1
    bpt = _cdiv(batch, t)
    bpt = _cdiv(bpt, img_multiple) * img_multiple
    return bpt, t


# ----------------------------------------------------------------------------
# Pallas kernels
# ----------------------------------------------------------------------------
def conv_pool_relu_kernel(p_ref, w_ref, b_ref, o_ref):
    """conv1 (im2col matmul) + 2x2 max-pool + bias + relu for one batch tile.

    p_ref : [4, tm, Fpad] bf16 — im2col patches, one leading block per pooling
                                 phase (rows within a phase: (image, i*12+j)).
    w_ref : [Fpad, 128]   bf16 — conv weights (Cout padded to 128).
    b_ref : [1, 128]      f32
    o_ref : [tm, 128]     bf16

    max(conv) + b == max(conv + b) for a per-channel bias; relu(0+0)==0 keeps
    padded channels zero.
    """
    y = jnp.dot(p_ref[0], w_ref[...], preferred_element_type=jnp.float32)
    for k in range(1, p_ref.shape[0]):
        y = jnp.maximum(
            y, jnp.dot(p_ref[k], w_ref[...], preferred_element_type=jnp.float32))
    o_ref[...] = jnp.maximum(y + b_ref[...], 0.0).astype(o_ref.dtype)


def conv2_mlp_kernel(ph_ref, wc_ref, bc_ref, w1_ref, b1_ref, w2_ref, b2_ref,
                     o_ref):
    """Fused conv2 + maxpool2 + relu + flatten + fc1 + relu + fc2 + log_softmax.

    ph_ref : [4, 16, tb, Fpad] bf16 — conv2 im2col; (phase, pooled position,
                                      image, features).
    wc_ref : [Fpad, 128] bf16 ; bc_ref : [1, 128] f32     (conv2)
    w1_ref : [16, 128, 128] bf16 — fc1 weights split into one [20,50] block per
                                   spatial position (NCHW flatten pre-folded).
    b1_ref : [1, 128] f32 ; w2_ref : [128, 128] bf16 ; b2_ref : [1, 128] f32
             (padded class lanes of b2 hold -1e30 so they vanish in softmax)
    o_ref  : [tb, 128] f32 — log-probs for this tile (classes 0:10 real).
    """
    nph, npos, tb, fpad = ph_ref.shape

    # conv2 as one long matmul per pooling phase (all 16 positions at once),
    # 2x2 max-pool == running max over the 4 phases, then bias + relu.
    def phase_dot(k):
        lhs = ph_ref[k].reshape(npos * tb, fpad)   # layout-free: tb % 8 == 0
        return jnp.dot(lhs, wc_ref[...], preferred_element_type=jnp.float32)

    y = phase_dot(0)
    for k in range(1, nph):
        y = jnp.maximum(y, phase_dot(k))
    y = jnp.maximum(y + bc_ref[...], 0.0)          # [16*tb, 128] f32
    yb = y.astype(jnp.bfloat16)

    # fc1: the PyTorch view(-1, 320) is folded into w1's 16 position blocks,
    # so fc1 == sum over positions of a [tb,128]x[128,128] matmul.
    h = jnp.dot(yb[0:tb], w1_ref[0], preferred_element_type=jnp.float32)
    for p in range(1, npos):
        h = h + jnp.dot(yb[p * tb:(p + 1) * tb], w1_ref[p],
                        preferred_element_type=jnp.float32)
    # TODO(synk): Dropout2d / F.dropout(training=...) are identities at
    # inference; train-mode stochastic dropout is not implemented.
    h = jnp.maximum(h + b1_ref[...], 0.0)          # fc1 bias + relu, [tb, 128]

    logits = jnp.dot(h.astype(jnp.bfloat16), w2_ref[...],
                     preferred_element_type=jnp.float32) + b2_ref[...]
    m = jnp.max(logits, axis=1, keepdims=True)
    lse = m + jnp.log(jnp.sum(jnp.exp(logits - m), axis=1, keepdims=True))
    o_ref[...] = logits - lse


# ----------------------------------------------------------------------------
# pallas_call wrappers
# ----------------------------------------------------------------------------
def conv_pool_relu(phases, w, b, *, rows_per_tile, tiles):
    """phases: [4, N, Fpad] bf16 (N == rows_per_tile * tiles) -> [N, 128] bf16."""
    n, fpad = phases.shape[1], phases.shape[2]
    cpad = w.shape[1]
    cost = pl.CostEstimate(
        flops=2 * 4 * n * fpad * cpad,
        transcendentals=0,
        bytes_accessed=phases.size * 2 + w.size * 2 + b.size * 4 + n * cpad * 2)
    return pl.pallas_call(
        conv_pool_relu_kernel,
        out_shape=jax.ShapeDtypeStruct((n, cpad), jnp.bfloat16),
        grid=(tiles,),
        in_specs=[pl.BlockSpec((4, rows_per_tile, fpad), lambda i: (0, i, 0)),
                  pl.BlockSpec((fpad, cpad), lambda i: (0, 0)),
                  pl.BlockSpec((1, cpad), lambda i: (0, 0))],
        out_specs=pl.BlockSpec((rows_per_tile, cpad), lambda i: (i, 0)),
        compiler_params=pltpu.CompilerParams(
            dimension_semantics=("parallel",)),
        cost_estimate=cost,
    )(phases, w, b)


def conv2_mlp_head(ph2, wc2, bc2, w1k, b1f, w2f, b2f, *, imgs_per_tile, tiles):
    """ph2: [4, 16, Bp, Fpad] bf16 -> [Bp, 128] f32 log-probs (classes 0:10)."""
    npos, bp, fpad = ph2.shape[1], ph2.shape[2], ph2.shape[3]
    cpad = wc2.shape[1]
    cost = pl.CostEstimate(
        flops=2 * bp * (4 * npos * fpad * cpad + npos * cpad * 128 + 128 * 128),
        transcendentals=2 * bp * 128,
        bytes_accessed=(ph2.size * 2 + wc2.size * 2 + w1k.size * 2
                        + w2f.size * 2 + (bc2.size + b1f.size + b2f.size) * 4
                        + bp * 128 * 4))
    return pl.pallas_call(
        conv2_mlp_kernel,
        out_shape=jax.ShapeDtypeStruct((bp, 128), jnp.float32),
        grid=(tiles,),
        in_specs=[pl.BlockSpec((4, npos, imgs_per_tile, fpad),
                               lambda i: (0, 0, i, 0)),
                  pl.BlockSpec(wc2.shape, lambda i: (0, 0)),
                  pl.BlockSpec(bc2.shape, lambda i: (0, 0)),
                  pl.BlockSpec(w1k.shape, lambda i: (0, 0, 0)),
                  pl.BlockSpec(b1f.shape, lambda i: (0, 0)),
                  pl.BlockSpec(w2f.shape, lambda i: (0, 0)),
                  pl.BlockSpec(b2f.shape, lambda i: (0, 0))],
        out_specs=pl.BlockSpec((imgs_per_tile, 128), lambda i: (i, 0)),
        compiler_params=pltpu.CompilerParams(
            dimension_semantics=("parallel",)),
        cost_estimate=cost,
    )(ph2, wc2, bc2, w1k, b1f, w2f, b2f)


# ----------------------------------------------------------------------------
# Glue: im2col + pooling-phase extraction (plain JAX; layout plumbing only)
# ----------------------------------------------------------------------------
def im2col_pool_phases(x_nhwc, K):
    """[B,H,W,C] -> [4, B, PH*PW, K*K*C]: one row block per 2x2 pooling phase.

    Phase (di,dj), position p=(i,j) holds the flattened (kh,kw,c) patch at
    output position (2i+di, 2j+dj) of the VALID convolution.
    """
    B, H, W, C = x_nhwc.shape
    OH, OW = H - K + 1, W - K + 1
    PH, PW = OH // 2, OW // 2
    rows = []
    for kh in range(K):
        cols = [x_nhwc[:, kh:kh + OH, kw:kw + OW, :] for kw in range(K)]
        rows.append(jnp.stack(cols, axis=3))           # [B, OH, OW, K, C]
    patches = jnp.stack(rows, axis=3).reshape(B, OH, OW, K * K * C)
    phases = [patches[:, di::2, dj::2, :].reshape(B, PH * PW, K * K * C)
              for di in range(2) for dj in range(2)]
    return jnp.stack(phases, axis=0)                   # [4, B, PH*PW, F]


# ----------------------------------------------------------------------------
# Full forward pass
# ----------------------------------------------------------------------------
def net_forward(x_nchw, params):
    w1, b1, w2, b2, wf1, bf1, wf2, bf2 = params
    B = x_nchw.shape[0]

    # ----- stage 1: conv1 -> maxpool2 -> relu (one pallas_call) -------------
    bpt1, t1 = _batch_tiling(B, 14, 1)       # <=14 imgs/tile -> <=2016 rows/tile
    B1 = bpt1 * t1
    x = jnp.transpose(x_nchw, (0, 2, 3, 1)).astype(jnp.bfloat16)       # NHWC
    x = jnp.pad(x, ((0, B1 - B), (0, 0), (0, 0), (0, 0)))
    ph1 = im2col_pool_phases(x, 5).reshape(4, B1 * 144, 25)
    ph1 = jnp.pad(ph1, ((0, 0), (0, 0), (0, 128 - 25)))                # F->128
    wc1 = jnp.pad(jnp.transpose(w1, (2, 3, 1, 0)).reshape(25, 10),
                  ((0, 128 - 25), (0, 128 - 10))).astype(jnp.bfloat16)
    bc1 = jnp.pad(b1, (0, 128 - 10)).astype(jnp.float32)[None, :]
    y1p = conv_pool_relu(ph1, wc1, bc1, rows_per_tile=144 * bpt1, tiles=t1)
    # y1p: [B1*144, 128] bf16, rows (image, 12*i + j); NOT sliced — the im2col
    # gather below indexes channels 0:10 itself.

    # ----- stage 2: conv2 + pool + relu + flatten + fc1 + fc2 + log_softmax -
    bpt2, t2 = _batch_tiling(B1, 64, 8)      # imgs/tile multiple of 8 (sublanes)
    B2 = bpt2 * t2
    y1 = y1p.reshape(B1, 12, 12, 128)[..., :10]
    ph2 = im2col_pool_phases(y1, 5)                    # [4, B1, 16, 250]
    ph2 = jnp.transpose(ph2, (0, 2, 1, 3))             # [4, 16, B1, 250]
    ph2 = jnp.pad(ph2, ((0, 0), (0, 0), (0, B2 - B1), (0, 256 - 250)))

    wc2 = jnp.pad(jnp.transpose(w2, (2, 3, 1, 0)).reshape(250, 20),
                  ((0, 256 - 250), (0, 128 - 20))).astype(jnp.bfloat16)
    bc2 = jnp.pad(b2, (0, 128 - 20)).astype(jnp.float32)[None, :]
    # fc1 with the PyTorch NCHW flatten (feature index = c*16 + p) folded into
    # 16 per-position [20, 50] weight blocks (a compile-time permutation).
    w1k = jnp.transpose(wf1.T.reshape(20, 16, 50), (1, 0, 2))   # [16, 20, 50]
    w1k = jnp.pad(w1k, ((0, 0), (0, 128 - 20), (0, 128 - 50))).astype(jnp.bfloat16)
    b1f = jnp.pad(bf1, (0, 128 - 50)).astype(jnp.float32)[None, :]
    w2f = jnp.pad(wf2.T, ((0, 128 - 50), (0, 128 - 10))).astype(jnp.bfloat16)
    # Padded class lanes get a -inf-like bias so they vanish from log_softmax.
    b2f = jnp.concatenate([bf2.astype(jnp.float32),
                           jnp.full((128 - 10,), -1e30, jnp.float32)])[None, :]

    out = conv2_mlp_head(ph2, wc2, bc2, w1k, b1f, w2f, b2f,
                         imgs_per_tile=bpt2, tiles=t2)
    return out[:B, :10]                       # keep: drops -1e30 pad lanes/rows


# ----------------------------------------------------------------------------
# Pure-JAX f32 reference (mirrors PyTorch ops exactly) for self-check
# ----------------------------------------------------------------------------
def reference_forward(x_nchw, params):
    w1, b1, w2, b2, wf1, bf1, wf2, bf2 = params
    dn = ("NCHW", "OIHW", "NCHW")

    y = lax.conv_general_dilated(x_nchw, w1, (1, 1), "VALID", dimension_numbers=dn)
    y = y + b1[None, :, None, None]
    y = lax.reduce_window(y, -jnp.inf, lax.max, (1, 1, 2, 2), (1, 1, 2, 2), "VALID")
    y = jnp.maximum(y, 0.0)

    y = lax.conv_general_dilated(y, w2, (1, 1), "VALID", dimension_numbers=dn)
    y = y + b2[None, :, None, None]
    y = lax.reduce_window(y, -jnp.inf, lax.max, (1, 1, 2, 2), (1, 1, 2, 2), "VALID")
    y = jnp.maximum(y, 0.0)

    y = y.reshape(y.shape[0], -1)                                 # [B, 320]
    y = jnp.maximum(y @ wf1.T + bf1, 0.0)
    y = y @ wf2.T + bf2
    return jax.nn.log_softmax(y, axis=1)


# ----------------------------------------------------------------------------
# Main
# ----------------------------------------------------------------------------
def _uniform(key, shape, fan_in):
    bound = 1.0 / np.sqrt(fan_in)
    return jax.random.uniform(key, shape, jnp.float32, -bound, bound)


if __name__ == "__main__":
    key = jax.random.PRNGKey(0)
    ks = jax.random.split(key, 9)

    params = (
        _uniform(ks[0], (10, 1, 5, 5), 25),     # conv1.weight
        _uniform(ks[1], (10,), 25),             # conv1.bias
        _uniform(ks[2], (20, 10, 5, 5), 250),   # conv2.weight
        _uniform(ks[3], (20,), 250),            # conv2.bias
        _uniform(ks[4], (50, 320), 320),        # fc1.weight
        _uniform(ks[5], (50,), 320),            # fc1.bias
        _uniform(ks[6], (10, 50), 50),          # fc2.weight
        _uniform(ks[7], (10,), 50),             # fc2.bias
    )

    # MNIST-style input: 28x28 is required so that fc1's 320 features line up.
    x = jax.random.normal(ks[8], (2, 1, 28, 28), jnp.float32)

    out = jax.block_until_ready(jax.jit(net_forward)(x, params))
    ref = jax.block_until_ready(jax.jit(reference_forward)(x, params))

    err = float(jnp.max(jnp.abs(out - ref)))
    assert out.shape == (2, 10), out.shape
    # bf16 matmul operands / bf16 activation storage => relaxed vs f32 reference
    assert err < 2e-2, f"mismatch vs reference: max abs err = {err}"

    print("KERNEL_OK")
</pallas_src>

<mosaic_0001>
module attributes {stable_mosaic.version = 11 : i64} {
  func.func @conv_pool_relu_kernel(%arg0: i32, %arg1: memref<4x144x128xbf16, #tpu.memory_space<vmem>>, %arg2: memref<128x128xbf16, #tpu.memory_space<vmem>>, %arg3: memref<1x128xf32, #tpu.memory_space<vmem>>, %arg4: memref<144x128xbf16, #tpu.memory_space<vmem>>) attributes {dimension_semantics = [#tpu.dimension_semantics<parallel>], iteration_bounds = array<i64: 2>, scalar_prefetch = 0 : i64, scratch_operands = 0 : i64, tpu.core_type = #tpu.core_type<tc>, window_params = [{transform_indices = @transform_0, window_bounds = array<i64: 4, 144, 128>}, {pipeline_mode = #tpu.pipeline_mode<synchronous>, transform_indices = @transform_1, window_bounds = array<i64: 128, 128>}, {pipeline_mode = #tpu.pipeline_mode<synchronous>, transform_indices = @transform_2, window_bounds = array<i64: 1, 128>}, {transform_indices = @transform_3, window_bounds = array<i64: 144, 128>}]} {
    %c0 = arith.constant 0 : index
    %c0_0 = arith.constant 0 : index
    %c0_1 = arith.constant 0 : index
    %0 = vector.load %arg1[%c0, %c0_0, %c0_1] : memref<4x144x128xbf16, #tpu.memory_space<vmem>>, vector<1x144x128xbf16>
    %1 = vector.shape_cast %0 : vector<1x144x128xbf16> to vector<144x128xbf16>
    %c0_2 = arith.constant 0 : index
    %c0_3 = arith.constant 0 : index
    %2 = vector.load %arg2[%c0_2, %c0_3] : memref<128x128xbf16, #tpu.memory_space<vmem>>, vector<128x128xbf16>
    %cst = arith.constant dense<0.000000e+00> : vector<144x128xf32>
    %3 = tpu.matmul %1, %2, %cst {dimension_numbers = #tpu.dot_dimension_numbers<[1], [0], [0], [1], [0, 0, 1, 1], [], []>} : vector<144x128xbf16>, vector<128x128xbf16>, vector<144x128xf32> -> vector<144x128xf32>
    %c1 = arith.constant 1 : index
    %c0_4 = arith.constant 0 : index
    %c0_5 = arith.constant 0 : index
    %4 = vector.load %arg1[%c1, %c0_4, %c0_5] : memref<4x144x128xbf16, #tpu.memory_space<vmem>>, vector<1x144x128xbf16>
    %5 = vector.shape_cast %4 : vector<1x144x128xbf16> to vector<144x128xbf16>
    %c0_6 = arith.constant 0 : index
    %c0_7 = arith.constant 0 : index
    %6 = vector.load %arg2[%c0_6, %c0_7] : memref<128x128xbf16, #tpu.memory_space<vmem>>, vector<128x128xbf16>
    %cst_8 = arith.constant dense<0.000000e+00> : vector<144x128xf32>
    %7 = tpu.matmul %5, %6, %cst_8 {dimension_numbers = #tpu.dot_dimension_numbers<[1], [0], [0], [1], [0, 0, 1, 1], [], []>} : vector<144x128xbf16>, vector<128x128xbf16>, vector<144x128xf32> -> vector<144x128xf32>
    %8 = arith.maximumf %3, %7 : vector<144x128xf32>
    %c2 = arith.constant 2 : index
    %c0_9 = arith.constant 0 : index
    %c0_10 = arith.constant 0 : index
    %9 = vector.load %arg1[%c2, %c0_9, %c0_10] : memref<4x144x128xbf16, #tpu.memory_space<vmem>>, vector<1x144x128xbf16>
    %10 = vector.shape_cast %9 : vector<1x144x128xbf16> to vector<144x128xbf16>
    %c0_11 = arith.constant 0 : index
    %c0_12 = arith.constant 0 : index
    %11 = vector.load %arg2[%c0_11, %c0_12] : memref<128x128xbf16, #tpu.memory_space<vmem>>, vector<128x128xbf16>
    %cst_13 = arith.constant dense<0.000000e+00> : vector<144x128xf32>
    %12 = tpu.matmul %10, %11, %cst_13 {dimension_numbers = #tpu.dot_dimension_numbers<[1], [0], [0], [1], [0, 0, 1, 1], [], []>} : vector<144x128xbf16>, vector<128x128xbf16>, vector<144x128xf32> -> vector<144x128xf32>
    %13 = arith.maximumf %8, %12 : vector<144x128xf32>
    %c3 = arith.constant 3 : index
    %c0_14 = arith.constant 0 : index
    %c0_15 = arith.constant 0 : index
    %14 = vector.load %arg1[%c3, %c0_14, %c0_15] : memref<4x144x128xbf16, #tpu.memory_space<vmem>>, vector<1x144x128xbf16>
    %15 = vector.shape_cast %14 : vector<1x144x128xbf16> to vector<144x128xbf16>
    %c0_16 = arith.constant 0 : index
    %c0_17 = arith.constant 0 : index
    %16 = vector.load %arg2[%c0_16, %c0_17] : memref<128x128xbf16, #tpu.memory_space<vmem>>, vector<128x128xbf16>
    %cst_18 = arith.constant dense<0.000000e+00> : vector<144x128xf32>
    %17 = tpu.matmul %15, %16, %cst_18 {dimension_numbers = #tpu.dot_dimension_numbers<[1], [0], [0], [1], [0, 0, 1, 1], [], []>} : vector<144x128xbf16>, vector<128x128xbf16>, vector<144x128xf32> -> vector<144x128xf32>
    %18 = arith.maximumf %13, %17 : vector<144x128xf32>
    %c0_19 = arith.constant 0 : index
    %c0_20 = arith.constant 0 : index
    %19 = vector.load %arg3[%c0_19, %c0_20] : memref<1x128xf32, #tpu.memory_space<vmem>>, vector<1x128xf32>
    %20 = vector.broadcast %19 : vector<1x128xf32> to vector<144x128xf32>
    %21 = arith.addf %18, %20 : vector<144x128xf32>
    %cst_21 = arith.constant 0.000000e+00 : f32
    %22 = vector.broadcast %cst_21 : f32 to vector<144x128xf32>
    %23 = arith.maximumf %21, %22 : vector<144x128xf32>
    %24 = arith.truncf %23 : vector<144x128xf32> to vector<144x128xbf16>
    %c0_22 = arith.constant 0 : index
    %c0_23 = arith.constant 0 : index
    %25 = vector.load %arg4[%c0_22, %c0_23] : memref<144x128xbf16, #tpu.memory_space<vmem>>, vector<144x128xbf16>
    tpu.vector_store %arg4[%c0_22, %c0_23], %24 {strides = array<i32>} : memref<144x128xbf16, #tpu.memory_space<vmem>>, vector<144x128xbf16>,
    return
  }
  func.func @transform_0(%arg0: i32) -> (i32, i32, i32) {
    %c0_i32 = arith.constant 0 : i32
    %c0_i32_0 = arith.constant 0 : i32
    %c0_i32_1 = arith.constant 0 : i32
    return %c0_i32, %arg0, %c0_i32_0 : i32, i32, i32
  }
  func.func @transform_1(%arg0: i32) -> (i32, i32) {
    %c0_i32 = arith.constant 0 : i32
    %c0_i32_0 = arith.constant 0 : i32
    %c0_i32_1 = arith.constant 0 : i32
    return %c0_i32, %c0_i32_0 : i32, i32
  }
  func.func @transform_2(%arg0: i32) -> (i32, i32) {
    %c0_i32 = arith.constant 0 : i32
    %c0_i32_0 = arith.constant 0 : i32
    %c0_i32_1 = arith.constant 0 : i32
    return %c0_i32, %c0_i32_0 : i32, i32
  }
  func.func @transform_3(%arg0: i32) -> (i32, i32) {
    %c0_i32 = arith.constant 0 : i32
    %c0_i32_0 = arith.constant 0 : i32
    return %arg0, %c0_i32 : i32, i32
  }
}

module attributes {stable_mosaic.version = 11 : i64} {
  func.func @conv2_mlp_kernel(%arg0: i32, %arg1: memref<4x16x8x256xbf16, #tpu.memory_space<vmem>>, %arg2: memref<256x128xbf16, #tpu.memory_space<vmem>>, %arg3: memref<1x128xf32, #tpu.memory_space<vmem>>, %arg4: memref<16x128x128xbf16, #tpu.memory_space<vmem>>, %arg5: memref<1x128xf32, #tpu.memory_space<vmem>>, %arg6: memref<128x128xbf16, #tpu.memory_space<vmem>>, %arg7: memref<1x128xf32, #tpu.memory_space<vmem>>, %arg8: memref<8x128xf32, #tpu.memory_space<vmem>>) attributes {dimension_semantics = [#tpu.dimension_semantics<parallel>], iteration_bounds = array<i64: 2>, scalar_prefetch = 0 : i64, scratch_operands = 0 : i64, tpu.core_type = #tpu.core_type<tc>, window_params = [{transform_indices = @transform_0, window_bounds = array<i64: 4, 16, 8, 256>}, {pipeline_mode = #tpu.pipeline_mode<synchronous>, transform_indices = @transform_1, window_bounds = array<i64: 256, 128>}, {pipeline_mode = #tpu.pipeline_mode<synchronous>, transform_indices = @transform_2, window_bounds = array<i64: 1, 128>}, {pipeline_mode = #tpu.pipeline_mode<synchronous>, transform_indices = @transform_3, window_bounds = array<i64: 16, 128, 128>}, {pipeline_mode = #tpu.pipeline_mode<synchronous>, transform_indices = @transform_4, window_bounds = array<i64: 1, 128>}, {pipeline_mode = #tpu.pipeline_mode<synchronous>, transform_indices = @transform_5, window_bounds = array<i64: 128, 128>}, {pipeline_mode = #tpu.pipeline_mode<synchronous>, transform_indices = @transform_6, window_bounds = array<i64: 1, 128>}, {transform_indices = @transform_7, window_bounds = array<i64: 8, 128>}]} {
    %c0 = arith.constant 0 : index
    %c0_0 = arith.constant 0 : index
    %c0_1 = arith.constant 0 : index
    %c0_2 = arith.constant 0 : index
    %0 = vector.load %arg1[%c0, %c0_0, %c0_1, %c0_2] : memref<4x16x8x256xbf16, #tpu.memory_space<vmem>>, vector<1x16x8x256xbf16>
    %1 = vector.shape_cast %0 : vector<1x16x8x256xbf16> to vector<16x8x256xbf16>
    %2 = vector.shape_cast %1 : vector<16x8x256xbf16> to vector<128x256xbf16>
    %c0_3 = arith.constant 0 : index
    %c0_4 = arith.constant 0 : index
    %3 = vector.load %arg2[%c0_3, %c0_4] : memref<256x128xbf16, #tpu.memory_space<vmem>>, vector<256x128xbf16>
    %cst = arith.constant dense<0.000000e+00> : vector<128x128xf32>
    %4 = tpu.matmul %2, %3, %cst {dimension_numbers = #tpu.dot_dimension_numbers<[1], [0], [0], [1], [0, 0, 1, 1], [], []>} : vector<128x256xbf16>, vector<256x128xbf16>, vector<128x128xf32> -> vector<128x128xf32>
    %c1 = arith.constant 1 : index
    %c0_5 = arith.constant 0 : index
    %c0_6 = arith.constant 0 : index
    %c0_7 = arith.constant 0 : index
    %5 = vector.load %arg1[%c1, %c0_5, %c0_6, %c0_7] : memref<4x16x8x256xbf16, #tpu.memory_space<vmem>>, vector<1x16x8x256xbf16>
    %6 = vector.shape_cast %5 : vector<1x16x8x256xbf16> to vector<16x8x256xbf16>
    %7 = vector.shape_cast %6 : vector<16x8x256xbf16> to vector<128x256xbf16>
    %c0_8 = arith.constant 0 : index
    %c0_9 = arith.constant 0 : index
    %8 = vector.load %arg2[%c0_8, %c0_9] : memref<256x128xbf16, #tpu.memory_space<vmem>>, vector<256x128xbf16>
    %cst_10 = arith.constant dense<0.000000e+00> : vector<128x128xf32>
    %9 = tpu.matmul %7, %8, %cst_10 {dimension_numbers = #tpu.dot_dimension_numbers<[1], [0], [0], [1], [0, 0, 1, 1], [], []>} : vector<128x256xbf16>, vector<256x128xbf16>, vector<128x128xf32> -> vector<128x128xf32>
    %10 = arith.maximumf %4, %9 : vector<128x128xf32>
    %c2 = arith.constant 2 : index
    %c0_11 = arith.constant 0 : index
    %c0_12 = arith.constant 0 : index
    %c0_13 = arith.constant 0 : index
    %11 = vector.load %arg1[%c2, %c0_11, %c0_12, %c0_13] : memref<4x16x8x256xbf16, #tpu.memory_space<vmem>>, vector<1x16x8x256xbf16>
    %12 = vector.shape_cast %11 : vector<1x16x8x256xbf16> to vector<16x8x256xbf16>
    %13 = vector.shape_cast %12 : vector<16x8x256xbf16> to vector<128x256xbf16>
    %c0_14 = arith.constant 0 : index
    %c0_15 = arith.constant 0 : index
    %14 = vector.load %arg2[%c0_14, %c0_15] : memref<256x128xbf16, #tpu.memory_space<vmem>>, vector<256x128xbf16>
    %cst_16 = arith.constant dense<0.000000e+00> : vector<128x128xf32>
    %15 = tpu.matmul %13, %14, %cst_16 {dimension_numbers = #tpu.dot_dimension_numbers<[1], [0], [0], [1], [0, 0, 1, 1], [], []>} : vector<128x256xbf16>, vector<256x128xbf16>, vector<128x128xf32> -> vector<128x128xf32>
    %16 = arith.maximumf %10, %15 : vector<128x128xf32>
    %c3 = arith.constant 3 : index
    %c0_17 = arith.constant 0 : index
    %c0_18 = arith.constant 0 : index
    %c0_19 = arith.constant 0 : index
    %17 = vector.load %arg1[%c3, %c0_17, %c0_18, %c0_19] : memref<4x16x8x256xbf16, #tpu.memory_space<vmem>>, vector<1x16x8x256xbf16>
    %18 = vector.shape_cast %17 : vector<1x16x8x256xbf16> to vector<16x8x256xbf16>
    %19 = vector.shape_cast %18 : vector<16x8x256xbf16> to vector<128x256xbf16>
    %c0_20 = arith.constant 0 : index
    %c0_21 = arith.constant 0 : index
    %20 = vector.load %arg2[%c0_20, %c0_21] : memref<256x128xbf16, #tpu.memory_space<vmem>>, vector<256x128xbf16>
    %cst_22 = arith.constant dense<0.000000e+00> : vector<128x128xf32>
    %21 = tpu.matmul %19, %20, %cst_22 {dimension_numbers = #tpu.dot_dimension_numbers<[1], [0], [0], [1], [0, 0, 1, 1], [], []>} : vector<128x256xbf16>, vector<256x128xbf16>, vector<128x128xf32> -> vector<128x128xf32>
    %22 = arith.maximumf %16, %21 : vector<128x128xf32>
    %c0_23 = arith.constant 0 : index
    %c0_24 = arith.constant 0 : index
    %23 = vector.load %arg3[%c0_23, %c0_24] : memref<1x128xf32, #tpu.memory_space<vmem>>, vector<1x128xf32>
    %24 = vector.broadcast %23 : vector<1x128xf32> to vector<128x128xf32>
    %25 = arith.addf %22, %24 : vector<128x128xf32>
    %cst_25 = arith.constant 0.000000e+00 : f32
    %26 = vector.broadcast %cst_25 : f32 to vector<128x128xf32>
    %27 = arith.maximumf %25, %26 : vector<128x128xf32>
    %28 = arith.truncf %27 : vector<128x128xf32> to vector<128x128xbf16>
    %29 = vector.extract_strided_slice %28 {offsets = [0, 0], sizes = [8, 128], strides = [1, 1]} : vector<128x128xbf16> to vector<8x128xbf16>
    %c0_26 = arith.constant 0 : index
    %c0_27 = arith.constant 0 : index
    %c0_28 = arith.constant 0 : index
    %30 = vector.load %arg4[%c0_26, %c0_27, %c0_28] : memref<16x128x128xbf16, #tpu.memory_space<vmem>>, vector<1x128x128xbf16>
    %31 = vector.shape_cast %30 : vector<1x128x128xbf16> to vector<128x128xbf16>
    %cst_29 = arith.constant dense<0.000000e+00> : vector<8x128xf32>
    %32 = tpu.matmul %29, %31, %cst_29 {dimension_numbers = #tpu.dot_dimension_numbers<[1], [0], [0], [1], [0, 0, 1, 1], [], []>} : vector<8x128xbf16>, vector<128x128xbf16>, vector<8x128xf32> -> vector<8x128xf32>
    %33 = vector.extract_strided_slice %28 {offsets = [8, 0], sizes = [8, 128], strides = [1, 1]} : vector<128x128xbf16> to vector<8x128xbf16>
    %c1_30 = arith.constant 1 : index
    %c0_31 = arith.constant 0 : index
    %c0_32 = arith.constant 0 : index
    %34 = vector.load %arg4[%c1_30, %c0_31, %c0_32] : memref<16x128x128xbf16, #tpu.memory_space<vmem>>, vector<1x128x128xbf16>
    %35 = vector.shape_cast %34 : vector<1x128x128xbf16> to vector<128x128xbf16>
    %cst_33 = arith.constant dense<0.000000e+00> : vector<8x128xf32>
    %36 = tpu.matmul %33, %35, %cst_33 {dimension_numbers = #tpu.dot_dimension_numbers<[1], [0], [0], [1], [0, 0, 1, 1], [], []>} : vector<8x128xbf16>, vector<128x128xbf16>, vector<8x128xf32> -> vector<8x128xf32>
    %37 = arith.addf %32, %36 : vector<8x128xf32>
    %38 = vector.extract_strided_slice %28 {offsets = [16, 0], sizes = [8, 128], strides = [1, 1]} : vector<128x128xbf16> to vector<8x128xbf16>
    %c2_34 = arith.constant 2 : index
    %c0_35 = arith.constant 0 : index
    %c0_36 = arith.constant 0 : index
    %39 = vector.load %arg4[%c2_34, %c0_35, %c0_36] : memref<16x128x128xbf16, #tpu.memory_space<vmem>>, vector<1x128x128xbf16>
    %40 = vector.shape_cast %39 : vector<1x128x128xbf16> to vector<128x128xbf16>
    %cst_37 = arith.constant dense<0.000000e+00> : vector<8x128xf32>
    %41 = tpu.matmul %38, %40, %cst_37 {dimension_numbers = #tpu.dot_dimension_numbers<[1], [0], [0], [1], [0, 0, 1, 1], [], []>} : vector<8x128xbf16>, vector<128x128xbf16>, vector<8x128xf32> -> vector<8x128xf32>
    %42 = arith.addf %37, %41 : vector<8x128xf32>
    %43 = vector.extract_strided_slice %28 {offsets = [24, 0], sizes = [8, 128], strides = [1, 1]} : vector<128x128xbf16> to vector<8x128xbf16>
    %c3_38 = arith.constant 3 : index
    %c0_39 = arith.constant 0 : index
    %c0_40 = arith.constant 0 : index
    %44 = vector.load %arg4[%c3_38, %c0_39, %c0_40] : memref<16x128x128xbf16, #tpu.memory_space<vmem>>, vector<1x128x128xbf16>
    %45 = vector.shape_cast %44 : vector<1x128x128xbf16> to vector<128x128xbf16>
    %cst_41 = arith.constant dense<0.000000e+00> : vector<8x128xf32>
    %46 = tpu.matmul %43, %45, %cst_41 {dimension_numbers = #tpu.dot_dimension_numbers<[1], [0], [0], [1], [0, 0, 1, 1], [], []>} : vector<8x128xbf16>, vector<128x128xbf16>, vector<8x128xf32> -> vector<8x128xf32>
    %47 = arith.addf %42, %46 : vector<8x128xf32>
    %48 = vector.extract_strided_slice %28 {offsets = [32, 0], sizes = [8, 128], strides = [1, 1]} : vector<128x128xbf16> to vector<8x128xbf16>
    %c4 = arith.constant 4 : index
    %c0_42 = arith.constant 0 : index
    %c0_43 = arith.constant 0 : index
    %49 = vector.load %arg4[%c4, %c0_42, %c0_43] : memref<16x128x128xbf16, #tpu.memory_space<vmem>>, vector<1x128x128xbf16>
    %50 = vector.shape_cast %49 : vector<1x128x128xbf16> to vector<128x128xbf16>
    %cst_44 = arith.constant dense<0.000000e+00> : vector<8x128xf32>
    %51 = tpu.matmul %48, %50, %cst_44 {dimension_numbers = #tpu.dot_dimension_numbers<[1], [0], [0], [1], [0, 0, 1, 1], [], []>} : vector<8x128xbf16>, vector<128x128xbf16>, vector<8x128xf32> -> vector<8x128xf32>
    %52 = arith.addf %47, %51 : vector<8x128xf32>
    %53 = vector.extract_strided_slice %28 {offsets = [40, 0], sizes = [8, 128], strides = [1, 1]} : vector<128x128xbf16> to vector<8x128xbf16>
    %c5 = arith.constant 5 : index
    %c0_45 = arith.constant 0 : index
    %c0_46 = arith.constant 0 : index
    %54 = vector.load %arg4[%c5, %c0_45, %c0_46] : memref<16x128x128xbf16, #tpu.memory_space<vmem>>, vector<1x128x128xbf16>
    %55 = vector.shape_cast %54 : vector<1x128x128xbf16> to vector<128x128xbf16>
    %cst_47 = arith.constant dense<0.000000e+00> : vector<8x128xf32>
    %56 = tpu.matmul %53, %55, %cst_47 {dimension_numbers = #tpu.dot_dimension_numbers<[1], [0], [0], [1], [0, 0, 1, 1], [], []>} : vector<8x128xbf16>, vector<128x128xbf16>, vector<8x128xf32> -> vector<8x128xf32>
    %57 = arith.addf %52, %56 : vector<8x128xf32>
    %58 = vector.extract_strided_slice %28 {offsets = [48, 0], sizes = [8, 128], strides = [1, 1]} : vector<128x128xbf16> to vector<8x128xbf16>
    %c6 = arith.constant 6 : index
    %c0_48 = arith.constant 0 : index
    %c0_49 = arith.constant 0 : index
    %59 = vector.load %arg4[%c6, %c0_48, %c0_49] : memref<16x128x128xbf16, #tpu.memory_space<vmem>>, vector<1x128x128xbf16>
    %60 = vector.shape_cast %59 : vector<1x128x128xbf16> to vector<128x128xbf16>
    %cst_50 = arith.constant dense<0.000000e+00> : vector<8x128xf32>
    %61 = tpu.matmul %58, %60, %cst_50 {dimension_numbers = #tpu.dot_dimension_numbers<[1], [0], [0], [1], [0, 0, 1, 1], [], []>} : vector<8x128xbf16>, vector<128x128xbf16>, vector<8x128xf32> -> vector<8x128xf32>
    %62 = arith.addf %57, %61 : vector<8x128xf32>
    %63 = vector.extract_strided_slice %28 {offsets = [56, 0], sizes = [8, 128], strides = [1, 1]} : vector<128x128xbf16> to vector<8x128xbf16>
    %c7 = arith.constant 7 : index
    %c0_51 = arith.constant 0 : index
    %c0_52 = arith.constant 0 : index
    %64 = vector.load %arg4[%c7, %c0_51, %c0_52] : memref<16x128x128xbf16, #tpu.memory_space<vmem>>, vector<1x128x128xbf16>
    %65 = vector.shape_cast %64 : vector<1x128x128xbf16> to vector<128x128xbf16>
    %cst_53 = arith.constant dense<0.000000e+00> : vector<8x128xf32>
    %66 = tpu.matmul %63, %65, %cst_53 {dimension_numbers = #tpu.dot_dimension_numbers<[1], [0], [0], [1], [0, 0, 1, 1], [], []>} : vector<8x128xbf16>, vector<128x128xbf16>, vector<8x128xf32> -> vector<8x128xf32>
    %67 = arith.addf %62, %66 : vector<8x128xf32>
    %68 = vector.extract_strided_slice %28 {offsets = [64, 0], sizes = [8, 128], strides = [1, 1]} : vector<128x128xbf16> to vector<8x128xbf16>
    %c8 = arith.constant 8 : index
    %c0_54 = arith.constant 0 : index
    %c0_55 = arith.constant 0 : index
    %69 = vector.load %arg4[%c8, %c0_54, %c0_55] : memref<16x128x128xbf16, #tpu.memory_space<vmem>>, vector<1x128x128xbf16>
    %70 = vector.shape_cast %69 : vector<1x128x128xbf16> to vector<128x128xbf16>
    %cst_56 = arith.constant dense<0.000000e+00> : vector<8x128xf32>
    %71 = tpu.matmul %68, %70, %cst_56 {dimension_numbers = #tpu.dot_dimension_numbers<[1], [0], [0], [1], [0, 0, 1, 1], [], []>} : vector<8x128xbf16>, vector<128x128xbf16>, vector<8x128xf32> -> vector<8x128xf32>
    %72 = arith.addf %67, %71 : vector<8x128xf32>
    %73 = vector.extract_strided_slice %28 {offsets = [72, 0], sizes = [8, 128], strides = [1, 1]} : vector<128x128xbf16> to vector<8x128xbf16>
    %c9 = arith.constant 9 : index
    %c0_57 = arith.constant 0 : index
    %c0_58 = arith.constant 0 : index
    %74 = vector.load %arg4[%c9, %c0_57, %c0_58] : memref<16x128x128xbf16, #tpu.memory_space<vmem>>, vector<1x128x128xbf16>
    %75 = vector.shape_cast %74 : vector<1x128x128xbf16> to vector<128x128xbf16>
    %cst_59 = arith.constant dense<0.000000e+00> : vector<8x128xf32>
    %76 = tpu.matmul %73, %75, %cst_59 {dimension_numbers = #tpu.dot_dimension_numbers<[1], [0], [0], [1], [0, 0, 1, 1], [], []>} : vector<8x128xbf16>, vector<128x128xbf16>, vector<8x128xf32> -> vector<8x128xf32>
    %77 = arith.addf %72, %76 : vector<8x128xf32>
    %78 = vector.extract_strided_slice %28 {offsets = [80, 0], sizes = [8, 128], strides = [1, 1]} : vector<128x128xbf16> to vector<8x128xbf16>
    %c10 = arith.constant 10 : index
    %c0_60 = arith.constant 0 : index
    %c0_61 = arith.constant 0 : index
    %79 = vector.load %arg4[%c10, %c0_60, %c0_61] : memref<16x128x128xbf16, #tpu.memory_space<vmem>>, vector<1x128x128xbf16>
    %80 = vector.shape_cast %79 : vector<1x128x128xbf16> to vector<128x128xbf16>
    %cst_62 = arith.constant dense<0.000000e+00> : vector<8x128xf32>
    %81 = tpu.matmul %78, %80, %cst_62 {dimension_numbers = #tpu.dot_dimension_numbers<[1], [0], [0], [1], [0, 0, 1, 1], [], []>} : vector<8x128xbf16>, vector<128x128xbf16>, vector<8x128xf32> -> vector<8x128xf32>
    %82 = arith.addf %77, %81 : vector<8x128xf32>
    %83 = vector.extract_strided_slice %28 {offsets = [88, 0], sizes = [8, 128], strides = [1, 1]} : vector<128x128xbf16> to vector<8x128xbf16>
    %c11 = arith.constant 11 : index
    %c0_63 = arith.constant 0 : index
    %c0_64 = arith.constant 0 : index
    %84 = vector.load %arg4[%c11, %c0_63, %c0_64] : memref<16x128x128xbf16, #tpu.memory_space<vmem>>, vector<1x128x128xbf16>
    %85 = vector.shape_cast %84 : vector<1x128x128xbf16> to vector<128x128xbf16>
    %cst_65 = arith.constant dense<0.000000e+00> : vector<8x128xf32>
    %86 = tpu.matmul %83, %85, %cst_65 {dimension_numbers = #tpu.dot_dimension_numbers<[1], [0], [0], [1], [0, 0, 1, 1], [], []>} : vector<8x128xbf16>, vector<128x128xbf16>, vector<8x128xf32> -> vector<8x128xf32>
    %87 = arith.addf %82, %86 : vector<8x128xf32>
    %88 = vector.extract_strided_slice %28 {offsets = [96, 0], sizes = [8, 128], strides = [1, 1]} : vector<128x128xbf16> to vector<8x128xbf16>
    %c12 = arith.constant 12 : index
    %c0_66 = arith.constant 0 : index
    %c0_67 = arith.constant 0 : index
    %89 = vector.load %arg4[%c12, %c0_66, %c0_67] : memref<16x128x128xbf16, #tpu.memory_space<vmem>>, vector<1x128x128xbf16>
    %90 = vector.shape_cast %89 : vector<1x128x128xbf16> to vector<128x128xbf16>
    %cst_68 = arith.constant dense<0.000000e+00> : vector<8x128xf32>
    %91 = tpu.matmul %88, %90, %cst_68 {dimension_numbers = #tpu.dot_dimension_numbers<[1], [0], [0], [1], [0, 0, 1, 1], [], []>} : vector<8x128xbf16>, vector<128x128xbf16>, vector<8x128xf32> -> vector<8x128xf32>
    %92 = arith.addf %87, %91 : vector<8x128xf32>
    %93 = vector.extract_strided_slice %28 {offsets = [104, 0], sizes = [8, 128], strides = [1, 1]} : vector<128x128xbf16> to vector<8x128xbf16>
    %c13 = arith.constant 13 : index
    %c0_69 = arith.constant 0 : index
    %c0_70 = arith.constant 0 : index
    %94 = vector.load %arg4[%c13, %c0_69, %c0_70] : memref<16x128x128xbf16, #tpu.memory_space<vmem>>, vector<1x128x128xbf16>
    %95 = vector.shape_cast %94 : vector<1x128x128xbf16> to vector<128x128xbf16>
    %cst_71 = arith.constant dense<0.000000e+00> : vector<8x128xf32>
    %96 = tpu.matmul %93, %95, %cst_71 {dimension_numbers = #tpu.dot_dimension_numbers<[1], [0], [0], [1], [0, 0, 1, 1], [], []>} : vector<8x128xbf16>, vector<128x128xbf16>, vector<8x128xf32> -> vector<8x128xf32>
    %97 = arith.addf %92, %96 : vector<8x128xf32>
    %98 = vector.extract_strided_slice %28 {offsets = [112, 0], sizes = [8, 128], strides = [1, 1]} : vector<128x128xbf16> to vector<8x128xbf16>
    %c14 = arith.constant 14 : index
    %c0_72 = arith.constant 0 : index
    %c0_73 = arith.constant 0 : index
    %99 = vector.load %arg4[%c14, %c0_72, %c0_73] : memref<16x128x128xbf16, #tpu.memory_space<vmem>>, vector<1x128x128xbf16>
    %100 = vector.shape_cast %99 : vector<1x128x128xbf16> to vector<128x128xbf16>
    %cst_74 = arith.constant dense<0.000000e+00> : vector<8x128xf32>
    %101 = tpu.matmul %98, %100, %cst_74 {dimension_numbers = #tpu.dot_dimension_numbers<[1], [0], [0], [1], [0, 0, 1, 1], [], []>} : vector<8x128xbf16>, vector<128x128xbf16>, vector<8x128xf32> -> vector<8x128xf32>
    %102 = arith.addf %97, %101 : vector<8x128xf32>
    %103 = vector.extract_strided_slice %28 {offsets = [120, 0], sizes = [8, 128], strides = [1, 1]} : vector<128x128xbf16> to vector<8x128xbf16>
    %c15 = arith.constant 15 : index
    %c0_75 = arith.constant 0 : index
    %c0_76 = arith.constant 0 : index
    %104 = vector.load %arg4[%c15, %c0_75, %c0_76] : memref<16x128x128xbf16, #tpu.memory_space<vmem>>, vector<1x128x128xbf16>
    %105 = vector.shape_cast %104 : vector<1x128x128xbf16> to vector<128x128xbf16>
    %cst_77 = arith.constant dense<0.000000e+00> : vector<8x128xf32>
    %106 = tpu.matmul %103, %105, %cst_77 {dimension_numbers = #tpu.dot_dimension_numbers<[1], [0], [0], [1], [0, 0, 1, 1], [], []>} : vector<8x128xbf16>, vector<128x128xbf16>, vector<8x128xf32> -> vector<8x128xf32>
    %107 = arith.addf %102, %106 : vector<8x128xf32>
    %c0_78 = arith.constant 0 : index
    %c0_79 = arith.constant 0 : index
    %108 = vector.load %arg5[%c0_78, %c0_79] : memref<1x128xf32, #tpu.memory_space<vmem>>, vector<1x128xf32>
    %109 = vector.broadcast %108 : vector<1x128xf32> to vector<8x128xf32>
    %110 = arith.addf %107, %109 : vector<8x128xf32>
    %cst_80 = arith.constant 0.000000e+00 : f32
    %111 = vector.broadcast %cst_80 : f32 to vector<8x128xf32>
    %112 = arith.maximumf %110, %111 : vector<8x128xf32>
    %113 = arith.truncf %112 : vector<8x128xf32> to vector<8x128xbf16>
    %c0_81 = arith.constant 0 : index
    %c0_82 = arith.constant 0 : index
    %114 = vector.load %arg6[%c0_81, %c0_82] : memref<128x128xbf16, #tpu.memory_space<vmem>>, vector<128x128xbf16>
    %cst_83 = arith.constant dense<0.000000e+00> : vector<8x128xf32>
    %115 = tpu.matmul %113, %114, %cst_83 {dimension_numbers = #tpu.dot_dimension_numbers<[1], [0], [0], [1], [0, 0, 1, 1], [], []>} : vector<8x128xbf16>, vector<128x128xbf16>, vector<8x128xf32> -> vector<8x128xf32>
    %c0_84 = arith.constant 0 : index
    %c0_85 = arith.constant 0 : index
    %116 = vector.load %arg7[%c0_84, %c0_85] : memref<1x128xf32, #tpu.memory_space<vmem>>, vector<1x128xf32>
    %117 = vector.broadcast %116 : vector<1x128xf32> to vector<8x128xf32>
    %118 = arith.addf %115, %117 : vector<8x128xf32>
    %cst_86 = arith.constant dense<0xFF800000> : vector<8xf32>
    %119 = vector.multi_reduction <maximumf>, %118, %cst_86 [1] : vector<8x128xf32> to vector<8xf32>
    %120 = vector.shape_cast %119 : vector<8xf32> to vector<8x1xf32>
    %121 = vector.broadcast %120 : vector<8x1xf32> to vector<8x128xf32>
    %122 = arith.subf %118, %121 : vector<8x128xf32>
    %123 = math.exp %122 : vector<8x128xf32>
    %cst_87 = arith.constant dense<0.000000e+00> : vector<8xf32>
    %124 = vector.multi_reduction <add>, %123, %cst_87 [1] : vector<8x128xf32> to vector<8xf32>
    %125 = vector.shape_cast %124 : vector<8xf32> to vector<8x1xf32>
    %126 = math.log %125 : vector<8x1xf32>
    %127 = arith.addf %120, %126 : vector<8x1xf32>
    %128 = vector.broadcast %127 : vector<8x1xf32> to vector<8x128xf32>
    %129 = arith.subf %118, %128 : vector<8x128xf32>
    %c0_88 = arith.constant 0 : index
    %c0_89 = arith.constant 0 : index
    %130 = vector.load %arg8[%c0_88, %c0_89] : memref<8x128xf32, #tpu.memory_space<vmem>>, vector<8x128xf32>
    tpu.vector_store %arg8[%c0_88, %c0_89], %129 {strides = array<i32>} : memref<8x128xf32, #tpu.memory_space<vmem>>, vector<8x128xf32>,
    return
  }
  func.func @transform_0(%arg0: i32) -> (i32, i32, i32, i32) {
    %c0_i32 = arith.constant 0 : i32
    %c0_i32_0 = arith.constant 0 : i32
    %c0_i32_1 = arith.constant 0 : i32
    %c0_i32_2 = arith.constant 0 : i32
    return %c0_i32, %c0_i32_0, %arg0, %c0_i32_1 : i32, i32, i32, i32
  }
  func.func @transform_1(%arg0: i32) -> (i32, i32) {
    %c0_i32 = arith.constant 0 : i32
    %c0_i32_0 = arith.constant 0 : i32
    %c0_i32_1 = arith.constant 0 : i32
    return %c0_i32, %c0_i32_0 : i32, i32
  }
  func.func @transform_2(%arg0: i32) -> (i32, i32) {
    %c0_i32 = arith.constant 0 : i32
    %c0_i32_0 = arith.constant 0 : i32
    %c0_i32_1 = arith.constant 0 : i32
    return %c0_i32, %c0_i32_0 : i32, i32
  }
  func.func @transform_3(%arg0: i32) -> (i32, i32, i32) {
    %c0_i32 = arith.constant 0 : i32
    %c0_i32_0 = arith.constant 0 : i32
    %c0_i32_1 = arith.constant 0 : i32
    %c0_i32_2 = arith.constant 0 : i32
    return %c0_i32, %c0_i32_0, %c0_i32_1 : i32, i32, i32
  }
  func.func @transform_4(%arg0: i32) -> (i32, i32) {
    %c0_i32 = arith.constant 0 : i32
    %c0_i32_0 = arith.constant 0 : i32
    %c0_i32_1 = arith.constant 0 : i32
    return %c0_i32, %c0_i32_0 : i32, i32
  }
  func.func @transform_5(%arg0: i32) -> (i32, i32) {
    %c0_i32 = arith.constant 0 : i32
    %c0_i32_0 = arith.constant 0 : i32
    %c0_i32_1 = arith.constant 0 : i32
    return %c0_i32, %c0_i32_0 : i32, i32
  }
  func.func @transform_6(%arg0: i32) -> (i32, i32) {
    %c0_i32 = arith.constant 0 : i32
    %c0_i32_0 = arith.constant 0 : i32
    %c0_i32_1 = arith.constant 0 : i32
    return %c0_i32, %c0_i32_0 : i32, i32
  }
  func.func @transform_7(%arg0: i32) -> (i32, i32) {
    %c0_i32 = arith.constant 0 : i32
    %c0_i32_0 = arith.constant 0 : i32
    return %arg0, %c0_i32 : i32, i32
  }
}

</mosaic_0001>

<llo_original>
// kernel: net_forward.2
$region0: #{net_forward.2}
  #allocation0 [shape = 'u32[]', space=smem, size = 0x4, offset = 0x4, fixed_abs, tag = 'smem constant byte address 0x4 - core index']
  #allocation1 [shape = 'u32[72,128]{1,0:T(1,128)}', space=vmem, size = 0x9000, scoped, tag = 'internal scratch']
  %s0 = inlined_call_operand.vmem [shape: bf16[4,288,128], index: 0, kind: input, shape index: {}]
  %s1 = inlined_call_operand.vmem [shape: bf16[128,128], index: 1, kind: input, shape index: {}]
  %s2 = inlined_call_operand.vmem [shape: f32[1,128], index: 2, kind: input, shape index: {}]
  %s3 = inlined_call_operand.vmem [shape: bf16[288,128], index: 3, kind: output, shape index: {}]
  %s4 = sld [smem:[#allocation0]]
  $region86: #{net_forward.2} parent=0
    _
  %s6 = ssub.s32 1, %s4
  %s7 = scalar_select 0, %s6, %s4
  $region1: #{net_forward.2} parent=0
    #allocation2 [shape = 'u8[294912]{0}', space=vmem, size = 0x48000, scoped, tag = 'input window, operand 0']
    loop: start=0, step=1, limit=4
    $region2: #{net_forward.2} parent=1 // loop_pre_header
      _
    $region3: #{net_forward.2} parent=1 // loop_header
      %s9 = sphi 0, %s13
      %p10 = scmp.ge.s32.totalorder %s9, 4
      %s19 = sphi 0, %s21
      %s22 = sphi 0, %s19
      %s23 = sphi 0, %s22
      %s39 = sphi 0, %s23
      %s43 = sphi 0, %s43
      %s45 = sphi 0, %s43
      %s46 = sphi 0, %s45
      %s60 = sphi 0, %s46
      %s64 = sphi 0, %s64
      %s66 = sphi 0, %s64
      %s67 = sphi 0, %s66
      %s81 = sphi 0, %s67
      %s87 = sphi 0, %s89
      %s90 = sphi 0, %s87
      %s91 = sphi 0, %s90
      %s107 = sphi 0, %s91
    $region4: #{net_forward.2} parent=1 // loop_header_branch
      %12 = sbr.rel (%p10) target = $region8
    $region5: #{net_forward.2} parent=1 // loop_body
      %s14 = ssub.s32 %s9, 1
      %s15 = ssub.s32 %s9, 2
      %s16 = sadd.s32 %s9, 1
      %s17 = ssub.s32 %s9, %s16
      %p18 = scmp.eq.s32.totalorder %s17, 0
      %s20 = sadd.s32 %s19, 1
      %s21 = scalar_select %p18, %s19, %s20
      %p24 = pneg %p18
      %p25 = scmp.eq.s32.totalorder %s9, 1
      %p26 = por %p24, %p25
      %p27 = scmp.ne.s32.totalorder %s19, %s22
      %p28 = scmp.eq.s32.totalorder %s9, 0
      %p29 = por %p27, %p28
      %p30 = scmp.ne.s32.totalorder %s19, %s22
      %p31 = scmp.eq.s32.totalorder %s14, 1
      %p32 = por %p30, %p31
      %p33 = scmp.ne.s32.totalorder %s22, %s23
      %p34 = scmp.eq.s32.totalorder %s14, 0
      %p35 = por %p33, %p34
      %p36 = scmp.ne.s32.totalorder %s22, %s23
      %p37 = scmp.eq.s32.totalorder %s15, 1
      %p38 = por %p36, %p37
      %p40 = scmp.ne.s32.totalorder %s23, %s39
      %p41 = scmp.eq.s32.totalorder %s15, 0
      %p42 = por %p40, %p41
      %s44 = sadd.s32 %s43, 1
      %p47 = scmp.eq.s32.totalorder %s9, 1
      %p48 = scmp.ne.s32.totalorder %s43, %s45
      %p49 = scmp.eq.s32.totalorder %s9, 0
      %p50 = por %p48, %p49
      %p51 = scmp.ne.s32.totalorder %s43, %s45
      %p52 = scmp.eq.s32.totalorder %s14, 1
      %p53 = por %p51, %p52
      %p54 = scmp.ne.s32.totalorder %s45, %s46
      %p55 = scmp.eq.s32.totalorder %s14, 0
      %p56 = por %p54, %p55
      %p57 = scmp.ne.s32.totalorder %s45, %s46
      %p58 = scmp.eq.s32.totalorder %s15, 1
      %p59 = por %p57, %p58
      %p61 = scmp.ne.s32.totalorder %s46, %s60
      %p62 = scmp.eq.s32.totalorder %s15, 0
      %p63 = por %p61, %p62
      %s65 = sadd.s32 %s64, 1
      %p68 = scmp.eq.s32.totalorder %s9, 1
      %p69 = scmp.ne.s32.totalorder %s64, %s66
      %p70 = scmp.eq.s32.totalorder %s9, 0
      %p71 = por %p69, %p70
      %p72 = scmp.ne.s32.totalorder %s64, %s66
      %p73 = scmp.eq.s32.totalorder %s14, 1
      %p74 = por %p72, %p73
      %p75 = scmp.ne.s32.totalorder %s66, %s67
      %p76 = scmp.eq.s32.totalorder %s14, 0
      %p77 = por %p75, %p76
      %p78 = scmp.ne.s32.totalorder %s66, %s67
      %p79 = scmp.eq.s32.totalorder %s15, 1
      %p80 = por %p78, %p79
      %p82 = scmp.ne.s32.totalorder %s67, %s81
      %p83 = scmp.eq.s32.totalorder %s15, 0
      %p84 = por %p82, %p83
      %s85 = ssub.s32 %s9, %s16
      %p86 = scmp.eq.s32.totalorder %s85, 0
      %s88 = sadd.s32 %s87, 1
      %s89 = scalar_select %p86, %s87, %s88
      %p92 = pneg %p86
      %p93 = scmp.eq.s32.totalorder %s9, 1
      %p94 = por %p92, %p93
      %p95 = scmp.ne.s32.totalorder %s87, %s90
      %p96 = scmp.eq.s32.totalorder %s9, 0
      %p97 = por %p95, %p96
      %p98 = scmp.ne.s32.totalorder %s87, %s90
      %p99 = scmp.eq.s32.totalorder %s14, 1
      %p100 = por %p98, %p99
      %p101 = scmp.ne.s32.totalorder %s90, %s91
      %p102 = scmp.eq.s32.totalorder %s14, 0
      %p103 = por %p101, %p102
      %p104 = scmp.ne.s32.totalorder %s90, %s91
      %p105 = scmp.eq.s32.totalorder %s15, 1
      %p106 = por %p104, %p105
      %p108 = scmp.ne.s32.totalorder %s91, %s107
      %p109 = scmp.eq.s32.totalorder %s15, 0
      %p110 = por %p108, %p109
      %p111 = scmp.le.s32.totalorder 1, %s9
      %p112 = scmp.lt.s32.totalorder %s9, 3
      %p113 = pnand %p111, %p112
      %p114 = pneg %p113
      // Predicated region
      $region9: #{net_forward.2} parent=5 // pred_check
        _
      $region10: #{net_forward.2} parent=5 // pred_check_branch
        %116 = sbr.rel (%p113) target = $region12
      $region11: #{net_forward.2} parent=5 // pred_region
        %s117 = ssub.s32 %s9, 1
        // Predicated region
        $region13: #{net_forward.2} parent=11 // pred_check
          %p118 = pneg %p56
        $region14: #{net_forward.2} parent=11 // pred_check_branch
          %120 = sbr.rel (%p118) target = $region16
        $region15: #{net_forward.2} parent=11 // pred_region
          _
        $region16: #{net_forward.2} parent=11 // pred_fallthru
          _
        // Predicated region
        $region17: #{net_forward.2} parent=11 // pred_check
          %p121 = pneg %p77
        $region18: #{net_forward.2} parent=11 // pred_check_branch
          %123 = sbr.rel (%p121) target = $region20
        $region19: #{net_forward.2} parent=11 // pred_region
          _
        $region20: #{net_forward.2} parent=11 // pred_fallthru
          _
      $region12: #{net_forward.2} parent=5 // pred_fallthru
        _
      %p124 = scmp.lt.s32.totalorder %s9, 2
      // Predicated region
      $region21: #{net_forward.2} parent=5 // pred_check
        %p125 = pneg %p124
      $region22: #{net_forward.2} parent=5 // pred_check_branch
        %127 = sbr.rel (%p125) target = $region24
      $region23: #{net_forward.2} parent=5 // pred_region
        // Predicated region
        $region25: #{net_forward.2} parent=23 // pred_check
          %p128 = pneg %p29
        $region26: #{net_forward.2} parent=23 // pred_check_branch
          %130 = sbr.rel (%p128) target = $region28
        $region27: #{net_forward.2} parent=23 // pred_region
          %s131 = sand.u32 %s19, 1
          %s132 = sand.u32 %s19, 1
          %s133 = smul.addr %s132, 288
          %s134 = scalar_lea.vmem [#allocation2], %s133
          %s135 = smul.u32 18, %s9
          %s136 = smul.addr %s135, 4
          %s137 = scalar_lea.vmem %s0, %s136
          // Predicated region
          $region29: #{net_forward.2} parent=27 // pred_check
            _
          $region30: #{net_forward.2} parent=27 // pred_check_branch
            %139 = sbr.rel (0) target = $region32
          $region31: #{net_forward.2} parent=27 // pred_region
            // Predicated region
            $region33: #{net_forward.2} parent=31 // pred_check
              _
            $region34: #{net_forward.2} parent=31 // pred_check_branch
              %141 = sbr.rel target = $region36
            $region35: #{net_forward.2} parent=31 // pred_region
              // Predicated region
              $region48: #{net_forward.2} parent=35 // pred_check
                _
              $region49: #{net_forward.2} parent=35 // pred_check_branch
                %299 = sbr.rel (0) target = $region51
              $region50: #{net_forward.2} parent=35 // pred_region
                loop: start=0, step=1, limit=1
                $region52: #{net_forward.2} parent=50 // loop_pre_header
                  _
                $region53: #{net_forward.2} parent=50 // loop_header
                  %s301 = sphi 0, %s305
                  %p302 = scmp.ge.s32.totalorder %s301, 1
                  %s306 = sphi %s137, %s137
                  %s307 = sphi %s134, %s134
                $region54: #{net_forward.2} parent=50 // loop_header_branch
                  %304 = sbr.rel (%p302) target = $region58
                $region55: #{net_forward.2} parent=50 // loop_body
                  _
                $region56: #{net_forward.2} parent=50 // loop_footer
                  %s305 = sadd.s32 1, %s301
                $region57: #{net_forward.2} parent=50 // loop_footer_branch
                  %300 = sbr.rel target = $region53
                $region58: #{net_forward.2} parent=50 // loop_exit
                  _
                %s309 = ssub.s32 16, 1
                loop: start=0, step=1, limit=1
                $region59: #{net_forward.2} parent=50 // loop_pre_header
                  _
                $region60: #{net_forward.2} parent=50 // loop_header
                  %s311 = sphi 0, %s315
                  %p312 = scmp.ge.s32.totalorder %s311, 1
                  %s316 = sphi %s137, %s137
                  %s317 = sphi %s134, %s134
                $region61: #{net_forward.2} parent=50 // loop_header_branch
                  %314 = sbr.rel (%p312) target = $region65
                $region62: #{net_forward.2} parent=50 // loop_body
                  %v318 = vld [vmem:[%s316] sm:%s309]
                  %319 = vst [vmem:[%s317] sm:%s309] %v318
                  %v320 = vld [vmem:[%s316 + $0x4] sm:%s309]
                  %321 = vst [vmem:[%s317 + $0x4] sm:%s309] %v320
                  %v322 = vld [vmem:[%s316 + $0x8] sm:%s309]
                  %323 = vst [vmem:[%s317 + $0x8] sm:%s309] %v322
                  %v324 = vld [vmem:[%s316 + $0xc] sm:%s309]
                  %325 = vst [vmem:[%s317 + $0xc] sm:%s309] %v324
                  %v326 = vld [vmem:[%s316 + $0x10] sm:%s309]
                  %327 = vst [vmem:[%s317 + $0x10] sm:%s309] %v326
                  %v328 = vld [vmem:[%s316 + $0x14] sm:%s309]
                  %329 = vst [vmem:[%s317 + $0x14] sm:%s309] %v328
                  %v330 = vld [vmem:[%s316 + $0x18] sm:%s309]
                  %331 = vst [vmem:[%s317 + $0x18] sm:%s309] %v330
                  %v332 = vld [vmem:[%s316 + $0x1c] sm:%s309]
                  %333 = vst [vmem:[%s317 + $0x1c] sm:%s309] %v332
                  %v334 = vld [vmem:[%s316 + $0x20] sm:%s309]
                  %335 = vst [vmem:[%s317 + $0x20] sm:%s309] %v334
                  %v336 = vld [vmem:[%s316 + $0x24] sm:%s309]
                  %337 = vst [vmem:[%s317 + $0x24] sm:%s309] %v336
                  %v338 = vld [vmem:[%s316 + $0x28] sm:%s309]
                  %339 = vst [vmem:[%s317 + $0x28] sm:%s309] %v338
                  %v340 = vld [vmem:[%s316 + $0x2c] sm:%s309]
                  %341 = vst [vmem:[%s317 + $0x2c] sm:%s309] %v340
                  %v342 = vld [vmem:[%s316 + $0x30] sm:%s309]
                  %343 = vst [vmem:[%s317 + $0x30] sm:%s309] %v342
                  %v344 = vld [vmem:[%s316 + $0x34] sm:%s309]
                  %345 = vst [vmem:[%s317 + $0x34] sm:%s309] %v344
                  %v346 = vld [vmem:[%s316 + $0x38] sm:%s309]
                  %347 = vst [vmem:[%s317 + $0x38] sm:%s309] %v346
                  %v348 = vld [vmem:[%s316 + $0x3c] sm:%s309]
                  %349 = vst [vmem:[%s317 + $0x3c] sm:%s309] %v348
                  %v350 = vld [vmem:[%s316 + $0x40] sm:%s309]
                  %351 = vst [vmem:[%s317 + $0x40] sm:%s309] %v350
                  %v352 = vld [vmem:[%s316 + $0x44] sm:%s309]
                  %353 = vst [vmem:[%s317 + $0x44] sm:%s309] %v352
                  %v354 = vld [vmem:[%s316 + $0x90] sm:%s309]
                  %355 = vst [vmem:[%s317 + $0x48] sm:%s309] %v354
                  %v356 = vld [vmem:[%s316 + $0x94] sm:%s309]
                  %357 = vst [vmem:[%s317 + $0x4c] sm:%s309] %v356
                  %v358 = vld [vmem:[%s316 + $0x98] sm:%s309]
                  %359 = vst [vmem:[%s317 + $0x50] sm:%s309] %v358
                  %v360 = vld [vmem:[%s316 + $0x9c] sm:%s309]
                  %361 = vst [vmem:[%s317 + $0x54] sm:%s309] %v360
                  %v362 = vld [vmem:[%s316 + $0xa0] sm:%s309]
                  %363 = vst [vmem:[%s317 + $0x58] sm:%s309] %v362
                  %v364 = vld [vmem:[%s316 + $0xa4] sm:%s309]
                  %365 = vst [vmem:[%s317 + $0x5c] sm:%s309] %v364
                  %v366 = vld [vmem:[%s316 + $0xa8] sm:%s309]
                  %367 = vst [vmem:[%s317 + $0x60] sm:%s309] %v366
                  %v368 = vld [vmem:[%s316 + $0xac] sm:%s309]
                  %369 = vst [vmem:[%s317 + $0x64] sm:%s309] %v368
                  %v370 = vld [vmem:[%s316 + $0xb0] sm:%s309]
                  %371 = vst [vmem:[%s317 + $0x68] sm:%s309] %v370
                  %v372 = vld [vmem:[%s316 + $0xb4] sm:%s309]
                  %373 = vst [vmem:[%s317 + $0x6c] sm:%s309] %v372
                  %v374 = vld [vmem:[%s316 + $0xb8] sm:%s309]
                  %375 = vst [vmem:[%s317 + $0x70] sm:%s309] %v374
                  %v376 = vld [vmem:[%s316 + $0xbc] sm:%s309]
                  %377 = vst [vmem:[%s317 + $0x74] sm:%s309] %v376
                  %v378 = vld [vmem:[%s316 + $0xc0] sm:%s309]
                  %379 = vst [vmem:[%s317 + $0x78] sm:%s309] %v378
                  %v380 = vld [vmem:[%s316 + $0xc4] sm:%s309]
                  %381 = vst [vmem:[%s317 + $0x7c] sm:%s309] %v380
                  %v382 = vld [vmem:[%s316 + $0xc8] sm:%s309]
                  %383 = vst [vmem:[%s317 + $0x80] sm:%s309] %v382
                  %v384 = vld [vmem:[%s316 + $0xcc] sm:%s309]
                  %385 = vst [vmem:[%s317 + $0x84] sm:%s309] %v384
                  %v386 = vld [vmem:[%s316 + $0xd0] sm:%s309]
                  %387 = vst [vmem:[%s317 + $0x88] sm:%s309] %v386
                  %v388 = vld [vmem:[%s316 + $0xd4] sm:%s309]
                  %389 = vst [vmem:[%s317 + $0x8c] sm:%s309] %v388
                  %v390 = vld [vmem:[%s316 + $0x120] sm:%s309]
                  %391 = vst [vmem:[%s317 + $0x90] sm:%s309] %v390
                  %v392 = vld [vmem:[%s316 + $0x124] sm:%s309]
                  %393 = vst [vmem:[%s317 + $0x94] sm:%s309] %v392
                  %v394 = vld [vmem:[%s316 + $0x128] sm:%s309]
                  %395 = vst [vmem:[%s317 + $0x98] sm:%s309] %v394
                  %v396 = vld [vmem:[%s316 + $0x12c] sm:%s309]
                  %397 = vst [vmem:[%s317 + $0x9c] sm:%s309] %v396
                  %v398 = vld [vmem:[%s316 + $0x130] sm:%s309]
                  %399 = vst [vmem:[%s317 + $0xa0] sm:%s309] %v398
                  %v400 = vld [vmem:[%s316 + $0x134] sm:%s309]
                  %401 = vst [vmem:[%s317 + $0xa4] sm:%s309] %v400
                  %v402 = vld [vmem:[%s316 + $0x138] sm:%s309]
                  %403 = vst [vmem:[%s317 + $0xa8] sm:%s309] %v402
                  %v404 = vld [vmem:[%s316 + $0x13c] sm:%s309]
                  %405 = vst [vmem:[%s317 + $0xac] sm:%s309] %v404
                  %v406 = vld [vmem:[%s316 + $0x140] sm:%s309]
                  %407 = vst [vmem:[%s317 + $0xb0] sm:%s309] %v406
                  %v408 = vld [vmem:[%s316 + $0x144] sm:%s309]
                  %409 = vst [vmem:[%s317 + $0xb4] sm:%s309] %v408
                  %v410 = vld [vmem:[%s316 + $0x148] sm:%s309]
                  %411 = vst [vmem:[%s317 + $0xb8] sm:%s309] %v410
                  %v412 = vld [vmem:[%s316 + $0x14c] sm:%s309]
                  %413 = vst [vmem:[%s317 + $0xbc] sm:%s309] %v412
                  %v414 = vld [vmem:[%s316 + $0x150] sm:%s309]
                  %415 = vst [vmem:[%s317 + $0xc0] sm:%s309] %v414
                  %v416 = vld [vmem:[%s316 + $0x154] sm:%s309]
                  %417 = vst [vmem:[%s317 + $0xc4] sm:%s309] %v416
                  %v418 = vld [vmem:[%s316 + $0x158] sm:%s309]
                  %419 = vst [vmem:[%s317 + $0xc8] sm:%s309] %v418
                  %v420 = vld [vmem:[%s316 + $0x15c] sm:%s309]
                  %421 = vst [vmem:[%s317 + $0xcc] sm:%s309] %v420
                  %v422 = vld [vmem:[%s316 + $0x160] sm:%s309]
                  %423 = vst [vmem:[%s317 + $0xd0] sm:%s309] %v422
                  %v424 = vld [vmem:[%s316 + $0x164] sm:%s309]
                  %425 = vst [vmem:[%s317 + $0xd4] sm:%s309] %v424
                  %v426 = vld [vmem:[%s316 + $0x1b0] sm:%s309]
                  %427 = vst [vmem:[%s317 + $0xd8] sm:%s309] %v426
                  %v428 = vld [vmem:[%s316 + $0x1b4] sm:%s309]
                  %429 = vst [vmem:[%s317 + $0xdc] sm:%s309] %v428
                  %v430 = vld [vmem:[%s316 + $0x1b8] sm:%s309]
                  %431 = vst [vmem:[%s317 + $0xe0] sm:%s309] %v430
                  %v432 = vld [vmem:[%s316 + $0x1bc] sm:%s309]
                  %433 = vst [vmem:[%s317 + $0xe4] sm:%s309] %v432
                  %v434 = vld [vmem:[%s316 + $0x1c0] sm:%s309]
                  %435 = vst [vmem:[%s317 + $0xe8] sm:%s309] %v434
                  %v436 = vld [vmem:[%s316 + $0x1c4] sm:%s309]
                  %437 = vst [vmem:[%s317 + $0xec] sm:%s309] %v436
                  %v438 = vld [vmem:[%s316 + $0x1c8] sm:%s309]
                  %439 = vst [vmem:[%s317 + $0xf0] sm:%s309] %v438
                  %v440 = vld [vmem:[%s316 + $0x1cc] sm:%s309]
                  %441 = vst [vmem:[%s317 + $0xf4] sm:%s309] %v440
                  %v442 = vld [vmem:[%s316 + $0x1d0] sm:%s309]
                  %443 = vst [vmem:[%s317 + $0xf8] sm:%s309] %v442
                  %v444 = vld [vmem:[%s316 + $0x1d4] sm:%s309]
                  %445 = vst [vmem:[%s317 + $0xfc] sm:%s309] %v444
                  %v446 = vld [vmem:[%s316 + $0x1d8] sm:%s309]
                  %447 = vst [vmem:[%s317 + $0x100] sm:%s309] %v446
                  %v448 = vld [vmem:[%s316 + $0x1dc] sm:%s309]
                  %449 = vst [vmem:[%s317 + $0x104] sm:%s309] %v448
                  %v450 = vld [vmem:[%s316 + $0x1e0] sm:%s309]
                  %451 = vst [vmem:[%s317 + $0x108] sm:%s309] %v450
                  %v452 = vld [vmem:[%s316 + $0x1e4] sm:%s309]
                  %453 = vst [vmem:[%s317 + $0x10c] sm:%s309] %v452
                  %v454 = vld [vmem:[%s316 + $0x1e8] sm:%s309]
                  %455 = vst [vmem:[%s317 + $0x110] sm:%s309] %v454
                  %v456 = vld [vmem:[%s316 + $0x1ec] sm:%s309]
                  %457 = vst [vmem:[%s317 + $0x114] sm:%s309] %v456
                  %v458 = vld [vmem:[%s316 + $0x1f0] sm:%s309]
                  %459 = vst [vmem:[%s317 + $0x118] sm:%s309] %v458
                  %v460 = vld [vmem:[%s316 + $0x1f4] sm:%s309]
                  %461 = vst [vmem:[%s317 + $0x11c] sm:%s309] %v460
                $region63: #{net_forward.2} parent=50 // loop_footer
                  %s315 = sadd.s32 1, %s311
                $region64: #{net_forward.2} parent=50 // loop_footer_branch
                  %310 = sbr.rel target = $region60
                $region65: #{net_forward.2} parent=50 // loop_exit
                  _
              $region51: #{net_forward.2} parent=35 // pred_fallthru
                _
            $region36: #{net_forward.2} parent=31 // pred_fallthru
              _
            // Predicated region
            $region37: #{net_forward.2} parent=31 // pred_check
              _
            $region38: #{net_forward.2} parent=31 // pred_check_branch
              %143 = sbr.rel (0) target = $region40
            $region39: #{net_forward.2} parent=31 // pred_region
              %s145 = ssub.s32 16, 1
              loop: start=0, step=1, limit=1
              $region41: #{net_forward.2} parent=39 // loop_pre_header
                _
              $region42: #{net_forward.2} parent=39 // loop_header
                %s147 = sphi 0, %s151
                %p148 = scmp.ge.s32.totalorder %s147, 1
                %s152 = sphi %s137, %s137
                %s153 = sphi %s134, %s134
              $region43: #{net_forward.2} parent=39 // loop_header_branch
                %150 = sbr.rel (%p148) target = $region47
              $region44: #{net_forward.2} parent=39 // loop_body
                %v154 = vld [vmem:[%s152] sm:%s145]
                %155 = vst [vmem:[%s153] sm:%s145] %v154
                %v156 = vld [vmem:[%s152 + $0x4] sm:%s145]
                %157 = vst [vmem:[%s153 + $0x4] sm:%s145] %v156
                %v158 = vld [vmem:[%s152 + $0x8] sm:%s145]
                %159 = vst [vmem:[%s153 + $0x8] sm:%s145] %v158
                %v160 = vld [vmem:[%s152 + $0xc] sm:%s145]
                %161 = vst [vmem:[%s153 + $0xc] sm:%s145] %v160
                %v162 = vld [vmem:[%s152 + $0x10] sm:%s145]
                %163 = vst [vmem:[%s153 + $0x10] sm:%s145] %v162
                %v164 = vld [vmem:[%s152 + $0x14] sm:%s145]
                %165 = vst [vmem:[%s153 + $0x14] sm:%s145] %v164
                %v166 = vld [vmem:[%s152 + $0x18] sm:%s145]
                %167 = vst [vmem:[%s153 + $0x18] sm:%s145] %v166
                %v168 = vld [vmem:[%s152 + $0x1c] sm:%s145]
                %169 = vst [vmem:[%s153 + $0x1c] sm:%s145] %v168
                %v170 = vld [vmem:[%s152 + $0x20] sm:%s145]
                %171 = vst [vmem:[%s153 + $0x20] sm:%s145] %v170
                %v172 = vld [vmem:[%s152 + $0x24] sm:%s145]
                %173 = vst [vmem:[%s153 + $0x24] sm:%s145] %v172
                %v174 = vld [vmem:[%s152 + $0x28] sm:%s145]
                %175 = vst [vmem:[%s153 + $0x28] sm:%s145] %v174
                %v176 = vld [vmem:[%s152 + $0x2c] sm:%s145]
                %177 = vst [vmem:[%s153 + $0x2c] sm:%s145] %v176
                %v178 = vld [vmem:[%s152 + $0x30] sm:%s145]
                %179 = vst [vmem:[%s153 + $0x30] sm:%s145] %v178
                %v180 = vld [vmem:[%s152 + $0x34] sm:%s145]
                %181 = vst [vmem:[%s153 + $0x34] sm:%s145] %v180
                %v182 = vld [vmem:[%s152 + $0x38] sm:%s145]
                %183 = vst [vmem:[%s153 + $0x38] sm:%s145] %v182
                %v184 = vld [vmem:[%s152 + $0x3c] sm:%s145]
                %185 = vst [vmem:[%s153 + $0x3c] sm:%s145] %v184
                %v186 = vld [vmem:[%s152 + $0x40] sm:%s145]
                %187 = vst [vmem:[%s153 + $0x40] sm:%s145] %v186
                %v188 = vld [vmem:[%s152 + $0x44] sm:%s145]
                %189 = vst [vmem:[%s153 + $0x44] sm:%s145] %v188
                %v190 = vld [vmem:[%s152 + $0x90] sm:%s145]
                %191 = vst [vmem:[%s153 + $0x48] sm:%s145] %v190
                %v192 = vld [vmem:[%s152 + $0x94] sm:%s145]
                %193 = vst [vmem:[%s153 + $0x4c] sm:%s145] %v192
                %v194 = vld [vmem:[%s152 + $0x98] sm:%s145]
                %195 = vst [vmem:[%s153 + $0x50] sm:%s145] %v194
                %v196 = vld [vmem:[%s152 + $0x9c] sm:%s145]
                %197 = vst [vmem:[%s153 + $0x54] sm:%s145] %v196
                %v198 = vld [vmem:[%s152 + $0xa0] sm:%s145]
                %199 = vst [vmem:[%s153 + $0x58] sm:%s145] %v198
                %v200 = vld [vmem:[%s152 + $0xa4] sm:%s145]
                %201 = vst [vmem:[%s153 + $0x5c] sm:%s145] %v200
                %v202 = vld [vmem:[%s152 + $0xa8] sm:%s145]
                %203 = vst [vmem:[%s153 + $0x60] sm:%s145] %v202
                %v204 = vld [vmem:[%s152 + $0xac] sm:%s145]
                %205 = vst [vmem:[%s153 + $0x64] sm:%s145] %v204
                %v206 = vld [vmem:[%s152 + $0xb0] sm:%s145]
                %207 = vst [vmem:[%s153 + $0x68] sm:%s145] %v206
                %v208 = vld [vmem:[%s152 + $0xb4] sm:%s145]
                %209 = vst [vmem:[%s153 + $0x6c] sm:%s145] %v208
                %v210 = vld [vmem:[%s152 + $0xb8] sm:%s145]
                %211 = vst [vmem:[%s153 + $0x70] sm:%s145] %v210
                %v212 = vld [vmem:[%s152 + $0xbc] sm:%s145]
                %213 = vst [vmem:[%s153 + $0x74] sm:%s145] %v212
                %v214 = vld [vmem:[%s152 + $0xc0] sm:%s145]
                %215 = vst [vmem:[%s153 + $0x78] sm:%s145] %v214
                %v216 = vld [vmem:[%s152 + $0xc4] sm:%s145]
                %217 = vst [vmem:[%s153 + $0x7c] sm:%s145] %v216
                %v218 = vld [vmem:[%s152 + $0xc8] sm:%s145]
                %219 = vst [vmem:[%s153 + $0x80] sm:%s145] %v218
                %v220 = vld [vmem:[%s152 + $0xcc] sm:%s145]
                %221 = vst [vmem:[%s153 + $0x84] sm:%s145] %v220
                %v222 = vld [vmem:[%s152 + $0xd0] sm:%s145]
                %223 = vst [vmem:[%s153 + $0x88] sm:%s145] %v222
                %v224 = vld [vmem:[%s152 + $0xd4] sm:%s145]
                %225 = vst [vmem:[%s153 + $0x8c] sm:%s145] %v224
                %v226 = vld [vmem:[%s152 + $0x120] sm:%s145]
                %227 = vst [vmem:[%s153 + $0x90] sm:%s145] %v226
                %v228 = vld [vmem:[%s152 + $0x124] sm:%s145]
                %229 = vst [vmem:[%s153 + $0x94] sm:%s145] %v228
                %v230 = vld [vmem:[%s152 + $0x128] sm:%s145]
                %231 = vst [vmem:[%s153 + $0x98] sm:%s145] %v230
                %v232 = vld [vmem:[%s152 + $0x12c] sm:%s145]
                %233 = vst [vmem:[%s153 + $0x9c] sm:%s145] %v232
                %v234 = vld [vmem:[%s152 + $0x130] sm:%s145]
                %235 = vst [vmem:[%s153 + $0xa0] sm:%s145] %v234
                %v236 = vld [vmem:[%s152 + $0x134] sm:%s145]
                %237 = vst [vmem:[%s153 + $0xa4] sm:%s145] %v236
                %v238 = vld [vmem:[%s152 + $0x138] sm:%s145]
                %239 = vst [vmem:[%s153 + $0xa8] sm:%s145] %v238
                %v240 = vld [vmem:[%s152 + $0x13c] sm:%s145]
                %241 = vst [vmem:[%s153 + $0xac] sm:%s145] %v240
                %v242 = vld [vmem:[%s152 + $0x140] sm:%s145]
                %243 = vst [vmem:[%s153 + $0xb0] sm:%s145] %v242
                %v244 = vld [vmem:[%s152 + $0x144] sm:%s145]
                %245 = vst [vmem:[%s153 + $0xb4] sm:%s145] %v244
                %v246 = vld [vmem:[%s152 + $0x148] sm:%s145]
                %247 = vst [vmem:[%s153 + $0xb8] sm:%s145] %v246
                %v248 = vld [vmem:[%s152 + $0x14c] sm:%s145]
                %249 = vst [vmem:[%s153 + $0xbc] sm:%s145] %v248
                %v250 = vld [vmem:[%s152 + $0x150] sm:%s145]
                %251 = vst [vmem:[%s153 + $0xc0] sm:%s145] %v250
                %v252 = vld [vmem:[%s152 + $0x154] sm:%s145]
                %253 = vst [vmem:[%s153 + $0xc4] sm:%s145] %v252
                %v254 = vld [vmem:[%s152 + $0x158] sm:%s145]
                %255 = vst [vmem:[%s153 + $0xc8] sm:%s145] %v254
                %v256 = vld [vmem:[%s152 + $0x15c] sm:%s145]
                %257 = vst [vmem:[%s153 + $0xcc] sm:%s145] %v256
                %v258 = vld [vmem:[%s152 + $0x160] sm:%s145]
                %259 = vst [vmem:[%s153 + $0xd0] sm:%s145] %v258
                %v260 = vld [vmem:[%s152 + $0x164] sm:%s145]
                %261 = vst [vmem:[%s153 + $0xd4] sm:%s145] %v260
                %v262 = vld [vmem:[%s152 + $0x1b0] sm:%s145]
                %263 = vst [vmem:[%s153 + $0xd8] sm:%s145] %v262
                %v264 = vld [vmem:[%s152 + $0x1b4] sm:%s145]
                %265 = vst [vmem:[%s153 + $0xdc] sm:%s145] %v264
                %v266 = vld [vmem:[%s152 + $0x1b8] sm:%s145]
                %267 = vst [vmem:[%s153 + $0xe0] sm:%s145] %v266
                %v268 = vld [vmem:[%s152 + $0x1bc] sm:%s145]
                %269 = vst [vmem:[%s153 + $0xe4] sm:%s145] %v268
                %v270 = vld [vmem:[%s152 + $0x1c0] sm:%s145]
                %271 = vst [vmem:[%s153 + $0xe8] sm:%s145] %v270
                %v272 = vld [vmem:[%s152 + $0x1c4] sm:%s145]
                %273 = vst [vmem:[%s153 + $0xec] sm:%s145] %v272
                %v274 = vld [vmem:[%s152 + $0x1c8] sm:%s145]
                %275 = vst [vmem:[%s153 + $0xf0] sm:%s145] %v274
                %v276 = vld [vmem:[%s152 + $0x1cc] sm:%s145]
                %277 = vst [vmem:[%s153 + $0xf4] sm:%s145] %v276
                %v278 = vld [vmem:[%s152 + $0x1d0] sm:%s145]
                %279 = vst [vmem:[%s153 + $0xf8] sm:%s145] %v278
                %v280 = vld [vmem:[%s152 + $0x1d4] sm:%s145]
                %281 = vst [vmem:[%s153 + $0xfc] sm:%s145] %v280
                %v282 = vld [vmem:[%s152 + $0x1d8] sm:%s145]
                %283 = vst [vmem:[%s153 + $0x100] sm:%s145] %v282
                %v284 = vld [vmem:[%s152 + $0x1dc] sm:%s145]
                %285 = vst [vmem:[%s153 + $0x104] sm:%s145] %v284
                %v286 = vld [vmem:[%s152 + $0x1e0] sm:%s145]
                %287 = vst [vmem:[%s153 + $0x108] sm:%s145] %v286
                %v288 = vld [vmem:[%s152 + $0x1e4] sm:%s145]
                %289 = vst [vmem:[%s153 + $0x10c] sm:%s145] %v288
                %v290 = vld [vmem:[%s152 + $0x1e8] sm:%s145]
                %291 = vst [vmem:[%s153 + $0x110] sm:%s145] %v290
                %v292 = vld [vmem:[%s152 + $0x1ec] sm:%s145]
                %293 = vst [vmem:[%s153 + $0x114] sm:%s145] %v292
                %v294 = vld [vmem:[%s152 + $0x1f0] sm:%s145]
                %295 = vst [vmem:[%s153 + $0x118] sm:%s145] %v294
                %v296 = vld [vmem:[%s152 + $0x1f4] sm:%s145]
                %297 = vst [vmem:[%s153 + $0x11c] sm:%s145] %v296
              $region45: #{net_forward.2} parent=39 // loop_footer
                %s151 = sadd.s32 1, %s147
              $region46: #{net_forward.2} parent=39 // loop_footer_branch
                %146 = sbr.rel target = $region42
              $region47: #{net_forward.2} parent=39 // loop_exit
                _
            $region40: #{net_forward.2} parent=31 // pred_fallthru
              _
          $region32: #{net_forward.2} parent=27 // pred_fallthru
            _
          %462 = vnop
        $region28: #{net_forward.2} parent=23 // pred_fallthru
          _
      $region24: #{net_forward.2} parent=5 // pred_fallthru
        _
      %p463 = scmp.le.s32.totalorder 1, %s9
      %p464 = scmp.lt.s32.totalorder %s9, 3
      %p465 = pnand %p463, %p464
      %p466 = pneg %p465
      // Predicated region
      $region66: #{net_forward.2} parent=5 // pred_check
        _
      $region67: #{net_forward.2} parent=5 // pred_check_branch
        %468 = sbr.rel (%p465) target = $region69
      $region68: #{net_forward.2} parent=5 // pred_region
        %s469 = ssub.s32 %s9, 1
        %s470 = sand.u32 %s22, 1
        %s471 = sand.u32 %s22, 1
        %s472 = smul.addr %s471, 288
        %s473 = scalar_lea.vmem [#allocation2], %s472
        // Predicated region
        $region70: #{net_forward.2} parent=68 // pred_check
          %p474 = pneg %p35
        $region71: #{net_forward.2} parent=68 // pred_check_branch
          %476 = sbr.rel (%p474) target = $region73
        $region72: #{net_forward.2} parent=68 // pred_region
          _
        $region73: #{net_forward.2} parent=68 // pred_fallthru
          _
        %s477 = sand.u32 %s22, 1
        %s478 = sand.u32 %s22, 1
        %s479 = smul.addr %s478, 288
        %s480 = scalar_lea.vmem [#allocation2], %s479
        %p481 = pneg %p35
        %p482 = pneg %p32
        %p483 = pneg %p56
        %p484 = pneg %p53
        %p485 = pneg %p77
        %p486 = pneg %p74
        %p487 = pneg %p103
        %p488 = pneg %p100
        %s489 = smul.u32 18, %s14
        %p490 = scmp.lt.s32.totalorder %s489, 35
        %s491 = scalar_select %p490, %s489, 35
        %s492 = smul.addr %s491, 4
        %s493 = scalar_lea.vmem %s3, %s492
        %s494 = smul.u32 18, %s14
        %s495 = smul.u32 18, %s14
        %p496 = scmp.lt.s32.totalorder %s495, 35
        %s497 = scalar_select %p496, %s495, 35
        %s498 = smul.addr %s497, 4
        %s499 = scalar_lea.vmem %s3, %s498
        %s500 = smul.u32 18, %s14
        %v501 = vld [vmem:[%s473] sm:$0xf]
        %v502 = vld [vmem:[%s473 + $0x4] sm:$0xf]
        %v503 = vld [vmem:[%s473 + $0x8] sm:$0xf]
        %v504 = vld [vmem:[%s473 + $0xc] sm:$0xf]
        %v505 = vld [vmem:[%s473 + $0x10] sm:$0xf]
        %v506 = vld [vmem:[%s473 + $0x14] sm:$0xf]
        %v507 = vld [vmem:[%s473 + $0x18] sm:$0xf]
        %v508 = vld [vmem:[%s473 + $0x1c] sm:$0xf]
        %v509 = vld [vmem:[%s473 + $0x20] sm:$0xf]
        %v510 = vld [vmem:[%s473 + $0x24] sm:$0xf]
        %v511 = vld [vmem:[%s473 + $0x28] sm:$0xf]
        %v512 = vld [vmem:[%s473 + $0x2c] sm:$0xf]
        %v513 = vld [vmem:[%s473 + $0x30] sm:$0xf]
        %v514 = vld [vmem:[%s473 + $0x34] sm:$0xf]
        %v515 = vld [vmem:[%s473 + $0x38] sm:$0xf]
        %v516 = vld [vmem:[%s473 + $0x3c] sm:$0xf]
        %v517 = vld [vmem:[%s473 + $0x40] sm:$0xf]
        %v518 = vld [vmem:[%s473 + $0x44] sm:$0xf]
        %v519 = vld [vmem:[%s1] sm:$0xf]
        %v520 = vld [vmem:[%s1 + $0x4] sm:$0xf]
        %v521 = vld [vmem:[%s1 + $0x8] sm:$0xf]
        %v522 = vld [vmem:[%s1 + $0xc] sm:$0xf]
        %v523 = vld [vmem:[%s1 + $0x10] sm:$0xf]
        %v524 = vld [vmem:[%s1 + $0x14] sm:$0xf]
        %v525 = vld [vmem:[%s1 + $0x18] sm:$0xf]
        %v526 = vld [vmem:[%s1 + $0x1c] sm:$0xf]
        %v527 = vld [vmem:[%s1 + $0x20] sm:$0xf]
        %v528 = vld [vmem:[%s1 + $0x24] sm:$0xf]
        %v529 = vld [vmem:[%s1 + $0x28] sm:$0xf]
        %v530 = vld [vmem:[%s1 + $0x2c] sm:$0xf]
        %v531 = vld [vmem:[%s1 + $0x30] sm:$0xf]
        %v532 = vld [vmem:[%s1 + $0x34] sm:$0xf]
        %v533 = vld [vmem:[%s1 + $0x38] sm:$0xf]
        %v534 = vld [vmem:[%s1 + $0x3c] sm:$0xf]
        %v553 = vunpack.c.l.b16 %v501
        %v554 = vunpack.c.l.b16 %v502
        %v555 = vunpack.c.l.b16 %v503
        %v556 = vunpack.c.l.b16 %v504
        %v557 = vunpack.c.l.b16 %v505
        %v558 = vunpack.c.l.b16 %v506
        %v559 = vunpack.c.l.b16 %v507
        %v560 = vunpack.c.l.b16 %v508
        %v561 = vunpack.c.l.b16 %v509
        %v562 = vunpack.c.l.b16 %v510
        %v563 = vunpack.c.l.b16 %v511
        %v564 = vunpack.c.l.b16 %v512
        %v565 = vunpack.c.l.b16 %v513
        %v566 = vunpack.c.l.b16 %v514
        %v567 = vunpack.c.l.b16 %v515
        %v568 = vunpack.c.l.b16 %v516
        %v569 = vunpack.c.l.b16 %v517
        %v570 = vunpack.c.l.b16 %v518
        %v571 = vpack.c.b16 %v554, %v553
        %v572 = vpack.c.b16 %v556, %v555
        %v573 = vpack.c.b16 %v558, %v557
        %v574 = vpack.c.b16 %v560, %v559
        %v575 = vpack.c.b16 %v562, %v561
        %v576 = vpack.c.b16 %v564, %v563
        %v577 = vpack.c.b16 %v566, %v565
        %v578 = vpack.c.b16 %v568, %v567
        %v579 = vpack.c.b16 %v570, %v569
        %v605 = vunpack.c.l.b16 %v519
        %v606 = vunpack.c.l.b16 %v520
        %v607 = vunpack.c.l.b16 %v521
        %v608 = vunpack.c.l.b16 %v522
        %v609 = vunpack.c.l.b16 %v523
        %v610 = vunpack.c.l.b16 %v524
        %v611 = vunpack.c.l.b16 %v525
        %v612 = vunpack.c.l.b16 %v526
        %v613 = vunpack.c.l.b16 %v527
        %v614 = vunpack.c.l.b16 %v528
        %v615 = vunpack.c.l.b16 %v529
        %v616 = vunpack.c.l.b16 %v530
        %v617 = vunpack.c.l.b16 %v531
        %v618 = vunpack.c.l.b16 %v532
        %v619 = vunpack.c.l.b16 %v533
        %v620 = vunpack.c.l.b16 %v534
        %v621 = vpack.c.b16 %v606, %v605
        %v622 = vpack.c.b16 %v608, %v607
        %v623 = vpack.c.b16 %v610, %v609
        %v624 = vpack.c.b16 %v612, %v611
        %v625 = vpack.c.b16 %v614, %v613
        %v626 = vpack.c.b16 %v616, %v615
        %v627 = vpack.c.b16 %v618, %v617
        %v628 = vpack.c.b16 %v620, %v619
        %637 = vmatpush.bf16.msra.mxu0 %v628
        %638 = vmatpush.bf16.msra.mxu0 %v627
        %639 = vmatpush.bf16.msra.mxu0 %v626
        %640 = vmatpush.bf16.msra.mxu0 %v625
        %641 = vmatpush.bf16.msra.mxu0 %v624
        %642 = vmatpush.bf16.msra.mxu0 %v623
        %643 = vmatpush.bf16.msra.mxu0 %v622
        %644 = vmatpush.bf16.msra.mxu0 %v621
        %645 = vmatmul.bf16.gmra.mxu0 %v571
        %v646 = vpop.f32.mrf.mxu0
        %v647 = vadd.f32 0.0, %v646
        %v648 = vpop.f32.mrf.mxu0
        %v649 = vadd.f32 0.0, %v648
        %650 = vmatmul.bf16.gmra.mxu0 %v572
        %v651 = vpop.f32.mrf.mxu0
        %v652 = vadd.f32 0.0, %v651
        %v653 = vpop.f32.mrf.mxu0
        %v654 = vadd.f32 0.0, %v653
        %655 = vmatmul.bf16.gmra.mxu0 %v573
        %v656 = vpop.f32.mrf.mxu0
        %v657 = vadd.f32 0.0, %v656
        %v658 = vpop.f32.mrf.mxu0
        %v659 = vadd.f32 0.0, %v658
        %660 = vmatmul.bf16.gmra.mxu0 %v574
        %v661 = vpop.f32.mrf.mxu0
        %v662 = vadd.f32 0.0, %v661
        %v663 = vpop.f32.mrf.mxu0
        %v664 = vadd.f32 0.0, %v663
        %665 = vmatmul.bf16.gmra.mxu0 %v575
        %v666 = vpop.f32.mrf.mxu0
        %v667 = vadd.f32 0.0, %v666
        %v668 = vpop.f32.mrf.mxu0
        %v669 = vadd.f32 0.0, %v668
        %670 = vmatmul.bf16.gmra.mxu0 %v576
        %v671 = vpop.f32.mrf.mxu0
        %v672 = vadd.f32 0.0, %v671
        %v673 = vpop.f32.mrf.mxu0
        %v674 = vadd.f32 0.0, %v673
        %675 = vmatmul.bf16.gmra.mxu0 %v577
        %v676 = vpop.f32.mrf.mxu0
        %v677 = vadd.f32 0.0, %v676
        %v678 = vpop.f32.mrf.mxu0
        %v679 = vadd.f32 0.0, %v678
        %680 = vmatmul.bf16.gmra.mxu0 %v578
        %v681 = vpop.f32.mrf.mxu0
        %v682 = vadd.f32 0.0, %v681
        %v683 = vpop.f32.mrf.mxu0
        %v684 = vadd.f32 0.0, %v683
        %685 = vmatmul.bf16.gmra.mxu0 %v579
        %v686 = vpop.f32.mrf.mxu0
        %v687 = vadd.f32 0.0, %v686
        %v688 = vpop.f32.mrf.mxu0
        %v689 = vadd.f32 0.0, %v688
        %690 = vdwg.mxu0
        %s691 = scalar_lea.vmem %s473, 72 [#allocation2]
        %v692 = vld [vmem:[%s691] sm:$0xf]
        %v693 = vld [vmem:[%s691 + $0x4] sm:$0xf]
        %v694 = vld [vmem:[%s691 + $0x8] sm:$0xf]
        %v695 = vld [vmem:[%s691 + $0xc] sm:$0xf]
        %v696 = vld [vmem:[%s691 + $0x10] sm:$0xf]
        %v697 = vld [vmem:[%s691 + $0x14] sm:$0xf]
        %v698 = vld [vmem:[%s691 + $0x18] sm:$0xf]
        %v699 = vld [vmem:[%s691 + $0x1c] sm:$0xf]
        %v700 = vld [vmem:[%s691 + $0x20] sm:$0xf]
        %v701 = vld [vmem:[%s691 + $0x24] sm:$0xf]
        %v702 = vld [vmem:[%s691 + $0x28] sm:$0xf]
        %v703 = vld [vmem:[%s691 + $0x2c] sm:$0xf]
        %v704 = vld [vmem:[%s691 + $0x30] sm:$0xf]
        %v705 = vld [vmem:[%s691 + $0x34] sm:$0xf]
        %v706 = vld [vmem:[%s691 + $0x38] sm:$0xf]
        %v707 = vld [vmem:[%s691 + $0x3c] sm:$0xf]
        %v708 = vld [vmem:[%s691 + $0x40] sm:$0xf]
        %v709 = vld [vmem:[%s691 + $0x44] sm:$0xf]
        %v728 = vunpack.c.l.b16 %v692
        %v729 = vunpack.c.l.b16 %v693
        %v730 = vunpack.c.l.b16 %v694
        %v731 = vunpack.c.l.b16 %v695
        %v732 = vunpack.c.l.b16 %v696
        %v733 = vunpack.c.l.b16 %v697
        %v734 = vunpack.c.l.b16 %v698
        %v735 = vunpack.c.l.b16 %v699
        %v736 = vunpack.c.l.b16 %v700
        %v737 = vunpack.c.l.b16 %v701
        %v738 = vunpack.c.l.b16 %v702
        %v739 = vunpack.c.l.b16 %v703
        %v740 = vunpack.c.l.b16 %v704
        %v741 = vunpack.c.l.b16 %v705
        %v742 = vunpack.c.l.b16 %v706
        %v743 = vunpack.c.l.b16 %v707
        %v744 = vunpack.c.l.b16 %v708
        %v745 = vunpack.c.l.b16 %v709
        %v746 = vpack.c.b16 %v729, %v728
        %v747 = vpack.c.b16 %v731, %v730
        %v748 = vpack.c.b16 %v733, %v732
        %v749 = vpack.c.b16 %v735, %v734
        %v750 = vpack.c.b16 %v737, %v736
        %v751 = vpack.c.b16 %v739, %v738
        %v752 = vpack.c.b16 %v741, %v740
        %v753 = vpack.c.b16 %v743, %v742
        %v754 = vpack.c.b16 %v745, %v744
        %764 = vmatpush.bf16.msra.mxu0 %v628
        %765 = vmatpush.bf16.msra.mxu0 %v627
        %766 = vmatpush.bf16.msra.mxu0 %v626
        %767 = vmatpush.bf16.msra.mxu0 %v625
        %768 = vmatpush.bf16.msra.mxu0 %v624
        %769 = vmatpush.bf16.msra.mxu0 %v623
        %770 = vmatpush.bf16.msra.mxu0 %v622
        %771 = vmatpush.bf16.msra.mxu0 %v621
        %772 = vmatmul.bf16.gmra.mxu0 %v746
        %v773 = vpop.f32.mrf.mxu0
        %v774 = vadd.f32 0.0, %v773
        %v775 = vpop.f32.mrf.mxu0
        %v776 = vadd.f32 0.0, %v775
        %777 = vmatmul.bf16.gmra.mxu0 %v747
        %v778 = vpop.f32.mrf.mxu0
        %v779 = vadd.f32 0.0, %v778
        %v780 = vpop.f32.mrf.mxu0
        %v781 = vadd.f32 0.0, %v780
        %782 = vmatmul.bf16.gmra.mxu0 %v748
        %v783 = vpop.f32.mrf.mxu0
        %v784 = vadd.f32 0.0, %v783
        %v785 = vpop.f32.mrf.mxu0
        %v786 = vadd.f32 0.0, %v785
        %787 = vmatmul.bf16.gmra.mxu0 %v749
        %v788 = vpop.f32.mrf.mxu0
        %v789 = vadd.f32 0.0, %v788
        %v790 = vpop.f32.mrf.mxu0
        %v791 = vadd.f32 0.0, %v790
        %792 = vmatmul.bf16.gmra.mxu0 %v750
        %v793 = vpop.f32.mrf.mxu0
        %v794 = vadd.f32 0.0, %v793
        %v795 = vpop.f32.mrf.mxu0
        %v796 = vadd.f32 0.0, %v795
        %797 = vmatmul.bf16.gmra.mxu0 %v751
        %v798 = vpop.f32.mrf.mxu0
        %v799 = vadd.f32 0.0, %v798
        %v800 = vpop.f32.mrf.mxu0
        %v801 = vadd.f32 0.0, %v800
        %802 = vmatmul.bf16.gmra.mxu0 %v752
        %v803 = vpop.f32.mrf.mxu0
        %v804 = vadd.f32 0.0, %v803
        %v805 = vpop.f32.mrf.mxu0
        %v806 = vadd.f32 0.0, %v805
        %807 = vmatmul.bf16.gmra.mxu0 %v753
        %v808 = vpop.f32.mrf.mxu0
        %v809 = vadd.f32 0.0, %v808
        %v810 = vpop.f32.mrf.mxu0
        %v811 = vadd.f32 0.0, %v810
        %812 = vmatmul.bf16.gmra.mxu0 %v754
        %v813 = vpop.f32.mrf.mxu0
        %v814 = vadd.f32 0.0, %v813
        %v815 = vpop.f32.mrf.mxu0
        %v816 = vadd.f32 0.0, %v815
        %817 = vdwg.mxu0
        %v818 = vmax.f32 %v647, %v774
        %v819 = vmax.f32 %v649, %v776
        %v820 = vmax.f32 %v652, %v779
        %v821 = vmax.f32 %v654, %v781
        %v822 = vmax.f32 %v657, %v784
        %v823 = vmax.f32 %v659, %v786
        %v824 = vmax.f32 %v662, %v789
        %v825 = vmax.f32 %v664, %v791
        %v826 = vmax.f32 %v667, %v794
        %v827 = vmax.f32 %v669, %v796
        %v828 = vmax.f32 %v672, %v799
        %v829 = vmax.f32 %v674, %v801
        %v830 = vmax.f32 %v677, %v804
        %v831 = vmax.f32 %v679, %v806
        %v832 = vmax.f32 %v682, %v809
        %v833 = vmax.f32 %v684, %v811
        %v834 = vmax.f32 %v687, %v814
        %v835 = vmax.f32 %v689, %v816
        %s836 = scalar_lea.vmem %s473, 144 [#allocation2]
        %v837 = vld [vmem:[%s836] sm:$0xf]
        %v838 = vld [vmem:[%s836 + $0x4] sm:$0xf]
        %v839 = vld [vmem:[%s836 + $0x8] sm:$0xf]
        %v840 = vld [vmem:[%s836 + $0xc] sm:$0xf]
        %v841 = vld [vmem:[%s836 + $0x10] sm:$0xf]
        %v842 = vld [vmem:[%s836 + $0x14] sm:$0xf]
        %v843 = vld [vmem:[%s836 + $0x18] sm:$0xf]
        %v844 = vld [vmem:[%s836 + $0x1c] sm:$0xf]
        %v845 = vld [vmem:[%s836 + $0x20] sm:$0xf]
        %v846 = vld [vmem:[%s836 + $0x24] sm:$0xf]
        %v847 = vld [vmem:[%s836 + $0x28] sm:$0xf]
        %v848 = vld [vmem:[%s836 + $0x2c] sm:$0xf]
        %v849 = vld [vmem:[%s836 + $0x30] sm:$0xf]
        %v850 = vld [vmem:[%s836 + $0x34] sm:$0xf]
        %v851 = vld [vmem:[%s836 + $0x38] sm:$0xf]
        %v852 = vld [vmem:[%s836 + $0x3c] sm:$0xf]
        %v853 = vld [vmem:[%s836 + $0x40] sm:$0xf]
        %v854 = vld [vmem:[%s836 + $0x44] sm:$0xf]
        %v873 = vunpack.c.l.b16 %v837
        %v874 = vunpack.c.l.b16 %v838
        %v875 = vunpack.c.l.b16 %v839
        %v876 = vunpack.c.l.b16 %v840
        %v877 = vunpack.c.l.b16 %v841
        %v878 = vunpack.c.l.b16 %v842
        %v879 = vunpack.c.l.b16 %v843
        %v880 = vunpack.c.l.b16 %v844
        %v881 = vunpack.c.l.b16 %v845
        %v882 = vunpack.c.l.b16 %v846
        %v883 = vunpack.c.l.b16 %v847
        %v884 = vunpack.c.l.b16 %v848
        %v885 = vunpack.c.l.b16 %v849
        %v886 = vunpack.c.l.b16 %v850
        %v887 = vunpack.c.l.b16 %v851
        %v888 = vunpack.c.l.b16 %v852
        %v889 = vunpack.c.l.b16 %v853
        %v890 = vunpack.c.l.b16 %v854
        %v891 = vpack.c.b16 %v874, %v873
        %v892 = vpack.c.b16 %v876, %v875
        %v893 = vpack.c.b16 %v878, %v877
        %v894 = vpack.c.b16 %v880, %v879
        %v895 = vpack.c.b16 %v882, %v881
        %v896 = vpack.c.b16 %v884, %v883
        %v897 = vpack.c.b16 %v886, %v885
        %v898 = vpack.c.b16 %v888, %v887
        %v899 = vpack.c.b16 %v890, %v889
        %909 = vmatpush.bf16.msra.mxu0 %v628
        %910 = vmatpush.bf16.msra.mxu0 %v627
        %911 = vmatpush.bf16.msra.mxu0 %v626
        %912 = vmatpush.bf16.msra.mxu0 %v625
        %913 = vmatpush.bf16.msra.mxu0 %v624
        %914 = vmatpush.bf16.msra.mxu0 %v623
        %915 = vmatpush.bf16.msra.mxu0 %v622
        %916 = vmatpush.bf16.msra.mxu0 %v621
        %917 = vmatmul.bf16.gmra.mxu0 %v891
        %v918 = vpop.f32.mrf.mxu0
        %v919 = vadd.f32 0.0, %v918
        %v920 = vpop.f32.mrf.mxu0
        %v921 = vadd.f32 0.0, %v920
        %922 = vmatmul.bf16.gmra.mxu0 %v892
        %v923 = vpop.f32.mrf.mxu0
        %v924 = vadd.f32 0.0, %v923
        %v925 = vpop.f32.mrf.mxu0
        %v926 = vadd.f32 0.0, %v925
        %927 = vmatmul.bf16.gmra.mxu0 %v893
        %v928 = vpop.f32.mrf.mxu0
        %v929 = vadd.f32 0.0, %v928
        %v930 = vpop.f32.mrf.mxu0
        %v931 = vadd.f32 0.0, %v930
        %932 = vmatmul.bf16.gmra.mxu0 %v894
        %v933 = vpop.f32.mrf.mxu0
        %v934 = vadd.f32 0.0, %v933
        %v935 = vpop.f32.mrf.mxu0
        %v936 = vadd.f32 0.0, %v935
        %937 = vmatmul.bf16.gmra.mxu0 %v895
        %v938 = vpop.f32.mrf.mxu0
        %v939 = vadd.f32 0.0, %v938
        %v940 = vpop.f32.mrf.mxu0
        %v941 = vadd.f32 0.0, %v940
        %942 = vmatmul.bf16.gmra.mxu0 %v896
        %v943 = vpop.f32.mrf.mxu0
        %v944 = vadd.f32 0.0, %v943
        %v945 = vpop.f32.mrf.mxu0
        %v946 = vadd.f32 0.0, %v945
        %947 = vmatmul.bf16.gmra.mxu0 %v897
        %v948 = vpop.f32.mrf.mxu0
        %v949 = vadd.f32 0.0, %v948
        %v950 = vpop.f32.mrf.mxu0
        %v951 = vadd.f32 0.0, %v950
        %952 = vmatmul.bf16.gmra.mxu0 %v898
        %v953 = vpop.f32.mrf.mxu0
        %v954 = vadd.f32 0.0, %v953
        %v955 = vpop.f32.mrf.mxu0
        %v956 = vadd.f32 0.0, %v955
        %957 = vmatmul.bf16.gmra.mxu0 %v899
        %v958 = vpop.f32.mrf.mxu0
        %v959 = vadd.f32 0.0, %v958
        %v960 = vpop.f32.mrf.mxu0
        %v961 = vadd.f32 0.0, %v960
        %962 = vdwg.mxu0
        %v963 = vmax.f32 %v818, %v919
        %v964 = vmax.f32 %v819, %v921
        %v965 = vmax.f32 %v820, %v924
        %v966 = vmax.f32 %v821, %v926
        %v967 = vmax.f32 %v822, %v929
        %v968 = vmax.f32 %v823, %v931
        %v969 = vmax.f32 %v824, %v934
        %v970 = vmax.f32 %v825, %v936
        %v971 = vmax.f32 %v826, %v939
        %v972 = vmax.f32 %v827, %v941
        %v973 = vmax.f32 %v828, %v944
        %v974 = vmax.f32 %v829, %v946
        %v975 = vmax.f32 %v830, %v949
        %v976 = vmax.f32 %v831, %v951
        %v977 = vmax.f32 %v832, %v954
        %v978 = vmax.f32 %v833, %v956
        %v979 = vmax.f32 %v834, %v959
        %v980 = vmax.f32 %v835, %v961
        %s981 = scalar_lea.vmem %s473, 216 [#allocation2]
        %v982 = vld [vmem:[%s981] sm:$0xf]
        %v983 = vld [vmem:[%s981 + $0x4] sm:$0xf]
        %v984 = vld [vmem:[%s981 + $0x8] sm:$0xf]
        %v985 = vld [vmem:[%s981 + $0xc] sm:$0xf]
        %v986 = vld [vmem:[%s981 + $0x10] sm:$0xf]
        %v987 = vld [vmem:[%s981 + $0x14] sm:$0xf]
        %v988 = vld [vmem:[%s981 + $0x18] sm:$0xf]
        %v989 = vld [vmem:[%s981 + $0x1c] sm:$0xf]
        %v990 = vld [vmem:[%s981 + $0x20] sm:$0xf]
        %v991 = vld [vmem:[%s981 + $0x24] sm:$0xf]
        %v992 = vld [vmem:[%s981 + $0x28] sm:$0xf]
        %v993 = vld [vmem:[%s981 + $0x2c] sm:$0xf]
        %v994 = vld [vmem:[%s981 + $0x30] sm:$0xf]
        %v995 = vld [vmem:[%s981 + $0x34] sm:$0xf]
        %v996 = vld [vmem:[%s981 + $0x38] sm:$0xf]
        %v997 = vld [vmem:[%s981 + $0x3c] sm:$0xf]
        %v998 = vld [vmem:[%s981 + $0x40] sm:$0xf]
        %v999 = vld [vmem:[%s981 + $0x44] sm:$0xf]
        %v1018 = vunpack.c.l.b16 %v982
        %v1019 = vunpack.c.l.b16 %v983
        %v1020 = vunpack.c.l.b16 %v984
        %v1021 = vunpack.c.l.b16 %v985
        %v1022 = vunpack.c.l.b16 %v986
        %v1023 = vunpack.c.l.b16 %v987
        %v1024 = vunpack.c.l.b16 %v988
        %v1025 = vunpack.c.l.b16 %v989
        %v1026 = vunpack.c.l.b16 %v990
        %v1027 = vunpack.c.l.b16 %v991
        %v1028 = vunpack.c.l.b16 %v992
        %v1029 = vunpack.c.l.b16 %v993
        %v1030 = vunpack.c.l.b16 %v994
        %v1031 = vunpack.c.l.b16 %v995
        %v1032 = vunpack.c.l.b16 %v996
        %v1033 = vunpack.c.l.b16 %v997
        %v1034 = vunpack.c.l.b16 %v998
        %v1035 = vunpack.c.l.b16 %v999
        %v1036 = vpack.c.b16 %v1019, %v1018
        %v1037 = vpack.c.b16 %v1021, %v1020
        %v1038 = vpack.c.b16 %v1023, %v1022
        %v1039 = vpack.c.b16 %v1025, %v1024
        %v1040 = vpack.c.b16 %v1027, %v1026
        %v1041 = vpack.c.b16 %v1029, %v1028
        %v1042 = vpack.c.b16 %v1031, %v1030
        %v1043 = vpack.c.b16 %v1033, %v1032
        %v1044 = vpack.c.b16 %v1035, %v1034
        %1054 = vmatpush.bf16.msra.mxu0 %v628
        %1055 = vmatpush.bf16.msra.mxu0 %v627
        %1056 = vmatpush.bf16.msra.mxu0 %v626
        %1057 = vmatpush.bf16.msra.mxu0 %v625
        %1058 = vmatpush.bf16.msra.mxu0 %v624
        %1059 = vmatpush.bf16.msra.mxu0 %v623
        %1060 = vmatpush.bf16.msra.mxu0 %v622
        %1061 = vmatpush.bf16.msra.mxu0 %v621
        %1062 = vmatmul.bf16.gmra.mxu0 %v1036
        %v1063 = vpop.f32.mrf.mxu0
        %v1064 = vadd.f32 0.0, %v1063
        %v1065 = vpop.f32.mrf.mxu0
        %v1066 = vadd.f32 0.0, %v1065
        %1067 = vmatmul.bf16.gmra.mxu0 %v1037
        %v1068 = vpop.f32.mrf.mxu0
        %v1069 = vadd.f32 0.0, %v1068
        %v1070 = vpop.f32.mrf.mxu0
        %v1071 = vadd.f32 0.0, %v1070
        %1072 = vmatmul.bf16.gmra.mxu0 %v1038
        %v1073 = vpop.f32.mrf.mxu0
        %v1074 = vadd.f32 0.0, %v1073
        %v1075 = vpop.f32.mrf.mxu0
        %v1076 = vadd.f32 0.0, %v1075
        %1077 = vmatmul.bf16.gmra.mxu0 %v1039
        %v1078 = vpop.f32.mrf.mxu0
        %v1079 = vadd.f32 0.0, %v1078
        %v1080 = vpop.f32.mrf.mxu0
        %v1081 = vadd.f32 0.0, %v1080
        %1082 = vmatmul.bf16.gmra.mxu0 %v1040
        %v1083 = vpop.f32.mrf.mxu0
        %v1084 = vadd.f32 0.0, %v1083
        %v1085 = vpop.f32.mrf.mxu0
        %v1086 = vadd.f32 0.0, %v1085
        %1087 = vmatmul.bf16.gmra.mxu0 %v1041
        %v1088 = vpop.f32.mrf.mxu0
        %v1089 = vadd.f32 0.0, %v1088
        %v1090 = vpop.f32.mrf.mxu0
        %v1091 = vadd.f32 0.0, %v1090
        %1092 = vmatmul.bf16.gmra.mxu0 %v1042
        %v1093 = vpop.f32.mrf.mxu0
        %v1094 = vadd.f32 0.0, %v1093
        %v1095 = vpop.f32.mrf.mxu0
        %v1096 = vadd.f32 0.0, %v1095
        %1097 = vmatmul.bf16.gmra.mxu0 %v1043
        %v1098 = vpop.f32.mrf.mxu0
        %v1099 = vadd.f32 0.0, %v1098
        %v1100 = vpop.f32.mrf.mxu0
        %v1101 = vadd.f32 0.0, %v1100
        %1102 = vmatmul.bf16.gmra.mxu0 %v1044
        %v1103 = vpop.f32.mrf.mxu0
        %v1104 = vadd.f32 0.0, %v1103
        %v1105 = vpop.f32.mrf.mxu0
        %v1106 = vadd.f32 0.0, %v1105
        %1107 = vdwg.mxu0
        %v1108 = vmax.f32 %v963, %v1064
        %v1109 = vmax.f32 %v964, %v1066
        %v1110 = vmax.f32 %v965, %v1069
        %v1111 = vmax.f32 %v966, %v1071
        %v1112 = vmax.f32 %v967, %v1074
        %v1113 = vmax.f32 %v968, %v1076
        %v1114 = vmax.f32 %v969, %v1079
        %v1115 = vmax.f32 %v970, %v1081
        %v1116 = vmax.f32 %v971, %v1084
        %v1117 = vmax.f32 %v972, %v1086
        %v1118 = vmax.f32 %v973, %v1089
        %v1119 = vmax.f32 %v974, %v1091
        %v1120 = vmax.f32 %v975, %v1094
        %v1121 = vmax.f32 %v976, %v1096
        %v1122 = vmax.f32 %v977, %v1099
        %v1123 = vmax.f32 %v978, %v1101
        %v1124 = vmax.f32 %v979, %v1104
        %v1125 = vmax.f32 %v980, %v1106
        %v1126 = vld [vmem:[%s2] sm:$0x1]
        %v1128 = vperm.slane %v1126, 0
        %v1130 = vadd.f32 %v1108, %v1128
        %v1131 = vadd.f32 %v1109, %v1128
        %v1132 = vadd.f32 %v1110, %v1128
        %v1133 = vadd.f32 %v1111, %v1128
        %v1134 = vadd.f32 %v1112, %v1128
        %v1135 = vadd.f32 %v1113, %v1128
        %v1136 = vadd.f32 %v1114, %v1128
        %v1137 = vadd.f32 %v1115, %v1128
        %v1138 = vadd.f32 %v1116, %v1128
        %v1139 = vadd.f32 %v1117, %v1128
        %v1140 = vadd.f32 %v1118, %v1128
        %v1141 = vadd.f32 %v1119, %v1128
        %v1142 = vadd.f32 %v1120, %v1128
        %v1143 = vadd.f32 %v1121, %v1128
        %v1144 = vadd.f32 %v1122, %v1128
        %v1145 = vadd.f32 %v1123, %v1128
        %v1146 = vadd.f32 %v1124, %v1128
        %v1147 = vadd.f32 %v1125, %v1128
        %v1148 = vmax.f32 %v1130, 0.0
        %v1149 = vmax.f32 %v1131, 0.0
        %v1150 = vmax.f32 %v1132, 0.0
        %v1151 = vmax.f32 %v1133, 0.0
        %v1152 = vmax.f32 %v1134, 0.0
        %v1153 = vmax.f32 %v1135, 0.0
        %v1154 = vmax.f32 %v1136, 0.0
        %v1155 = vmax.f32 %v1137, 0.0
        %v1156 = vmax.f32 %v1138, 0.0
        %v1157 = vmax.f32 %v1139, 0.0
        %v1158 = vmax.f32 %v1140, 0.0
        %v1159 = vmax.f32 %v1141, 0.0
        %v1160 = vmax.f32 %v1142, 0.0
        %v1161 = vmax.f32 %v1143, 0.0
        %v1162 = vmax.f32 %v1144, 0.0
        %v1163 = vmax.f32 %v1145, 0.0
        %v1164 = vmax.f32 %v1146, 0.0
        %v1165 = vmax.f32 %v1147, 0.0
        %v1166 = vpack.c.bf16 %v1148, %v1148
        %v1167 = vpack.c.bf16 %v1149, %v1149
        %v1168 = vpack.c.bf16 %v1150, %v1150
        %v1169 = vpack.c.bf16 %v1151, %v1151
        %v1170 = vpack.c.bf16 %v1152, %v1152
        %v1171 = vpack.c.bf16 %v1153, %v1153
        %v1172 = vpack.c.bf16 %v1154, %v1154
        %v1173 = vpack.c.bf16 %v1155, %v1155
        %v1174 = vpack.c.bf16 %v1156, %v1156
        %v1175 = vpack.c.bf16 %v1157, %v1157
        %v1176 = vpack.c.bf16 %v1158, %v1158
        %v1177 = vpack.c.bf16 %v1159, %v1159
        %v1178 = vpack.c.bf16 %v1160, %v1160
        %v1179 = vpack.c.bf16 %v1161, %v1161
        %v1180 = vpack.c.bf16 %v1162, %v1162
        %v1181 = vpack.c.bf16 %v1163, %v1163
        %v1182 = vpack.c.bf16 %v1164, %v1164
        %v1183 = vpack.c.bf16 %v1165, %v1165
        %1184 = vst [vmem:[%s499] sm:$0xf] %v1166
        %1185 = vst [vmem:[%s499 + $0x4] sm:$0xf] %v1167
        %1186 = vst [vmem:[%s499 + $0x8] sm:$0xf] %v1168
        %1187 = vst [vmem:[%s499 + $0xc] sm:$0xf] %v1169
        %1188 = vst [vmem:[%s499 + $0x10] sm:$0xf] %v1170
        %1189 = vst [vmem:[%s499 + $0x14] sm:$0xf] %v1171
        %1190 = vst [vmem:[%s499 + $0x18] sm:$0xf] %v1172
        %1191 = vst [vmem:[%s499 + $0x1c] sm:$0xf] %v1173
        %1192 = vst [vmem:[%s499 + $0x20] sm:$0xf] %v1174
        %1193 = vst [vmem:[%s499 + $0x24] sm:$0xf] %v1175
        %1194 = vst [vmem:[%s499 + $0x28] sm:$0xf] %v1176
        %1195 = vst [vmem:[%s499 + $0x2c] sm:$0xf] %v1177
        %1196 = vst [vmem:[%s499 + $0x30] sm:$0xf] %v1178
        %1197 = vst [vmem:[%s499 + $0x34] sm:$0xf] %v1179
        %1198 = vst [vmem:[%s499 + $0x38] sm:$0xf] %v1180
        %1199 = vst [vmem:[%s499 + $0x3c] sm:$0xf] %v1181
        %1200 = vst [vmem:[%s499 + $0x40] sm:$0xf] %v1182
        %1201 = vst [vmem:[%s499 + $0x44] sm:$0xf] %v1183
        %s1202 = smul.u32 18, %s14
        %p1203 = scmp.lt.s32.totalorder %s1202, 35
        %s1204 = scalar_select %p1203, %s1202, 35
        %s1205 = smul.addr %s1204, 4
        %s1206 = scalar_lea.vmem %s3, %s1205
        // Predicated region
        $region74: #{net_forward.2} parent=68 // pred_check
          %p1207 = pneg %p100
        $region75: #{net_forward.2} parent=68 // pred_check_branch
          %1209 = sbr.rel (%p1207) target = $region77
        $region76: #{net_forward.2} parent=68 // pred_region
          %s1210 = smul.u32 18, %s14
        $region77: #{net_forward.2} parent=68 // pred_fallthru
          _
      $region69: #{net_forward.2} parent=5 // pred_fallthru
        _
      %p1211 = scmp.le.s32.totalorder 2, %s9
      // Predicated region
      $region78: #{net_forward.2} parent=5 // pred_check
        %p1212 = pneg %p1211
      $region79: #{net_forward.2} parent=5 // pred_check_branch
        %1214 = sbr.rel (%p1212) target = $region81
      $region80: #{net_forward.2} parent=5 // pred_region
        %s1215 = ssub.s32 %s9, 2
        // Predicated region
        $region82: #{net_forward.2} parent=80 // pred_check
          %p1216 = pneg %p106
        $region83: #{net_forward.2} parent=80 // pred_check_branch
          %1218 = sbr.rel (%p1216) target = $region85
        $region84: #{net_forward.2} parent=80 // pred_region
          %s1219 = smul.u32 18, %s15
          %p1220 = scmp.lt.s32.totalorder %s1219, 35
          %s1221 = scalar_select %p1220, %s1219, 35
          %s1222 = smul.addr %s1221, 4
          %s1223 = scalar_lea.vmem %s3, %s1222
        $region85: #{net_forward.2} parent=80 // pred_fallthru
          _
      $region81: #{net_forward.2} parent=5 // pred_fallthru
        _
    $region6: #{net_forward.2} parent=1 // loop_footer
      %s13 = sadd.s32 1, %s9
    $region7: #{net_forward.2} parent=1 // loop_footer_branch
      %8 = sbr.rel target = $region3
    $region8: #{net_forward.2} parent=1 // loop_exit
      _

// kernel: net_forward.3
$region0: #{net_forward.3}
  #allocation0 [shape = 'u32[]', space=smem, size = 0x4, offset = 0x4, fixed_abs, tag = 'smem constant byte address 0x4 - core index']
  #allocation1 [shape = 'u32[72,128]{1,0:T(1,128)}', space=vmem, size = 0x9000, scoped, tag = 'internal scratch']
  %s0 = inlined_call_operand.vmem [shape: bf16[4,16,16,256], index: 0, kind: input, shape index: {}]
  %s1 = inlined_call_operand.vmem [shape: bf16[256,128], index: 1, kind: input, shape index: {}]
  %s2 = inlined_call_operand.vmem [shape: f32[1,128], index: 2, kind: input, shape index: {}]
  %s3 = inlined_call_operand.vmem [shape: bf16[16,128,128], index: 3, kind: input, shape index: {}]
  %s4 = inlined_call_operand.vmem [shape: f32[1,128], index: 4, kind: input, shape index: {}]
  %s5 = inlined_call_operand.vmem [shape: bf16[128,128], index: 5, kind: input, shape index: {}]
  %s6 = inlined_call_operand.vmem [shape: f32[1,128], index: 6, kind: input, shape index: {}]
  %s7 = inlined_call_operand.vmem [shape: f32[16,128], index: 7, kind: output, shape index: {}]
  %s8 = sld [smem:[#allocation0]]
  $region99: #{net_forward.3} parent=0
    _
  %s10 = ssub.s32 1, %s8
  %s11 = scalar_select 0, %s10, %s8
  $region1: #{net_forward.3} parent=0
    #allocation2 [shape = 'u8[524288]{0}', space=vmem, size = 0x80000, scoped, tag = 'input window, operand 0']
    loop: start=0, step=1, limit=4
    $region2: #{net_forward.3} parent=1 // loop_pre_header
      _
    $region3: #{net_forward.3} parent=1 // loop_header
      %s13 = sphi 0, %s17
      %p14 = scmp.ge.s32.totalorder %s13, 4
      %s23 = sphi 0, %s25
      %s26 = sphi 0, %s23
      %s27 = sphi 0, %s26
      %s43 = sphi 0, %s27
      %s47 = sphi 0, %s47
      %s49 = sphi 0, %s47
      %s50 = sphi 0, %s49
      %s64 = sphi 0, %s50
      %s68 = sphi 0, %s68
      %s70 = sphi 0, %s68
      %s71 = sphi 0, %s70
      %s85 = sphi 0, %s71
      %s89 = sphi 0, %s89
      %s91 = sphi 0, %s89
      %s92 = sphi 0, %s91
      %s106 = sphi 0, %s92
      %s110 = sphi 0, %s110
      %s112 = sphi 0, %s110
      %s113 = sphi 0, %s112
      %s127 = sphi 0, %s113
      %s131 = sphi 0, %s131
      %s133 = sphi 0, %s131
      %s134 = sphi 0, %s133
      %s148 = sphi 0, %s134
      %s152 = sphi 0, %s152
      %s154 = sphi 0, %s152
      %s155 = sphi 0, %s154
      %s169 = sphi 0, %s155
      %s175 = sphi 0, %s177
      %s178 = sphi 0, %s175
      %s179 = sphi 0, %s178
      %s195 = sphi 0, %s179
    $region4: #{net_forward.3} parent=1 // loop_header_branch
      %16 = sbr.rel (%p14) target = $region8
    $region5: #{net_forward.3} parent=1 // loop_body
      %s18 = ssub.s32 %s13, 1
      %s19 = ssub.s32 %s13, 2
      %s20 = sadd.s32 %s13, 1
      %s21 = ssub.s32 %s13, %s20
      %p22 = scmp.eq.s32.totalorder %s21, 0
      %s24 = sadd.s32 %s23, 1
      %s25 = scalar_select %p22, %s23, %s24
      %p28 = pneg %p22
      %p29 = scmp.eq.s32.totalorder %s13, 1
      %p30 = por %p28, %p29
      %p31 = scmp.ne.s32.totalorder %s23, %s26
      %p32 = scmp.eq.s32.totalorder %s13, 0
      %p33 = por %p31, %p32
      %p34 = scmp.ne.s32.totalorder %s23, %s26
      %p35 = scmp.eq.s32.totalorder %s18, 1
      %p36 = por %p34, %p35
      %p37 = scmp.ne.s32.totalorder %s26, %s27
      %p38 = scmp.eq.s32.totalorder %s18, 0
      %p39 = por %p37, %p38
      %p40 = scmp.ne.s32.totalorder %s26, %s27
      %p41 = scmp.eq.s32.totalorder %s19, 1
      %p42 = por %p40, %p41
      %p44 = scmp.ne.s32.totalorder %s27, %s43
      %p45 = scmp.eq.s32.totalorder %s19, 0
      %p46 = por %p44, %p45
      %s48 = sadd.s32 %s47, 1
      %p51 = scmp.eq.s32.totalorder %s13, 1
      %p52 = scmp.ne.s32.totalorder %s47, %s49
      %p53 = scmp.eq.s32.totalorder %s13, 0
      %p54 = por %p52, %p53
      %p55 = scmp.ne.s32.totalorder %s47, %s49
      %p56 = scmp.eq.s32.totalorder %s18, 1
      %p57 = por %p55, %p56
      %p58 = scmp.ne.s32.totalorder %s49, %s50
      %p59 = scmp.eq.s32.totalorder %s18, 0
      %p60 = por %p58, %p59
      %p61 = scmp.ne.s32.totalorder %s49, %s50
      %p62 = scmp.eq.s32.totalorder %s19, 1
      %p63 = por %p61, %p62
      %p65 = scmp.ne.s32.totalorder %s50, %s64
      %p66 = scmp.eq.s32.totalorder %s19, 0
      %p67 = por %p65, %p66
      %s69 = sadd.s32 %s68, 1
      %p72 = scmp.eq.s32.totalorder %s13, 1
      %p73 = scmp.ne.s32.totalorder %s68, %s70
      %p74 = scmp.eq.s32.totalorder %s13, 0
      %p75 = por %p73, %p74
      %p76 = scmp.ne.s32.totalorder %s68, %s70
      %p77 = scmp.eq.s32.totalorder %s18, 1
      %p78 = por %p76, %p77
      %p79 = scmp.ne.s32.totalorder %s70, %s71
      %p80 = scmp.eq.s32.totalorder %s18, 0
      %p81 = por %p79, %p80
      %p82 = scmp.ne.s32.totalorder %s70, %s71
      %p83 = scmp.eq.s32.totalorder %s19, 1
      %p84 = por %p82, %p83
      %p86 = scmp.ne.s32.totalorder %s71, %s85
      %p87 = scmp.eq.s32.totalorder %s19, 0
      %p88 = por %p86, %p87
      %s90 = sadd.s32 %s89, 1
      %p93 = scmp.eq.s32.totalorder %s13, 1
      %p94 = scmp.ne.s32.totalorder %s89, %s91
      %p95 = scmp.eq.s32.totalorder %s13, 0
      %p96 = por %p94, %p95
      %p97 = scmp.ne.s32.totalorder %s89, %s91
      %p98 = scmp.eq.s32.totalorder %s18, 1
      %p99 = por %p97, %p98
      %p100 = scmp.ne.s32.totalorder %s91, %s92
      %p101 = scmp.eq.s32.totalorder %s18, 0
      %p102 = por %p100, %p101
      %p103 = scmp.ne.s32.totalorder %s91, %s92
      %p104 = scmp.eq.s32.totalorder %s19, 1
      %p105 = por %p103, %p104
      %p107 = scmp.ne.s32.totalorder %s92, %s106
      %p108 = scmp.eq.s32.totalorder %s19, 0
      %p109 = por %p107, %p108
      %s111 = sadd.s32 %s110, 1
      %p114 = scmp.eq.s32.totalorder %s13, 1
      %p115 = scmp.ne.s32.totalorder %s110, %s112
      %p116 = scmp.eq.s32.totalorder %s13, 0
      %p117 = por %p115, %p116
      %p118 = scmp.ne.s32.totalorder %s110, %s112
      %p119 = scmp.eq.s32.totalorder %s18, 1
      %p120 = por %p118, %p119
      %p121 = scmp.ne.s32.totalorder %s112, %s113
      %p122 = scmp.eq.s32.totalorder %s18, 0
      %p123 = por %p121, %p122
      %p124 = scmp.ne.s32.totalorder %s112, %s113
      %p125 = scmp.eq.s32.totalorder %s19, 1
      %p126 = por %p124, %p125
      %p128 = scmp.ne.s32.totalorder %s113, %s127
      %p129 = scmp.eq.s32.totalorder %s19, 0
      %p130 = por %p128, %p129
      %s132 = sadd.s32 %s131, 1
      %p135 = scmp.eq.s32.totalorder %s13, 1
      %p136 = scmp.ne.s32.totalorder %s131, %s133
      %p137 = scmp.eq.s32.totalorder %s13, 0
      %p138 = por %p136, %p137
      %p139 = scmp.ne.s32.totalorder %s131, %s133
      %p140 = scmp.eq.s32.totalorder %s18, 1
      %p141 = por %p139, %p140
      %p142 = scmp.ne.s32.totalorder %s133, %s134
      %p143 = scmp.eq.s32.totalorder %s18, 0
      %p144 = por %p142, %p143
      %p145 = scmp.ne.s32.totalorder %s133, %s134
      %p146 = scmp.eq.s32.totalorder %s19, 1
      %p147 = por %p145, %p146
      %p149 = scmp.ne.s32.totalorder %s134, %s148
      %p150 = scmp.eq.s32.totalorder %s19, 0
      %p151 = por %p149, %p150
      %s153 = sadd.s32 %s152, 1
      %p156 = scmp.eq.s32.totalorder %s13, 1
      %p157 = scmp.ne.s32.totalorder %s152, %s154
      %p158 = scmp.eq.s32.totalorder %s13, 0
      %p159 = por %p157, %p158
      %p160 = scmp.ne.s32.totalorder %s152, %s154
      %p161 = scmp.eq.s32.totalorder %s18, 1
      %p162 = por %p160, %p161
      %p163 = scmp.ne.s32.totalorder %s154, %s155
      %p164 = scmp.eq.s32.totalorder %s18, 0
      %p165 = por %p163, %p164
      %p166 = scmp.ne.s32.totalorder %s154, %s155
      %p167 = scmp.eq.s32.totalorder %s19, 1
      %p168 = por %p166, %p167
      %p170 = scmp.ne.s32.totalorder %s155, %s169
      %p171 = scmp.eq.s32.totalorder %s19, 0
      %p172 = por %p170, %p171
      %s173 = ssub.s32 %s13, %s20
      %p174 = scmp.eq.s32.totalorder %s173, 0
      %s176 = sadd.s32 %s175, 1
      %s177 = scalar_select %p174, %s175, %s176
      %p180 = pneg %p174
      %p181 = scmp.eq.s32.totalorder %s13, 1
      %p182 = por %p180, %p181
      %p183 = scmp.ne.s32.totalorder %s175, %s178
      %p184 = scmp.eq.s32.totalorder %s13, 0
      %p185 = por %p183, %p184
      %p186 = scmp.ne.s32.totalorder %s175, %s178
      %p187 = scmp.eq.s32.totalorder %s18, 1
      %p188 = por %p186, %p187
      %p189 = scmp.ne.s32.totalorder %s178, %s179
      %p190 = scmp.eq.s32.totalorder %s18, 0
      %p191 = por %p189, %p190
      %p192 = scmp.ne.s32.totalorder %s178, %s179
      %p193 = scmp.eq.s32.totalorder %s19, 1
      %p194 = por %p192, %p193
      %p196 = scmp.ne.s32.totalorder %s179, %s195
      %p197 = scmp.eq.s32.totalorder %s19, 0
      %p198 = por %p196, %p197
      %p199 = scmp.le.s32.totalorder 1, %s13
      %p200 = scmp.lt.s32.totalorder %s13, 3
      %p201 = pnand %p199, %p200
      %p202 = pneg %p201
      // Predicated region
      $region9: #{net_forward.3} parent=5 // pred_check
        _
      $region10: #{net_forward.3} parent=5 // pred_check_branch
        %204 = sbr.rel (%p201) target = $region12
      $region11: #{net_forward.3} parent=5 // pred_region
        %s205 = ssub.s32 %s13, 1
        // Predicated region
        $region13: #{net_forward.3} parent=11 // pred_check
          %p206 = pneg %p60
        $region14: #{net_forward.3} parent=11 // pred_check_branch
          %208 = sbr.rel (%p206) target = $region16
        $region15: #{net_forward.3} parent=11 // pred_region
          _
        $region16: #{net_forward.3} parent=11 // pred_fallthru
          _
        // Predicated region
        $region17: #{net_forward.3} parent=11 // pred_check
          %p209 = pneg %p81
        $region18: #{net_forward.3} parent=11 // pred_check_branch
          %211 = sbr.rel (%p209) target = $region20
        $region19: #{net_forward.3} parent=11 // pred_region
          _
        $region20: #{net_forward.3} parent=11 // pred_fallthru
          _
        // Predicated region
        $region21: #{net_forward.3} parent=11 // pred_check
          %p212 = pneg %p102
        $region22: #{net_forward.3} parent=11 // pred_check_branch
          %214 = sbr.rel (%p212) target = $region24
        $region23: #{net_forward.3} parent=11 // pred_region
          _
        $region24: #{net_forward.3} parent=11 // pred_fallthru
          _
        // Predicated region
        $region25: #{net_forward.3} parent=11 // pred_check
          %p215 = pneg %p123
        $region26: #{net_forward.3} parent=11 // pred_check_branch
          %217 = sbr.rel (%p215) target = $region28
        $region27: #{net_forward.3} parent=11 // pred_region
          _
        $region28: #{net_forward.3} parent=11 // pred_fallthru
          _
        // Predicated region
        $region29: #{net_forward.3} parent=11 // pred_check
          %p218 = pneg %p144
        $region30: #{net_forward.3} parent=11 // pred_check_branch
          %220 = sbr.rel (%p218) target = $region32
        $region31: #{net_forward.3} parent=11 // pred_region
          _
        $region32: #{net_forward.3} parent=11 // pred_fallthru
          _
        // Predicated region
        $region33: #{net_forward.3} parent=11 // pred_check
          %p221 = pneg %p165
        $region34: #{net_forward.3} parent=11 // pred_check_branch
          %223 = sbr.rel (%p221) target = $region36
        $region35: #{net_forward.3} parent=11 // pred_region
          _
        $region36: #{net_forward.3} parent=11 // pred_fallthru
          _
      $region12: #{net_forward.3} parent=5 // pred_fallthru
        _
      %p224 = scmp.lt.s32.totalorder %s13, 2
      // Predicated region
      $region37: #{net_forward.3} parent=5 // pred_check
        %p225 = pneg %p224
      $region38: #{net_forward.3} parent=5 // pred_check_branch
        %227 = sbr.rel (%p225) target = $region40
      $region39: #{net_forward.3} parent=5 // pred_region
        // Predicated region
        $region41: #{net_forward.3} parent=39 // pred_check
          %p228 = pneg %p33
        $region42: #{net_forward.3} parent=39 // pred_check_branch
          %230 = sbr.rel (%p228) target = $region44
        $region43: #{net_forward.3} parent=39 // pred_region
          %s231 = sand.u32 %s23, 1
          %s232 = sand.u32 %s23, 1
          %s233 = smul.addr %s232, 512
          %s234 = scalar_lea.vmem [#allocation2], %s233
          %s235 = smul.addr %s13, 2
          %s236 = smul.addr %s235, 4
          %s237 = scalar_lea.vmem %s0, %s236
          // Predicated region
          $region45: #{net_forward.3} parent=43 // pred_check
            _
          $region46: #{net_forward.3} parent=43 // pred_check_branch
            %239 = sbr.rel (0) target = $region48
          $region47: #{net_forward.3} parent=43 // pred_region
            // Predicated region
            $region49: #{net_forward.3} parent=47 // pred_check
              _
            $region50: #{net_forward.3} parent=47 // pred_check_branch
              %241 = sbr.rel (0) target = $region52
            $region51: #{net_forward.3} parent=47 // pred_region
              // Predicated region
              $region64: #{net_forward.3} parent=51 // pred_check
                _
              $region65: #{net_forward.3} parent=51 // pred_check_branch
                %383 = sbr.rel (0) target = $region67
              $region66: #{net_forward.3} parent=51 // pred_region
                loop: start=0, step=1, limit=1
                $region68: #{net_forward.3} parent=66 // loop_pre_header
                  _
                $region69: #{net_forward.3} parent=66 // loop_header
                  %s385 = sphi 0, %s389
                  %p386 = scmp.ge.s32.totalorder %s385, 1
                  %s390 = sphi %s237, %s237
                  %s391 = sphi %s234, %s234
                $region70: #{net_forward.3} parent=66 // loop_header_branch
                  %388 = sbr.rel (%p386) target = $region74
                $region71: #{net_forward.3} parent=66 // loop_body
                  %v392 = vld [vmem:[%s390] sm:$0xff]
                  %393 = vst [vmem:[%s391] sm:$0xff] %v392
                  %v394 = vld [vmem:[%s390 + $0x10] sm:$0xff]
                  %395 = vst [vmem:[%s391 + $0x8] sm:$0xff] %v394
                  %v396 = vld [vmem:[%s390 + $0x20] sm:$0xff]
                  %397 = vst [vmem:[%s391 + $0x10] sm:$0xff] %v396
                  %v398 = vld [vmem:[%s390 + $0x30] sm:$0xff]
                  %399 = vst [vmem:[%s391 + $0x18] sm:$0xff] %v398
                  %v400 = vld [vmem:[%s390 + $0x40] sm:$0xff]
                  %401 = vst [vmem:[%s391 + $0x20] sm:$0xff] %v400
                  %v402 = vld [vmem:[%s390 + $0x50] sm:$0xff]
                  %403 = vst [vmem:[%s391 + $0x28] sm:$0xff] %v402
                  %v404 = vld [vmem:[%s390 + $0x60] sm:$0xff]
                  %405 = vst [vmem:[%s391 + $0x30] sm:$0xff] %v404
                  %v406 = vld [vmem:[%s390 + $0x70] sm:$0xff]
                  %407 = vst [vmem:[%s391 + $0x38] sm:$0xff] %v406
                  %v408 = vld [vmem:[%s390 + $0x80] sm:$0xff]
                  %409 = vst [vmem:[%s391 + $0x40] sm:$0xff] %v408
                  %v410 = vld [vmem:[%s390 + $0x90] sm:$0xff]
                  %411 = vst [vmem:[%s391 + $0x48] sm:$0xff] %v410
                  %v412 = vld [vmem:[%s390 + $0xa0] sm:$0xff]
                  %413 = vst [vmem:[%s391 + $0x50] sm:$0xff] %v412
                  %v414 = vld [vmem:[%s390 + $0xb0] sm:$0xff]
                  %415 = vst [vmem:[%s391 + $0x58] sm:$0xff] %v414
                  %v416 = vld [vmem:[%s390 + $0xc0] sm:$0xff]
                  %417 = vst [vmem:[%s391 + $0x60] sm:$0xff] %v416
                  %v418 = vld [vmem:[%s390 + $0xd0] sm:$0xff]
                  %419 = vst [vmem:[%s391 + $0x68] sm:$0xff] %v418
                  %v420 = vld [vmem:[%s390 + $0xe0] sm:$0xff]
                  %421 = vst [vmem:[%s391 + $0x70] sm:$0xff] %v420
                  %v422 = vld [vmem:[%s390 + $0xf0] sm:$0xff]
                  %423 = vst [vmem:[%s391 + $0x78] sm:$0xff] %v422
                  %v424 = vld [vmem:[%s390 + $0x100] sm:$0xff]
                  %425 = vst [vmem:[%s391 + $0x80] sm:$0xff] %v424
                  %v426 = vld [vmem:[%s390 + $0x110] sm:$0xff]
                  %427 = vst [vmem:[%s391 + $0x88] sm:$0xff] %v426
                  %v428 = vld [vmem:[%s390 + $0x120] sm:$0xff]
                  %429 = vst [vmem:[%s391 + $0x90] sm:$0xff] %v428
                  %v430 = vld [vmem:[%s390 + $0x130] sm:$0xff]
                  %431 = vst [vmem:[%s391 + $0x98] sm:$0xff] %v430
                  %v432 = vld [vmem:[%s390 + $0x140] sm:$0xff]
                  %433 = vst [vmem:[%s391 + $0xa0] sm:$0xff] %v432
                  %v434 = vld [vmem:[%s390 + $0x150] sm:$0xff]
                  %435 = vst [vmem:[%s391 + $0xa8] sm:$0xff] %v434
                  %v436 = vld [vmem:[%s390 + $0x160] sm:$0xff]
                  %437 = vst [vmem:[%s391 + $0xb0] sm:$0xff] %v436
                  %v438 = vld [vmem:[%s390 + $0x170] sm:$0xff]
                  %439 = vst [vmem:[%s391 + $0xb8] sm:$0xff] %v438
                  %v440 = vld [vmem:[%s390 + $0x180] sm:$0xff]
                  %441 = vst [vmem:[%s391 + $0xc0] sm:$0xff] %v440
                  %v442 = vld [vmem:[%s390 + $0x190] sm:$0xff]
                  %443 = vst [vmem:[%s391 + $0xc8] sm:$0xff] %v442
                  %v444 = vld [vmem:[%s390 + $0x1a0] sm:$0xff]
                  %445 = vst [vmem:[%s391 + $0xd0] sm:$0xff] %v444
                  %v446 = vld [vmem:[%s390 + $0x1b0] sm:$0xff]
                  %447 = vst [vmem:[%s391 + $0xd8] sm:$0xff] %v446
                  %v448 = vld [vmem:[%s390 + $0x1c0] sm:$0xff]
                  %449 = vst [vmem:[%s391 + $0xe0] sm:$0xff] %v448
                  %v450 = vld [vmem:[%s390 + $0x1d0] sm:$0xff]
                  %451 = vst [vmem:[%s391 + $0xe8] sm:$0xff] %v450
                  %v452 = vld [vmem:[%s390 + $0x1e0] sm:$0xff]
                  %453 = vst [vmem:[%s391 + $0xf0] sm:$0xff] %v452
                  %v454 = vld [vmem:[%s390 + $0x1f0] sm:$0xff]
                  %455 = vst [vmem:[%s391 + $0xf8] sm:$0xff] %v454
                  %v456 = vld [vmem:[%s390 + $0x200] sm:$0xff]
                  %457 = vst [vmem:[%s391 + $0x100] sm:$0xff] %v456
                  %v458 = vld [vmem:[%s390 + $0x210] sm:$0xff]
                  %459 = vst [vmem:[%s391 + $0x108] sm:$0xff] %v458
                  %v460 = vld [vmem:[%s390 + $0x220] sm:$0xff]
                  %461 = vst [vmem:[%s391 + $0x110] sm:$0xff] %v460
                  %v462 = vld [vmem:[%s390 + $0x230] sm:$0xff]
                  %463 = vst [vmem:[%s391 + $0x118] sm:$0xff] %v462
                  %v464 = vld [vmem:[%s390 + $0x240] sm:$0xff]
                  %465 = vst [vmem:[%s391 + $0x120] sm:$0xff] %v464
                  %v466 = vld [vmem:[%s390 + $0x250] sm:$0xff]
                  %467 = vst [vmem:[%s391 + $0x128] sm:$0xff] %v466
                  %v468 = vld [vmem:[%s390 + $0x260] sm:$0xff]
                  %469 = vst [vmem:[%s391 + $0x130] sm:$0xff] %v468
                  %v470 = vld [vmem:[%s390 + $0x270] sm:$0xff]
                  %471 = vst [vmem:[%s391 + $0x138] sm:$0xff] %v470
                  %v472 = vld [vmem:[%s390 + $0x280] sm:$0xff]
                  %473 = vst [vmem:[%s391 + $0x140] sm:$0xff] %v472
                  %v474 = vld [vmem:[%s390 + $0x290] sm:$0xff]
                  %475 = vst [vmem:[%s391 + $0x148] sm:$0xff] %v474
                  %v476 = vld [vmem:[%s390 + $0x2a0] sm:$0xff]
                  %477 = vst [vmem:[%s391 + $0x150] sm:$0xff] %v476
                  %v478 = vld [vmem:[%s390 + $0x2b0] sm:$0xff]
                  %479 = vst [vmem:[%s391 + $0x158] sm:$0xff] %v478
                  %v480 = vld [vmem:[%s390 + $0x2c0] sm:$0xff]
                  %481 = vst [vmem:[%s391 + $0x160] sm:$0xff] %v480
                  %v482 = vld [vmem:[%s390 + $0x2d0] sm:$0xff]
                  %483 = vst [vmem:[%s391 + $0x168] sm:$0xff] %v482
                  %v484 = vld [vmem:[%s390 + $0x2e0] sm:$0xff]
                  %485 = vst [vmem:[%s391 + $0x170] sm:$0xff] %v484
                  %v486 = vld [vmem:[%s390 + $0x2f0] sm:$0xff]
                  %487 = vst [vmem:[%s391 + $0x178] sm:$0xff] %v486
                  %v488 = vld [vmem:[%s390 + $0x300] sm:$0xff]
                  %489 = vst [vmem:[%s391 + $0x180] sm:$0xff] %v488
                  %v490 = vld [vmem:[%s390 + $0x310] sm:$0xff]
                  %491 = vst [vmem:[%s391 + $0x188] sm:$0xff] %v490
                  %v492 = vld [vmem:[%s390 + $0x320] sm:$0xff]
                  %493 = vst [vmem:[%s391 + $0x190] sm:$0xff] %v492
                  %v494 = vld [vmem:[%s390 + $0x330] sm:$0xff]
                  %495 = vst [vmem:[%s391 + $0x198] sm:$0xff] %v494
                  %v496 = vld [vmem:[%s390 + $0x340] sm:$0xff]
                  %497 = vst [vmem:[%s391 + $0x1a0] sm:$0xff] %v496
                  %v498 = vld [vmem:[%s390 + $0x350] sm:$0xff]
                  %499 = vst [vmem:[%s391 + $0x1a8] sm:$0xff] %v498
                  %v500 = vld [vmem:[%s390 + $0x360] sm:$0xff]
                  %501 = vst [vmem:[%s391 + $0x1b0] sm:$0xff] %v500
                  %v502 = vld [vmem:[%s390 + $0x370] sm:$0xff]
                  %503 = vst [vmem:[%s391 + $0x1b8] sm:$0xff] %v502
                  %v504 = vld [vmem:[%s390 + $0x380] sm:$0xff]
                  %505 = vst [vmem:[%s391 + $0x1c0] sm:$0xff] %v504
                  %v506 = vld [vmem:[%s390 + $0x390] sm:$0xff]
                  %507 = vst [vmem:[%s391 + $0x1c8] sm:$0xff] %v506
                  %v508 = vld [vmem:[%s390 + $0x3a0] sm:$0xff]
                  %509 = vst [vmem:[%s391 + $0x1d0] sm:$0xff] %v508
                  %v510 = vld [vmem:[%s390 + $0x3b0] sm:$0xff]
                  %511 = vst [vmem:[%s391 + $0x1d8] sm:$0xff] %v510
                  %v512 = vld [vmem:[%s390 + $0x3c0] sm:$0xff]
                  %513 = vst [vmem:[%s391 + $0x1e0] sm:$0xff] %v512
                  %v514 = vld [vmem:[%s390 + $0x3d0] sm:$0xff]
                  %515 = vst [vmem:[%s391 + $0x1e8] sm:$0xff] %v514
                  %v516 = vld [vmem:[%s390 + $0x3e0] sm:$0xff]
                  %517 = vst [vmem:[%s391 + $0x1f0] sm:$0xff] %v516
                  %v518 = vld [vmem:[%s390 + $0x3f0] sm:$0xff]
                  %519 = vst [vmem:[%s391 + $0x1f8] sm:$0xff] %v518
                $region72: #{net_forward.3} parent=66 // loop_footer
                  %s389 = sadd.s32 1, %s385
                $region73: #{net_forward.3} parent=66 // loop_footer_branch
                  %384 = sbr.rel target = $region69
                $region74: #{net_forward.3} parent=66 // loop_exit
                  _
              $region67: #{net_forward.3} parent=51 // pred_fallthru
                _
              // Predicated region
              $region75: #{net_forward.3} parent=51 // pred_check
                _
              $region76: #{net_forward.3} parent=51 // pred_check_branch
                %521 = sbr.rel target = $region78
              $region77: #{net_forward.3} parent=51 // pred_region
                _
              $region78: #{net_forward.3} parent=51 // pred_fallthru
                _
            $region52: #{net_forward.3} parent=47 // pred_fallthru
              _
            // Predicated region
            $region53: #{net_forward.3} parent=47 // pred_check
              _
            $region54: #{net_forward.3} parent=47 // pred_check_branch
              %243 = sbr.rel target = $region56
            $region55: #{net_forward.3} parent=47 // pred_region
              %s245 = ssub.s32 256, 1
              loop: start=0, step=1, limit=1
              $region57: #{net_forward.3} parent=55 // loop_pre_header
                _
              $region58: #{net_forward.3} parent=55 // loop_header
                %s247 = sphi 0, %s251
                %p248 = scmp.ge.s32.totalorder %s247, 1
                %s252 = sphi %s237, %s237
                %s253 = sphi %s234, %s234
              $region59: #{net_forward.3} parent=55 // loop_header_branch
                %250 = sbr.rel (%p248) target = $region63
              $region60: #{net_forward.3} parent=55 // loop_body
                %v254 = vld [vmem:[%s252] sm:%s245]
                %255 = vst [vmem:[%s253] sm:%s245] %v254
                %v256 = vld [vmem:[%s252 + $0x10] sm:%s245]
                %257 = vst [vmem:[%s253 + $0x8] sm:%s245] %v256
                %v258 = vld [vmem:[%s252 + $0x20] sm:%s245]
                %259 = vst [vmem:[%s253 + $0x10] sm:%s245] %v258
                %v260 = vld [vmem:[%s252 + $0x30] sm:%s245]
                %261 = vst [vmem:[%s253 + $0x18] sm:%s245] %v260
                %v262 = vld [vmem:[%s252 + $0x40] sm:%s245]
                %263 = vst [vmem:[%s253 + $0x20] sm:%s245] %v262
                %v264 = vld [vmem:[%s252 + $0x50] sm:%s245]
                %265 = vst [vmem:[%s253 + $0x28] sm:%s245] %v264
                %v266 = vld [vmem:[%s252 + $0x60] sm:%s245]
                %267 = vst [vmem:[%s253 + $0x30] sm:%s245] %v266
                %v268 = vld [vmem:[%s252 + $0x70] sm:%s245]
                %269 = vst [vmem:[%s253 + $0x38] sm:%s245] %v268
                %v270 = vld [vmem:[%s252 + $0x80] sm:%s245]
                %271 = vst [vmem:[%s253 + $0x40] sm:%s245] %v270
                %v272 = vld [vmem:[%s252 + $0x90] sm:%s245]
                %273 = vst [vmem:[%s253 + $0x48] sm:%s245] %v272
                %v274 = vld [vmem:[%s252 + $0xa0] sm:%s245]
                %275 = vst [vmem:[%s253 + $0x50] sm:%s245] %v274
                %v276 = vld [vmem:[%s252 + $0xb0] sm:%s245]
                %277 = vst [vmem:[%s253 + $0x58] sm:%s245] %v276
                %v278 = vld [vmem:[%s252 + $0xc0] sm:%s245]
                %279 = vst [vmem:[%s253 + $0x60] sm:%s245] %v278
                %v280 = vld [vmem:[%s252 + $0xd0] sm:%s245]
                %281 = vst [vmem:[%s253 + $0x68] sm:%s245] %v280
                %v282 = vld [vmem:[%s252 + $0xe0] sm:%s245]
                %283 = vst [vmem:[%s253 + $0x70] sm:%s245] %v282
                %v284 = vld [vmem:[%s252 + $0xf0] sm:%s245]
                %285 = vst [vmem:[%s253 + $0x78] sm:%s245] %v284
                %v286 = vld [vmem:[%s252 + $0x100] sm:%s245]
                %287 = vst [vmem:[%s253 + $0x80] sm:%s245] %v286
                %v288 = vld [vmem:[%s252 + $0x110] sm:%s245]
                %289 = vst [vmem:[%s253 + $0x88] sm:%s245] %v288
                %v290 = vld [vmem:[%s252 + $0x120] sm:%s245]
                %291 = vst [vmem:[%s253 + $0x90] sm:%s245] %v290
                %v292 = vld [vmem:[%s252 + $0x130] sm:%s245]
                %293 = vst [vmem:[%s253 + $0x98] sm:%s245] %v292
                %v294 = vld [vmem:[%s252 + $0x140] sm:%s245]
                %295 = vst [vmem:[%s253 + $0xa0] sm:%s245] %v294
                %v296 = vld [vmem:[%s252 + $0x150] sm:%s245]
                %297 = vst [vmem:[%s253 + $0xa8] sm:%s245] %v296
                %v298 = vld [vmem:[%s252 + $0x160] sm:%s245]
                %299 = vst [vmem:[%s253 + $0xb0] sm:%s245] %v298
                %v300 = vld [vmem:[%s252 + $0x170] sm:%s245]
                %301 = vst [vmem:[%s253 + $0xb8] sm:%s245] %v300
                %v302 = vld [vmem:[%s252 + $0x180] sm:%s245]
                %303 = vst [vmem:[%s253 + $0xc0] sm:%s245] %v302
                %v304 = vld [vmem:[%s252 + $0x190] sm:%s245]
                %305 = vst [vmem:[%s253 + $0xc8] sm:%s245] %v304
                %v306 = vld [vmem:[%s252 + $0x1a0] sm:%s245]
                %307 = vst [vmem:[%s253 + $0xd0] sm:%s245] %v306
                %v308 = vld [vmem:[%s252 + $0x1b0] sm:%s245]
                %309 = vst [vmem:[%s253 + $0xd8] sm:%s245] %v308
                %v310 = vld [vmem:[%s252 + $0x1c0] sm:%s245]
                %311 = vst [vmem:[%s253 + $0xe0] sm:%s245] %v310
                %v312 = vld [vmem:[%s252 + $0x1d0] sm:%s245]
                %313 = vst [vmem:[%s253 + $0xe8] sm:%s245] %v312
                %v314 = vld [vmem:[%s252 + $0x1e0] sm:%s245]
                %315 = vst [vmem:[%s253 + $0xf0] sm:%s245] %v314
                %v316 = vld [vmem:[%s252 + $0x1f0] sm:%s245]
                %317 = vst [vmem:[%s253 + $0xf8] sm:%s245] %v316
                %v318 = vld [vmem:[%s252 + $0x200] sm:%s245]
                %319 = vst [vmem:[%s253 + $0x100] sm:%s245] %v318
                %v320 = vld [vmem:[%s252 + $0x210] sm:%s245]
                %321 = vst [vmem:[%s253 + $0x108] sm:%s245] %v320
                %v322 = vld [vmem:[%s252 + $0x220] sm:%s245]
                %323 = vst [vmem:[%s253 + $0x110] sm:%s245] %v322
                %v324 = vld [vmem:[%s252 + $0x230] sm:%s245]
                %325 = vst [vmem:[%s253 + $0x118] sm:%s245] %v324
                %v326 = vld [vmem:[%s252 + $0x240] sm:%s245]
                %327 = vst [vmem:[%s253 + $0x120] sm:%s245] %v326
                %v328 = vld [vmem:[%s252 + $0x250] sm:%s245]
                %329 = vst [vmem:[%s253 + $0x128] sm:%s245] %v328
                %v330 = vld [vmem:[%s252 + $0x260] sm:%s245]
                %331 = vst [vmem:[%s253 + $0x130] sm:%s245] %v330
                %v332 = vld [vmem:[%s252 + $0x270] sm:%s245]
                %333 = vst [vmem:[%s253 + $0x138] sm:%s245] %v332
                %v334 = vld [vmem:[%s252 + $0x280] sm:%s245]
                %335 = vst [vmem:[%s253 + $0x140] sm:%s245] %v334
                %v336 = vld [vmem:[%s252 + $0x290] sm:%s245]
                %337 = vst [vmem:[%s253 + $0x148] sm:%s245] %v336
                %v338 = vld [vmem:[%s252 + $0x2a0] sm:%s245]
                %339 = vst [vmem:[%s253 + $0x150] sm:%s245] %v338
                %v340 = vld [vmem:[%s252 + $0x2b0] sm:%s245]
                %341 = vst [vmem:[%s253 + $0x158] sm:%s245] %v340
                %v342 = vld [vmem:[%s252 + $0x2c0] sm:%s245]
                %343 = vst [vmem:[%s253 + $0x160] sm:%s245] %v342
                %v344 = vld [vmem:[%s252 + $0x2d0] sm:%s245]
                %345 = vst [vmem:[%s253 + $0x168] sm:%s245] %v344
                %v346 = vld [vmem:[%s252 + $0x2e0] sm:%s245]
                %347 = vst [vmem:[%s253 + $0x170] sm:%s245] %v346
                %v348 = vld [vmem:[%s252 + $0x2f0] sm:%s245]
                %349 = vst [vmem:[%s253 + $0x178] sm:%s245] %v348
                %v350 = vld [vmem:[%s252 + $0x300] sm:%s245]
                %351 = vst [vmem:[%s253 + $0x180] sm:%s245] %v350
                %v352 = vld [vmem:[%s252 + $0x310] sm:%s245]
                %353 = vst [vmem:[%s253 + $0x188] sm:%s245] %v352
                %v354 = vld [vmem:[%s252 + $0x320] sm:%s245]
                %355 = vst [vmem:[%s253 + $0x190] sm:%s245] %v354
                %v356 = vld [vmem:[%s252 + $0x330] sm:%s245]
                %357 = vst [vmem:[%s253 + $0x198] sm:%s245] %v356
                %v358 = vld [vmem:[%s252 + $0x340] sm:%s245]
                %359 = vst [vmem:[%s253 + $0x1a0] sm:%s245] %v358
                %v360 = vld [vmem:[%s252 + $0x350] sm:%s245]
                %361 = vst [vmem:[%s253 + $0x1a8] sm:%s245] %v360
                %v362 = vld [vmem:[%s252 + $0x360] sm:%s245]
                %363 = vst [vmem:[%s253 + $0x1b0] sm:%s245] %v362
                %v364 = vld [vmem:[%s252 + $0x370] sm:%s245]
                %365 = vst [vmem:[%s253 + $0x1b8] sm:%s245] %v364
                %v366 = vld [vmem:[%s252 + $0x380] sm:%s245]
                %367 = vst [vmem:[%s253 + $0x1c0] sm:%s245] %v366
                %v368 = vld [vmem:[%s252 + $0x390] sm:%s245]
                %369 = vst [vmem:[%s253 + $0x1c8] sm:%s245] %v368
                %v370 = vld [vmem:[%s252 + $0x3a0] sm:%s245]
                %371 = vst [vmem:[%s253 + $0x1d0] sm:%s245] %v370
                %v372 = vld [vmem:[%s252 + $0x3b0] sm:%s245]
                %373 = vst [vmem:[%s253 + $0x1d8] sm:%s245] %v372
                %v374 = vld [vmem:[%s252 + $0x3c0] sm:%s245]
                %375 = vst [vmem:[%s253 + $0x1e0] sm:%s245] %v374
                %v376 = vld [vmem:[%s252 + $0x3d0] sm:%s245]
                %377 = vst [vmem:[%s253 + $0x1e8] sm:%s245] %v376
                %v378 = vld [vmem:[%s252 + $0x3e0] sm:%s245]
                %379 = vst [vmem:[%s253 + $0x1f0] sm:%s245] %v378
                %v380 = vld [vmem:[%s252 + $0x3f0] sm:%s245]
                %381 = vst [vmem:[%s253 + $0x1f8] sm:%s245] %v380
              $region61: #{net_forward.3} parent=55 // loop_footer
                %s251 = sadd.s32 1, %s247
              $region62: #{net_forward.3} parent=55 // loop_footer_branch
                %246 = sbr.rel target = $region58
              $region63: #{net_forward.3} parent=55 // loop_exit
                _
            $region56: #{net_forward.3} parent=47 // pred_fallthru
              _
          $region48: #{net_forward.3} parent=43 // pred_fallthru
            _
          %522 = vnop
        $region44: #{net_forward.3} parent=39 // pred_fallthru
          _
      $region40: #{net_forward.3} parent=5 // pred_fallthru
        _
      %p523 = scmp.le.s32.totalorder 1, %s13
      %p524 = scmp.lt.s32.totalorder %s13, 3
      %p525 = pnand %p523, %p524
      %p526 = pneg %p525
      // Predicated region
      $region79: #{net_forward.3} parent=5 // pred_check
        _
      $region80: #{net_forward.3} parent=5 // pred_check_branch
        %528 = sbr.rel (%p525) target = $region82
      $region81: #{net_forward.3} parent=5 // pred_region
        %s529 = ssub.s32 %s13, 1
        %s530 = sand.u32 %s26, 1
        %s531 = sand.u32 %s26, 1
        %s532 = smul.addr %s531, 512
        %s533 = scalar_lea.vmem [#allocation2], %s532
        // Predicated region
        $region83: #{net_forward.3} parent=81 // pred_check
          %p534 = pneg %p39
        $region84: #{net_forward.3} parent=81 // pred_check_branch
          %536 = sbr.rel (%p534) target = $region86
        $region85: #{net_forward.3} parent=81 // pred_region
          _
        $region86: #{net_forward.3} parent=81 // pred_fallthru
          _
        %s537 = sand.u32 %s26, 1
        %s538 = sand.u32 %s26, 1
        %s539 = smul.addr %s538, 512
        %s540 = scalar_lea.vmem [#allocation2], %s539
        %p541 = pneg %p39
        %p542 = pneg %p36
        %p543 = pneg %p60
        %p544 = pneg %p57
        %p545 = pneg %p81
        %p546 = pneg %p78
        %p547 = pneg %p102
        %p548 = pneg %p99
        %p549 = pneg %p123
        %p550 = pneg %p120
        %p551 = pneg %p144
        %p552 = pneg %p141
        %p553 = pneg %p165
        %p554 = pneg %p162
        %p555 = pneg %p191
        %p556 = pneg %p188
        %p557 = scmp.lt.s32.totalorder %s18, 1
        %s558 = scalar_select %p557, %s18, 1
        %s559 = smul.addr %s558, 8
        %s560 = scalar_lea.vmem %s7, %s559
        %p561 = scmp.lt.s32.totalorder %s18, 1
        %s562 = scalar_select %p561, %s18, 1
        %s563 = smul.addr %s562, 8
        %s564 = scalar_lea.vmem %s7, %s563
        %v565 = vld [vmem:[%s533] sm:$0xff]
        %v566 = vld [vmem:[%s533 + $0x8] sm:$0xff]
        %v567 = vld [vmem:[%s533 + $0x10] sm:$0xff]
        %v568 = vld [vmem:[%s533 + $0x18] sm:$0xff]
        %v569 = vld [vmem:[%s533 + $0x20] sm:$0xff]
        %v570 = vld [vmem:[%s533 + $0x28] sm:$0xff]
        %v571 = vld [vmem:[%s533 + $0x30] sm:$0xff]
        %v572 = vld [vmem:[%s533 + $0x38] sm:$0xff]
        %v573 = vld [vmem:[%s533 + $0x40] sm:$0xff]
        %v574 = vld [vmem:[%s533 + $0x48] sm:$0xff]
        %v575 = vld [vmem:[%s533 + $0x50] sm:$0xff]
        %v576 = vld [vmem:[%s533 + $0x58] sm:$0xff]
        %v577 = vld [vmem:[%s533 + $0x60] sm:$0xff]
        %v578 = vld [vmem:[%s533 + $0x68] sm:$0xff]
        %v579 = vld [vmem:[%s533 + $0x70] sm:$0xff]
        %v580 = vld [vmem:[%s533 + $0x78] sm:$0xff]
        %v581 = vld [vmem:[%s1] sm:$0xf]
        %v582 = vld [vmem:[%s1 + $0x4] sm:$0xf]
        %v583 = vld [vmem:[%s1 + $0x8] sm:$0xf]
        %v584 = vld [vmem:[%s1 + $0xc] sm:$0xf]
        %v585 = vld [vmem:[%s1 + $0x10] sm:$0xf]
        %v586 = vld [vmem:[%s1 + $0x14] sm:$0xf]
        %v587 = vld [vmem:[%s1 + $0x18] sm:$0xf]
        %v588 = vld [vmem:[%s1 + $0x1c] sm:$0xf]
        %v589 = vld [vmem:[%s1 + $0x20] sm:$0xf]
        %v590 = vld [vmem:[%s1 + $0x24] sm:$0xf]
        %v591 = vld [vmem:[%s1 + $0x28] sm:$0xf]
        %v592 = vld [vmem:[%s1 + $0x2c] sm:$0xf]
        %v593 = vld [vmem:[%s1 + $0x30] sm:$0xf]
        %v594 = vld [vmem:[%s1 + $0x34] sm:$0xf]
        %v595 = vld [vmem:[%s1 + $0x38] sm:$0xf]
        %v596 = vld [vmem:[%s1 + $0x3c] sm:$0xf]
        %v597 = vld [vmem:[%s1 + $0x40] sm:$0xf]
        %v598 = vld [vmem:[%s1 + $0x44] sm:$0xf]
        %v599 = vld [vmem:[%s1 + $0x48] sm:$0xf]
        %v600 = vld [vmem:[%s1 + $0x4c] sm:$0xf]
        %v601 = vld [vmem:[%s1 + $0x50] sm:$0xf]
        %v602 = vld [vmem:[%s1 + $0x54] sm:$0xf]
        %v603 = vld [vmem:[%s1 + $0x58] sm:$0xf]
        %v604 = vld [vmem:[%s1 + $0x5c] sm:$0xf]
        %v605 = vld [vmem:[%s1 + $0x60] sm:$0xf]
        %v606 = vld [vmem:[%s1 + $0x64] sm:$0xf]
        %v607 = vld [vmem:[%s1 + $0x68] sm:$0xf]
        %v608 = vld [vmem:[%s1 + $0x6c] sm:$0xf]
        %v609 = vld [vmem:[%s1 + $0x70] sm:$0xf]
        %v610 = vld [vmem:[%s1 + $0x74] sm:$0xf]
        %v611 = vld [vmem:[%s1 + $0x78] sm:$0xf]
        %v612 = vld [vmem:[%s1 + $0x7c] sm:$0xf]
        %v629 = vunpack.c.l.b16 %v565
        %v630 = vunpack.c.h.b16 %v565
        %v631 = vunpack.c.l.b16 %v566
        %v632 = vunpack.c.h.b16 %v566
        %v633 = vunpack.c.l.b16 %v567
        %v634 = vunpack.c.h.b16 %v567
        %v635 = vunpack.c.l.b16 %v568
        %v636 = vunpack.c.h.b16 %v568
        %v637 = vunpack.c.l.b16 %v569
        %v638 = vunpack.c.h.b16 %v569
        %v639 = vunpack.c.l.b16 %v570
        %v640 = vunpack.c.h.b16 %v570
        %v641 = vunpack.c.l.b16 %v571
        %v642 = vunpack.c.h.b16 %v571
        %v643 = vunpack.c.l.b16 %v572
        %v644 = vunpack.c.h.b16 %v572
        %v645 = vunpack.c.l.b16 %v573
        %v646 = vunpack.c.h.b16 %v573
        %v647 = vunpack.c.l.b16 %v574
        %v648 = vunpack.c.h.b16 %v574
        %v649 = vunpack.c.l.b16 %v575
        %v650 = vunpack.c.h.b16 %v575
        %v651 = vunpack.c.l.b16 %v576
        %v652 = vunpack.c.h.b16 %v576
        %v653 = vunpack.c.l.b16 %v577
        %v654 = vunpack.c.h.b16 %v577
        %v655 = vunpack.c.l.b16 %v578
        %v656 = vunpack.c.h.b16 %v578
        %v657 = vunpack.c.l.b16 %v579
        %v658 = vunpack.c.h.b16 %v579
        %v659 = vunpack.c.l.b16 %v580
        %v660 = vunpack.c.h.b16 %v580
        %v661 = vpack.c.b16 %v631, %v629
        %v662 = vpack.c.b16 %v632, %v630
        %v663 = vpack.c.b16 %v635, %v633
        %v664 = vpack.c.b16 %v636, %v634
        %v665 = vpack.c.b16 %v639, %v637
        %v666 = vpack.c.b16 %v640, %v638
        %v667 = vpack.c.b16 %v643, %v641
        %v668 = vpack.c.b16 %v644, %v642
        %v669 = vpack.c.b16 %v647, %v645
        %v670 = vpack.c.b16 %v648, %v646
        %v671 = vpack.c.b16 %v651, %v649
        %v672 = vpack.c.b16 %v652, %v650
        %v673 = vpack.c.b16 %v655, %v653
        %v674 = vpack.c.b16 %v656, %v654
        %v675 = vpack.c.b16 %v659, %v657
        %v676 = vpack.c.b16 %v660, %v658
        %v725 = vunpack.c.l.b16 %v581
        %v726 = vunpack.c.l.b16 %v582
        %v727 = vunpack.c.l.b16 %v583
        %v728 = vunpack.c.l.b16 %v584
        %v729 = vunpack.c.l.b16 %v585
        %v730 = vunpack.c.l.b16 %v586
        %v731 = vunpack.c.l.b16 %v587
        %v732 = vunpack.c.l.b16 %v588
        %v733 = vunpack.c.l.b16 %v589
        %v734 = vunpack.c.l.b16 %v590
        %v735 = vunpack.c.l.b16 %v591
        %v736 = vunpack.c.l.b16 %v592
        %v737 = vunpack.c.l.b16 %v593
        %v738 = vunpack.c.l.b16 %v594
        %v739 = vunpack.c.l.b16 %v595
        %v740 = vunpack.c.l.b16 %v596
        %v741 = vunpack.c.l.b16 %v597
        %v742 = vunpack.c.l.b16 %v598
        %v743 = vunpack.c.l.b16 %v599
        %v744 = vunpack.c.l.b16 %v600
        %v745 = vunpack.c.l.b16 %v601
        %v746 = vunpack.c.l.b16 %v602
        %v747 = vunpack.c.l.b16 %v603
        %v748 = vunpack.c.l.b16 %v604
        %v749 = vunpack.c.l.b16 %v605
        %v750 = vunpack.c.l.b16 %v606
        %v751 = vunpack.c.l.b16 %v607
        %v752 = vunpack.c.l.b16 %v608
        %v753 = vunpack.c.l.b16 %v609
        %v754 = vunpack.c.l.b16 %v610
        %v755 = vunpack.c.l.b16 %v611
        %v756 = vunpack.c.l.b16 %v612
        %v757 = vpack.c.b16 %v726, %v725
        %v758 = vpack.c.b16 %v728, %v727
        %v759 = vpack.c.b16 %v730, %v729
        %v760 = vpack.c.b16 %v732, %v731
        %v761 = vpack.c.b16 %v734, %v733
        %v762 = vpack.c.b16 %v736, %v735
        %v763 = vpack.c.b16 %v738, %v737
        %v764 = vpack.c.b16 %v740, %v739
        %v765 = vpack.c.b16 %v742, %v741
        %v766 = vpack.c.b16 %v744, %v743
        %v767 = vpack.c.b16 %v746, %v745
        %v768 = vpack.c.b16 %v748, %v747
        %v769 = vpack.c.b16 %v750, %v749
        %v770 = vpack.c.b16 %v752, %v751
        %v771 = vpack.c.b16 %v754, %v753
        %v772 = vpack.c.b16 %v756, %v755
        %789 = vmatpush.bf16.msra.mxu0 %v764
        %790 = vmatpush.bf16.msra.mxu0 %v763
        %791 = vmatpush.bf16.msra.mxu0 %v762
        %792 = vmatpush.bf16.msra.mxu0 %v761
        %793 = vmatpush.bf16.msra.mxu0 %v760
        %794 = vmatpush.bf16.msra.mxu0 %v759
        %795 = vmatpush.bf16.msra.mxu0 %v758
        %796 = vmatpush.bf16.msra.mxu0 %v757
        %797 = vmatmul.bf16.gmra.mxu0 %v661
        %v798 = vpop.f32.mrf.mxu0
        %v799 = vadd.f32 0.0, %v798
        %v800 = vpop.f32.mrf.mxu0
        %v801 = vadd.f32 0.0, %v800
        %802 = vmatmul.bf16.gmra.mxu0 %v663
        %v803 = vpop.f32.mrf.mxu0
        %v804 = vadd.f32 0.0, %v803
        %v805 = vpop.f32.mrf.mxu0
        %v806 = vadd.f32 0.0, %v805
        %807 = vmatmul.bf16.gmra.mxu0 %v665
        %v808 = vpop.f32.mrf.mxu0
        %v809 = vadd.f32 0.0, %v808
        %v810 = vpop.f32.mrf.mxu0
        %v811 = vadd.f32 0.0, %v810
        %812 = vmatmul.bf16.gmra.mxu0 %v667
        %v813 = vpop.f32.mrf.mxu0
        %v814 = vadd.f32 0.0, %v813
        %v815 = vpop.f32.mrf.mxu0
        %v816 = vadd.f32 0.0, %v815
        %817 = vmatmul.bf16.gmra.mxu0 %v669
        %v818 = vpop.f32.mrf.mxu0
        %v819 = vadd.f32 0.0, %v818
        %v820 = vpop.f32.mrf.mxu0
        %v821 = vadd.f32 0.0, %v820
        %822 = vmatmul.bf16.gmra.mxu0 %v671
        %v823 = vpop.f32.mrf.mxu0
        %v824 = vadd.f32 0.0, %v823
        %v825 = vpop.f32.mrf.mxu0
        %v826 = vadd.f32 0.0, %v825
        %827 = vmatmul.bf16.gmra.mxu0 %v673
        %v828 = vpop.f32.mrf.mxu0
        %v829 = vadd.f32 0.0, %v828
        %v830 = vpop.f32.mrf.mxu0
        %v831 = vadd.f32 0.0, %v830
        %832 = vmatmul.bf16.gmra.mxu0 %v675
        %v833 = vpop.f32.mrf.mxu0
        %v834 = vadd.f32 0.0, %v833
        %v835 = vpop.f32.mrf.mxu0
        %v836 = vadd.f32 0.0, %v835
        %837 = vdwg.mxu0
        %838 = vmatpush.bf16.msra.mxu0 %v772
        %839 = vmatpush.bf16.msra.mxu0 %v771
        %840 = vmatpush.bf16.msra.mxu0 %v770
        %841 = vmatpush.bf16.msra.mxu0 %v769
        %842 = vmatpush.bf16.msra.mxu0 %v768
        %843 = vmatpush.bf16.msra.mxu0 %v767
        %844 = vmatpush.bf16.msra.mxu0 %v766
        %845 = vmatpush.bf16.msra.mxu0 %v765
        %846 = vmatmul.bf16.gmra.mxu0 %v662
        %v847 = vpop.f32.mrf.mxu0
        %v848 = vadd.f32 %v799, %v847
        %v849 = vpop.f32.mrf.mxu0
        %v850 = vadd.f32 %v801, %v849
        %851 = vmatmul.bf16.gmra.mxu0 %v664
        %v852 = vpop.f32.mrf.mxu0
        %v853 = vadd.f32 %v804, %v852
        %v854 = vpop.f32.mrf.mxu0
        %v855 = vadd.f32 %v806, %v854
        %856 = vmatmul.bf16.gmra.mxu0 %v666
        %v857 = vpop.f32.mrf.mxu0
        %v858 = vadd.f32 %v809, %v857
        %v859 = vpop.f32.mrf.mxu0
        %v860 = vadd.f32 %v811, %v859
        %861 = vmatmul.bf16.gmra.mxu0 %v668
        %v862 = vpop.f32.mrf.mxu0
        %v863 = vadd.f32 %v814, %v862
        %v864 = vpop.f32.mrf.mxu0
        %v865 = vadd.f32 %v816, %v864
        %866 = vmatmul.bf16.gmra.mxu0 %v670
        %v867 = vpop.f32.mrf.mxu0
        %v868 = vadd.f32 %v819, %v867
        %v869 = vpop.f32.mrf.mxu0
        %v870 = vadd.f32 %v821, %v869
        %871 = vmatmul.bf16.gmra.mxu0 %v672
        %v872 = vpop.f32.mrf.mxu0
        %v873 = vadd.f32 %v824, %v872
        %v874 = vpop.f32.mrf.mxu0
        %v875 = vadd.f32 %v826, %v874
        %876 = vmatmul.bf16.gmra.mxu0 %v674
        %v877 = vpop.f32.mrf.mxu0
        %v878 = vadd.f32 %v829, %v877
        %v879 = vpop.f32.mrf.mxu0
        %v880 = vadd.f32 %v831, %v879
        %881 = vmatmul.bf16.gmra.mxu0 %v676
        %v882 = vpop.f32.mrf.mxu0
        %v883 = vadd.f32 %v834, %v882
        %v884 = vpop.f32.mrf.mxu0
        %v885 = vadd.f32 %v836, %v884
        %886 = vdwg.mxu0
        %s887 = scalar_lea.vmem %s533, 128 [#allocation2]
        %v888 = vld [vmem:[%s887] sm:$0xff]
        %v889 = vld [vmem:[%s887 + $0x8] sm:$0xff]
        %v890 = vld [vmem:[%s887 + $0x10] sm:$0xff]
        %v891 = vld [vmem:[%s887 + $0x18] sm:$0xff]
        %v892 = vld [vmem:[%s887 + $0x20] sm:$0xff]
        %v893 = vld [vmem:[%s887 + $0x28] sm:$0xff]
        %v894 = vld [vmem:[%s887 + $0x30] sm:$0xff]
        %v895 = vld [vmem:[%s887 + $0x38] sm:$0xff]
        %v896 = vld [vmem:[%s887 + $0x40] sm:$0xff]
        %v897 = vld [vmem:[%s887 + $0x48] sm:$0xff]
        %v898 = vld [vmem:[%s887 + $0x50] sm:$0xff]
        %v899 = vld [vmem:[%s887 + $0x58] sm:$0xff]
        %v900 = vld [vmem:[%s887 + $0x60] sm:$0xff]
        %v901 = vld [vmem:[%s887 + $0x68] sm:$0xff]
        %v902 = vld [vmem:[%s887 + $0x70] sm:$0xff]
        %v903 = vld [vmem:[%s887 + $0x78] sm:$0xff]
        %v920 = vunpack.c.l.b16 %v888
        %v921 = vunpack.c.h.b16 %v888
        %v922 = vunpack.c.l.b16 %v889
        %v923 = vunpack.c.h.b16 %v889
        %v924 = vunpack.c.l.b16 %v890
        %v925 = vunpack.c.h.b16 %v890
        %v926 = vunpack.c.l.b16 %v891
        %v927 = vunpack.c.h.b16 %v891
        %v928 = vunpack.c.l.b16 %v892
        %v929 = vunpack.c.h.b16 %v892
        %v930 = vunpack.c.l.b16 %v893
        %v931 = vunpack.c.h.b16 %v893
        %v932 = vunpack.c.l.b16 %v894
        %v933 = vunpack.c.h.b16 %v894
        %v934 = vunpack.c.l.b16 %v895
        %v935 = vunpack.c.h.b16 %v895
        %v936 = vunpack.c.l.b16 %v896
        %v937 = vunpack.c.h.b16 %v896
        %v938 = vunpack.c.l.b16 %v897
        %v939 = vunpack.c.h.b16 %v897
        %v940 = vunpack.c.l.b16 %v898
        %v941 = vunpack.c.h.b16 %v898
        %v942 = vunpack.c.l.b16 %v899
        %v943 = vunpack.c.h.b16 %v899
        %v944 = vunpack.c.l.b16 %v900
        %v945 = vunpack.c.h.b16 %v900
        %v946 = vunpack.c.l.b16 %v901
        %v947 = vunpack.c.h.b16 %v901
        %v948 = vunpack.c.l.b16 %v902
        %v949 = vunpack.c.h.b16 %v902
        %v950 = vunpack.c.l.b16 %v903
        %v951 = vunpack.c.h.b16 %v903
        %v952 = vpack.c.b16 %v922, %v920
        %v953 = vpack.c.b16 %v923, %v921
        %v954 = vpack.c.b16 %v926, %v924
        %v955 = vpack.c.b16 %v927, %v925
        %v956 = vpack.c.b16 %v930, %v928
        %v957 = vpack.c.b16 %v931, %v929
        %v958 = vpack.c.b16 %v934, %v932
        %v959 = vpack.c.b16 %v935, %v933
        %v960 = vpack.c.b16 %v938, %v936
        %v961 = vpack.c.b16 %v939, %v937
        %v962 = vpack.c.b16 %v942, %v940
        %v963 = vpack.c.b16 %v943, %v941
        %v964 = vpack.c.b16 %v946, %v944
        %v965 = vpack.c.b16 %v947, %v945
        %v966 = vpack.c.b16 %v950, %v948
        %v967 = vpack.c.b16 %v951, %v949
        %984 = vmatpush.bf16.msra.mxu0 %v764
        %985 = vmatpush.bf16.msra.mxu0 %v763
        %986 = vmatpush.bf16.msra.mxu0 %v762
        %987 = vmatpush.bf16.msra.mxu0 %v761
        %988 = vmatpush.bf16.msra.mxu0 %v760
        %989 = vmatpush.bf16.msra.mxu0 %v759
        %990 = vmatpush.bf16.msra.mxu0 %v758
        %991 = vmatpush.bf16.msra.mxu0 %v757
        %992 = vmatmul.bf16.gmra.mxu0 %v952
        %v993 = vpop.f32.mrf.mxu0
        %v994 = vadd.f32 0.0, %v993
        %v995 = vpop.f32.mrf.mxu0
        %v996 = vadd.f32 0.0, %v995
        %997 = vmatmul.bf16.gmra.mxu0 %v954
        %v998 = vpop.f32.mrf.mxu0
        %v999 = vadd.f32 0.0, %v998
        %v1000 = vpop.f32.mrf.mxu0
        %v1001 = vadd.f32 0.0, %v1000
        %1002 = vmatmul.bf16.gmra.mxu0 %v956
        %v1003 = vpop.f32.mrf.mxu0
        %v1004 = vadd.f32 0.0, %v1003
        %v1005 = vpop.f32.mrf.mxu0
        %v1006 = vadd.f32 0.0, %v1005
        %1007 = vmatmul.bf16.gmra.mxu0 %v958
        %v1008 = vpop.f32.mrf.mxu0
        %v1009 = vadd.f32 0.0, %v1008
        %v1010 = vpop.f32.mrf.mxu0
        %v1011 = vadd.f32 0.0, %v1010
        %1012 = vmatmul.bf16.gmra.mxu0 %v960
        %v1013 = vpop.f32.mrf.mxu0
        %v1014 = vadd.f32 0.0, %v1013
        %v1015 = vpop.f32.mrf.mxu0
        %v1016 = vadd.f32 0.0, %v1015
        %1017 = vmatmul.bf16.gmra.mxu0 %v962
        %v1018 = vpop.f32.mrf.mxu0
        %v1019 = vadd.f32 0.0, %v1018
        %v1020 = vpop.f32.mrf.mxu0
        %v1021 = vadd.f32 0.0, %v1020
        %1022 = vmatmul.bf16.gmra.mxu0 %v964
        %v1023 = vpop.f32.mrf.mxu0
        %v1024 = vadd.f32 0.0, %v1023
        %v1025 = vpop.f32.mrf.mxu0
        %v1026 = vadd.f32 0.0, %v1025
        %1027 = vmatmul.bf16.gmra.mxu0 %v966
        %v1028 = vpop.f32.mrf.mxu0
        %v1029 = vadd.f32 0.0, %v1028
        %v1030 = vpop.f32.mrf.mxu0
        %v1031 = vadd.f32 0.0, %v1030
        %1032 = vdwg.mxu0
        %1033 = vmatpush.bf16.msra.mxu0 %v772
        %1034 = vmatpush.bf16.msra.mxu0 %v771
        %1035 = vmatpush.bf16.msra.mxu0 %v770
        %1036 = vmatpush.bf16.msra.mxu0 %v769
        %1037 = vmatpush.bf16.msra.mxu0 %v768
        %1038 = vmatpush.bf16.msra.mxu0 %v767
        %1039 = vmatpush.bf16.msra.mxu0 %v766
        %1040 = vmatpush.bf16.msra.mxu0 %v765
        %1041 = vmatmul.bf16.gmra.mxu0 %v953
        %v1042 = vpop.f32.mrf.mxu0
        %v1043 = vadd.f32 %v994, %v1042
        %v1044 = vpop.f32.mrf.mxu0
        %v1045 = vadd.f32 %v996, %v1044
        %1046 = vmatmul.bf16.gmra.mxu0 %v955
        %v1047 = vpop.f32.mrf.mxu0
        %v1048 = vadd.f32 %v999, %v1047
        %v1049 = vpop.f32.mrf.mxu0
        %v1050 = vadd.f32 %v1001, %v1049
        %1051 = vmatmul.bf16.gmra.mxu0 %v957
        %v1052 = vpop.f32.mrf.mxu0
        %v1053 = vadd.f32 %v1004, %v1052
        %v1054 = vpop.f32.mrf.mxu0
        %v1055 = vadd.f32 %v1006, %v1054
        %1056 = vmatmul.bf16.gmra.mxu0 %v959
        %v1057 = vpop.f32.mrf.mxu0
        %v1058 = vadd.f32 %v1009, %v1057
        %v1059 = vpop.f32.mrf.mxu0
        %v1060 = vadd.f32 %v1011, %v1059
        %1061 = vmatmul.bf16.gmra.mxu0 %v961
        %v1062 = vpop.f32.mrf.mxu0
        %v1063 = vadd.f32 %v1014, %v1062
        %v1064 = vpop.f32.mrf.mxu0
        %v1065 = vadd.f32 %v1016, %v1064
        %1066 = vmatmul.bf16.gmra.mxu0 %v963
        %v1067 = vpop.f32.mrf.mxu0
        %v1068 = vadd.f32 %v1019, %v1067
        %v1069 = vpop.f32.mrf.mxu0
        %v1070 = vadd.f32 %v1021, %v1069
        %1071 = vmatmul.bf16.gmra.mxu0 %v965
        %v1072 = vpop.f32.mrf.mxu0
        %v1073 = vadd.f32 %v1024, %v1072
        %v1074 = vpop.f32.mrf.mxu0
        %v1075 = vadd.f32 %v1026, %v1074
        %1076 = vmatmul.bf16.gmra.mxu0 %v967
        %v1077 = vpop.f32.mrf.mxu0
        %v1078 = vadd.f32 %v1029, %v1077
        %v1079 = vpop.f32.mrf.mxu0
        %v1080 = vadd.f32 %v1031, %v1079
        %1081 = vdwg.mxu0
        %v1082 = vmax.f32 %v848, %v1043
        %v1083 = vmax.f32 %v850, %v1045
        %v1084 = vmax.f32 %v853, %v1048
        %v1085 = vmax.f32 %v855, %v1050
        %v1086 = vmax.f32 %v858, %v1053
        %v1087 = vmax.f32 %v860, %v1055
        %v1088 = vmax.f32 %v863, %v1058
        %v1089 = vmax.f32 %v865, %v1060
        %v1090 = vmax.f32 %v868, %v1063
        %v1091 = vmax.f32 %v870, %v1065
        %v1092 = vmax.f32 %v873, %v1068
        %v1093 = vmax.f32 %v875, %v1070
        %v1094 = vmax.f32 %v878, %v1073
        %v1095 = vmax.f32 %v880, %v1075
        %v1096 = vmax.f32 %v883, %v1078
        %v1097 = vmax.f32 %v885, %v1080
        %s1098 = scalar_lea.vmem %s533, 256 [#allocation2]
        %v1099 = vld [vmem:[%s1098] sm:$0xff]
        %v1100 = vld [vmem:[%s1098 + $0x8] sm:$0xff]
        %v1101 = vld [vmem:[%s1098 + $0x10] sm:$0xff]
        %v1102 = vld [vmem:[%s1098 + $0x18] sm:$0xff]
        %v1103 = vld [vmem:[%s1098 + $0x20] sm:$0xff]
        %v1104 = vld [vmem:[%s1098 + $0x28] sm:$0xff]
        %v1105 = vld [vmem:[%s1098 + $0x30] sm:$0xff]
        %v1106 = vld [vmem:[%s1098 + $0x38] sm:$0xff]
        %v1107 = vld [vmem:[%s1098 + $0x40] sm:$0xff]
        %v1108 = vld [vmem:[%s1098 + $0x48] sm:$0xff]
        %v1109 = vld [vmem:[%s1098 + $0x50] sm:$0xff]
        %v1110 = vld [vmem:[%s1098 + $0x58] sm:$0xff]
        %v1111 = vld [vmem:[%s1098 + $0x60] sm:$0xff]
        %v1112 = vld [vmem:[%s1098 + $0x68] sm:$0xff]
        %v1113 = vld [vmem:[%s1098 + $0x70] sm:$0xff]
        %v1114 = vld [vmem:[%s1098 + $0x78] sm:$0xff]
        %v1131 = vunpack.c.l.b16 %v1099
        %v1132 = vunpack.c.h.b16 %v1099
        %v1133 = vunpack.c.l.b16 %v1100
        %v1134 = vunpack.c.h.b16 %v1100
        %v1135 = vunpack.c.l.b16 %v1101
        %v1136 = vunpack.c.h.b16 %v1101
        %v1137 = vunpack.c.l.b16 %v1102
        %v1138 = vunpack.c.h.b16 %v1102
        %v1139 = vunpack.c.l.b16 %v1103
        %v1140 = vunpack.c.h.b16 %v1103
        %v1141 = vunpack.c.l.b16 %v1104
        %v1142 = vunpack.c.h.b16 %v1104
        %v1143 = vunpack.c.l.b16 %v1105
        %v1144 = vunpack.c.h.b16 %v1105
        %v1145 = vunpack.c.l.b16 %v1106
        %v1146 = vunpack.c.h.b16 %v1106
        %v1147 = vunpack.c.l.b16 %v1107
        %v1148 = vunpack.c.h.b16 %v1107
        %v1149 = vunpack.c.l.b16 %v1108
        %v1150 = vunpack.c.h.b16 %v1108
        %v1151 = vunpack.c.l.b16 %v1109
        %v1152 = vunpack.c.h.b16 %v1109
        %v1153 = vunpack.c.l.b16 %v1110
        %v1154 = vunpack.c.h.b16 %v1110
        %v1155 = vunpack.c.l.b16 %v1111
        %v1156 = vunpack.c.h.b16 %v1111
        %v1157 = vunpack.c.l.b16 %v1112
        %v1158 = vunpack.c.h.b16 %v1112
        %v1159 = vunpack.c.l.b16 %v1113
        %v1160 = vunpack.c.h.b16 %v1113
        %v1161 = vunpack.c.l.b16 %v1114
        %v1162 = vunpack.c.h.b16 %v1114
        %v1163 = vpack.c.b16 %v1133, %v1131
        %v1164 = vpack.c.b16 %v1134, %v1132
        %v1165 = vpack.c.b16 %v1137, %v1135
        %v1166 = vpack.c.b16 %v1138, %v1136
        %v1167 = vpack.c.b16 %v1141, %v1139
        %v1168 = vpack.c.b16 %v1142, %v1140
        %v1169 = vpack.c.b16 %v1145, %v1143
        %v1170 = vpack.c.b16 %v1146, %v1144
        %v1171 = vpack.c.b16 %v1149, %v1147
        %v1172 = vpack.c.b16 %v1150, %v1148
        %v1173 = vpack.c.b16 %v1153, %v1151
        %v1174 = vpack.c.b16 %v1154, %v1152
        %v1175 = vpack.c.b16 %v1157, %v1155
        %v1176 = vpack.c.b16 %v1158, %v1156
        %v1177 = vpack.c.b16 %v1161, %v1159
        %v1178 = vpack.c.b16 %v1162, %v1160
        %1195 = vmatpush.bf16.msra.mxu0 %v764
        %1196 = vmatpush.bf16.msra.mxu0 %v763
        %1197 = vmatpush.bf16.msra.mxu0 %v762
        %1198 = vmatpush.bf16.msra.mxu0 %v761
        %1199 = vmatpush.bf16.msra.mxu0 %v760
        %1200 = vmatpush.bf16.msra.mxu0 %v759
        %1201 = vmatpush.bf16.msra.mxu0 %v758
        %1202 = vmatpush.bf16.msra.mxu0 %v757
        %1203 = vmatmul.bf16.gmra.mxu0 %v1163
        %v1204 = vpop.f32.mrf.mxu0
        %v1205 = vadd.f32 0.0, %v1204
        %v1206 = vpop.f32.mrf.mxu0
        %v1207 = vadd.f32 0.0, %v1206
        %1208 = vmatmul.bf16.gmra.mxu0 %v1165
        %v1209 = vpop.f32.mrf.mxu0
        %v1210 = vadd.f32 0.0, %v1209
        %v1211 = vpop.f32.mrf.mxu0
        %v1212 = vadd.f32 0.0, %v1211
        %1213 = vmatmul.bf16.gmra.mxu0 %v1167
        %v1214 = vpop.f32.mrf.mxu0
        %v1215 = vadd.f32 0.0, %v1214
        %v1216 = vpop.f32.mrf.mxu0
        %v1217 = vadd.f32 0.0, %v1216
        %1218 = vmatmul.bf16.gmra.mxu0 %v1169
        %v1219 = vpop.f32.mrf.mxu0
        %v1220 = vadd.f32 0.0, %v1219
        %v1221 = vpop.f32.mrf.mxu0
        %v1222 = vadd.f32 0.0, %v1221
        %1223 = vmatmul.bf16.gmra.mxu0 %v1171
        %v1224 = vpop.f32.mrf.mxu0
        %v1225 = vadd.f32 0.0, %v1224
        %v1226 = vpop.f32.mrf.mxu0
        %v1227 = vadd.f32 0.0, %v1226
        %1228 = vmatmul.bf16.gmra.mxu0 %v1173
        %v1229 = vpop.f32.mrf.mxu0
        %v1230 = vadd.f32 0.0, %v1229
        %v1231 = vpop.f32.mrf.mxu0
        %v1232 = vadd.f32 0.0, %v1231
        %1233 = vmatmul.bf16.gmra.mxu0 %v1175
        %v1234 = vpop.f32.mrf.mxu0
        %v1235 = vadd.f32 0.0, %v1234
        %v1236 = vpop.f32.mrf.mxu0
        %v1237 = vadd.f32 0.0, %v1236
        %1238 = vmatmul.bf16.gmra.mxu0 %v1177
        %v1239 = vpop.f32.mrf.mxu0
        %v1240 = vadd.f32 0.0, %v1239
        %v1241 = vpop.f32.mrf.mxu0
        %v1242 = vadd.f32 0.0, %v1241
        %1243 = vdwg.mxu0
        %1244 = vmatpush.bf16.msra.mxu0 %v772
        %1245 = vmatpush.bf16.msra.mxu0 %v771
        %1246 = vmatpush.bf16.msra.mxu0 %v770
        %1247 = vmatpush.bf16.msra.mxu0 %v769
        %1248 = vmatpush.bf16.msra.mxu0 %v768
        %1249 = vmatpush.bf16.msra.mxu0 %v767
        %1250 = vmatpush.bf16.msra.mxu0 %v766
        %1251 = vmatpush.bf16.msra.mxu0 %v765
        %1252 = vmatmul.bf16.gmra.mxu0 %v1164
        %v1253 = vpop.f32.mrf.mxu0
        %v1254 = vadd.f32 %v1205, %v1253
        %v1255 = vpop.f32.mrf.mxu0
        %v1256 = vadd.f32 %v1207, %v1255
        %1257 = vmatmul.bf16.gmra.mxu0 %v1166
        %v1258 = vpop.f32.mrf.mxu0
        %v1259 = vadd.f32 %v1210, %v1258
        %v1260 = vpop.f32.mrf.mxu0
        %v1261 = vadd.f32 %v1212, %v1260
        %1262 = vmatmul.bf16.gmra.mxu0 %v1168
        %v1263 = vpop.f32.mrf.mxu0
        %v1264 = vadd.f32 %v1215, %v1263
        %v1265 = vpop.f32.mrf.mxu0
        %v1266 = vadd.f32 %v1217, %v1265
        %1267 = vmatmul.bf16.gmra.mxu0 %v1170
        %v1268 = vpop.f32.mrf.mxu0
        %v1269 = vadd.f32 %v1220, %v1268
        %v1270 = vpop.f32.mrf.mxu0
        %v1271 = vadd.f32 %v1222, %v1270
        %1272 = vmatmul.bf16.gmra.mxu0 %v1172
        %v1273 = vpop.f32.mrf.mxu0
        %v1274 = vadd.f32 %v1225, %v1273
        %v1275 = vpop.f32.mrf.mxu0
        %v1276 = vadd.f32 %v1227, %v1275
        %1277 = vmatmul.bf16.gmra.mxu0 %v1174
        %v1278 = vpop.f32.mrf.mxu0
        %v1279 = vadd.f32 %v1230, %v1278
        %v1280 = vpop.f32.mrf.mxu0
        %v1281 = vadd.f32 %v1232, %v1280
        %1282 = vmatmul.bf16.gmra.mxu0 %v1176
        %v1283 = vpop.f32.mrf.mxu0
        %v1284 = vadd.f32 %v1235, %v1283
        %v1285 = vpop.f32.mrf.mxu0
        %v1286 = vadd.f32 %v1237, %v1285
        %1287 = vmatmul.bf16.gmra.mxu0 %v1178
        %v1288 = vpop.f32.mrf.mxu0
        %v1289 = vadd.f32 %v1240, %v1288
        %v1290 = vpop.f32.mrf.mxu0
        %v1291 = vadd.f32 %v1242, %v1290
        %1292 = vdwg.mxu0
        %v1293 = vmax.f32 %v1082, %v1254
        %v1294 = vmax.f32 %v1083, %v1256
        %v1295 = vmax.f32 %v1084, %v1259
        %v1296 = vmax.f32 %v1085, %v1261
        %v1297 = vmax.f32 %v1086, %v1264
        %v1298 = vmax.f32 %v1087, %v1266
        %v1299 = vmax.f32 %v1088, %v1269
        %v1300 = vmax.f32 %v1089, %v1271
        %v1301 = vmax.f32 %v1090, %v1274
        %v1302 = vmax.f32 %v1091, %v1276
        %v1303 = vmax.f32 %v1092, %v1279
        %v1304 = vmax.f32 %v1093, %v1281
        %v1305 = vmax.f32 %v1094, %v1284
        %v1306 = vmax.f32 %v1095, %v1286
        %v1307 = vmax.f32 %v1096, %v1289
        %v1308 = vmax.f32 %v1097, %v1291
        %s1309 = scalar_lea.vmem %s533, 384 [#allocation2]
        %v1310 = vld [vmem:[%s1309] sm:$0xff]
        %v1311 = vld [vmem:[%s1309 + $0x8] sm:$0xff]
        %v1312 = vld [vmem:[%s1309 + $0x10] sm:$0xff]
        %v1313 = vld [vmem:[%s1309 + $0x18] sm:$0xff]
        %v1314 = vld [vmem:[%s1309 + $0x20] sm:$0xff]
        %v1315 = vld [vmem:[%s1309 + $0x28] sm:$0xff]
        %v1316 = vld [vmem:[%s1309 + $0x30] sm:$0xff]
        %v1317 = vld [vmem:[%s1309 + $0x38] sm:$0xff]
        %v1318 = vld [vmem:[%s1309 + $0x40] sm:$0xff]
        %v1319 = vld [vmem:[%s1309 + $0x48] sm:$0xff]
        %v1320 = vld [vmem:[%s1309 + $0x50] sm:$0xff]
        %v1321 = vld [vmem:[%s1309 + $0x58] sm:$0xff]
        %v1322 = vld [vmem:[%s1309 + $0x60] sm:$0xff]
        %v1323 = vld [vmem:[%s1309 + $0x68] sm:$0xff]
        %v1324 = vld [vmem:[%s1309 + $0x70] sm:$0xff]
        %v1325 = vld [vmem:[%s1309 + $0x78] sm:$0xff]
        %v1342 = vunpack.c.l.b16 %v1310
        %v1343 = vunpack.c.h.b16 %v1310
        %v1344 = vunpack.c.l.b16 %v1311
        %v1345 = vunpack.c.h.b16 %v1311
        %v1346 = vunpack.c.l.b16 %v1312
        %v1347 = vunpack.c.h.b16 %v1312
        %v1348 = vunpack.c.l.b16 %v1313
        %v1349 = vunpack.c.h.b16 %v1313
        %v1350 = vunpack.c.l.b16 %v1314
        %v1351 = vunpack.c.h.b16 %v1314
        %v1352 = vunpack.c.l.b16 %v1315
        %v1353 = vunpack.c.h.b16 %v1315
        %v1354 = vunpack.c.l.b16 %v1316
        %v1355 = vunpack.c.h.b16 %v1316
        %v1356 = vunpack.c.l.b16 %v1317
        %v1357 = vunpack.c.h.b16 %v1317
        %v1358 = vunpack.c.l.b16 %v1318
        %v1359 = vunpack.c.h.b16 %v1318
        %v1360 = vunpack.c.l.b16 %v1319
        %v1361 = vunpack.c.h.b16 %v1319
        %v1362 = vunpack.c.l.b16 %v1320
        %v1363 = vunpack.c.h.b16 %v1320
        %v1364 = vunpack.c.l.b16 %v1321
        %v1365 = vunpack.c.h.b16 %v1321
        %v1366 = vunpack.c.l.b16 %v1322
        %v1367 = vunpack.c.h.b16 %v1322
        %v1368 = vunpack.c.l.b16 %v1323
        %v1369 = vunpack.c.h.b16 %v1323
        %v1370 = vunpack.c.l.b16 %v1324
        %v1371 = vunpack.c.h.b16 %v1324
        %v1372 = vunpack.c.l.b16 %v1325
        %v1373 = vunpack.c.h.b16 %v1325
        %v1374 = vpack.c.b16 %v1344, %v1342
        %v1375 = vpack.c.b16 %v1345, %v1343
        %v1376 = vpack.c.b16 %v1348, %v1346
        %v1377 = vpack.c.b16 %v1349, %v1347
        %v1378 = vpack.c.b16 %v1352, %v1350
        %v1379 = vpack.c.b16 %v1353, %v1351
        %v1380 = vpack.c.b16 %v1356, %v1354
        %v1381 = vpack.c.b16 %v1357, %v1355
        %v1382 = vpack.c.b16 %v1360, %v1358
        %v1383 = vpack.c.b16 %v1361, %v1359
        %v1384 = vpack.c.b16 %v1364, %v1362
        %v1385 = vpack.c.b16 %v1365, %v1363
        %v1386 = vpack.c.b16 %v1368, %v1366
        %v1387 = vpack.c.b16 %v1369, %v1367
        %v1388 = vpack.c.b16 %v1372, %v1370
        %v1389 = vpack.c.b16 %v1373, %v1371
        %1406 = vmatpush.bf16.msra.mxu0 %v764
        %1407 = vmatpush.bf16.msra.mxu0 %v763
        %1408 = vmatpush.bf16.msra.mxu0 %v762
        %1409 = vmatpush.bf16.msra.mxu0 %v761
        %1410 = vmatpush.bf16.msra.mxu0 %v760
        %1411 = vmatpush.bf16.msra.mxu0 %v759
        %1412 = vmatpush.bf16.msra.mxu0 %v758
        %1413 = vmatpush.bf16.msra.mxu0 %v757
        %1414 = vmatmul.bf16.gmra.mxu0 %v1374
        %v1415 = vpop.f32.mrf.mxu0
        %v1416 = vadd.f32 0.0, %v1415
        %v1417 = vpop.f32.mrf.mxu0
        %v1418 = vadd.f32 0.0, %v1417
        %1419 = vmatmul.bf16.gmra.mxu0 %v1376
        %v1420 = vpop.f32.mrf.mxu0
        %v1421 = vadd.f32 0.0, %v1420
        %v1422 = vpop.f32.mrf.mxu0
        %v1423 = vadd.f32 0.0, %v1422
        %1424 = vmatmul.bf16.gmra.mxu0 %v1378
        %v1425 = vpop.f32.mrf.mxu0
        %v1426 = vadd.f32 0.0, %v1425
        %v1427 = vpop.f32.mrf.mxu0
        %v1428 = vadd.f32 0.0, %v1427
        %1429 = vmatmul.bf16.gmra.mxu0 %v1380
        %v1430 = vpop.f32.mrf.mxu0
        %v1431 = vadd.f32 0.0, %v1430
        %v1432 = vpop.f32.mrf.mxu0
        %v1433 = vadd.f32 0.0, %v1432
        %1434 = vmatmul.bf16.gmra.mxu0 %v1382
        %v1435 = vpop.f32.mrf.mxu0
        %v1436 = vadd.f32 0.0, %v1435
        %v1437 = vpop.f32.mrf.mxu0
        %v1438 = vadd.f32 0.0, %v1437
        %1439 = vmatmul.bf16.gmra.mxu0 %v1384
        %v1440 = vpop.f32.mrf.mxu0
        %v1441 = vadd.f32 0.0, %v1440
        %v1442 = vpop.f32.mrf.mxu0
        %v1443 = vadd.f32 0.0, %v1442
        %1444 = vmatmul.bf16.gmra.mxu0 %v1386
        %v1445 = vpop.f32.mrf.mxu0
        %v1446 = vadd.f32 0.0, %v1445
        %v1447 = vpop.f32.mrf.mxu0
        %v1448 = vadd.f32 0.0, %v1447
        %1449 = vmatmul.bf16.gmra.mxu0 %v1388
        %v1450 = vpop.f32.mrf.mxu0
        %v1451 = vadd.f32 0.0, %v1450
        %v1452 = vpop.f32.mrf.mxu0
        %v1453 = vadd.f32 0.0, %v1452
        %1454 = vdwg.mxu0
        %1455 = vmatpush.bf16.msra.mxu0 %v772
        %1456 = vmatpush.bf16.msra.mxu0 %v771
        %1457 = vmatpush.bf16.msra.mxu0 %v770
        %1458 = vmatpush.bf16.msra.mxu0 %v769
        %1459 = vmatpush.bf16.msra.mxu0 %v768
        %1460 = vmatpush.bf16.msra.mxu0 %v767
        %1461 = vmatpush.bf16.msra.mxu0 %v766
        %1462 = vmatpush.bf16.msra.mxu0 %v765
        %1463 = vmatmul.bf16.gmra.mxu0 %v1375
        %v1464 = vpop.f32.mrf.mxu0
        %v1465 = vadd.f32 %v1416, %v1464
        %v1466 = vpop.f32.mrf.mxu0
        %v1467 = vadd.f32 %v1418, %v1466
        %1468 = vmatmul.bf16.gmra.mxu0 %v1377
        %v1469 = vpop.f32.mrf.mxu0
        %v1470 = vadd.f32 %v1421, %v1469
        %v1471 = vpop.f32.mrf.mxu0
        %v1472 = vadd.f32 %v1423, %v1471
        %1473 = vmatmul.bf16.gmra.mxu0 %v1379
        %v1474 = vpop.f32.mrf.mxu0
        %v1475 = vadd.f32 %v1426, %v1474
        %v1476 = vpop.f32.mrf.mxu0
        %v1477 = vadd.f32 %v1428, %v1476
        %1478 = vmatmul.bf16.gmra.mxu0 %v1381
        %v1479 = vpop.f32.mrf.mxu0
        %v1480 = vadd.f32 %v1431, %v1479
        %v1481 = vpop.f32.mrf.mxu0
        %v1482 = vadd.f32 %v1433, %v1481
        %1483 = vmatmul.bf16.gmra.mxu0 %v1383
        %v1484 = vpop.f32.mrf.mxu0
        %v1485 = vadd.f32 %v1436, %v1484
        %v1486 = vpop.f32.mrf.mxu0
        %v1487 = vadd.f32 %v1438, %v1486
        %1488 = vmatmul.bf16.gmra.mxu0 %v1385
        %v1489 = vpop.f32.mrf.mxu0
        %v1490 = vadd.f32 %v1441, %v1489
        %v1491 = vpop.f32.mrf.mxu0
        %v1492 = vadd.f32 %v1443, %v1491
        %1493 = vmatmul.bf16.gmra.mxu0 %v1387
        %v1494 = vpop.f32.mrf.mxu0
        %v1495 = vadd.f32 %v1446, %v1494
        %v1496 = vpop.f32.mrf.mxu0
        %v1497 = vadd.f32 %v1448, %v1496
        %1498 = vmatmul.bf16.gmra.mxu0 %v1389
        %v1499 = vpop.f32.mrf.mxu0
        %v1500 = vadd.f32 %v1451, %v1499
        %v1501 = vpop.f32.mrf.mxu0
        %v1502 = vadd.f32 %v1453, %v1501
        %1503 = vdwg.mxu0
        %v1504 = vmax.f32 %v1293, %v1465
        %v1505 = vmax.f32 %v1294, %v1467
        %v1506 = vmax.f32 %v1295, %v1470
        %v1507 = vmax.f32 %v1296, %v1472
        %v1508 = vmax.f32 %v1297, %v1475
        %v1509 = vmax.f32 %v1298, %v1477
        %v1510 = vmax.f32 %v1299, %v1480
        %v1511 = vmax.f32 %v1300, %v1482
        %v1512 = vmax.f32 %v1301, %v1485
        %v1513 = vmax.f32 %v1302, %v1487
        %v1514 = vmax.f32 %v1303, %v1490
        %v1515 = vmax.f32 %v1304, %v1492
        %v1516 = vmax.f32 %v1305, %v1495
        %v1517 = vmax.f32 %v1306, %v1497
        %v1518 = vmax.f32 %v1307, %v1500
        %v1519 = vmax.f32 %v1308, %v1502
        %v1520 = vld [vmem:[%s2] sm:$0x1]
        %v1522 = vperm.slane %v1520, 0
        %v1524 = vadd.f32 %v1504, %v1522
        %v1525 = vadd.f32 %v1505, %v1522
        %v1526 = vadd.f32 %v1506, %v1522
        %v1527 = vadd.f32 %v1507, %v1522
        %v1528 = vadd.f32 %v1508, %v1522
        %v1529 = vadd.f32 %v1509, %v1522
        %v1530 = vadd.f32 %v1510, %v1522
        %v1531 = vadd.f32 %v1511, %v1522
        %v1532 = vadd.f32 %v1512, %v1522
        %v1533 = vadd.f32 %v1513, %v1522
        %v1534 = vadd.f32 %v1514, %v1522
        %v1535 = vadd.f32 %v1515, %v1522
        %v1536 = vadd.f32 %v1516, %v1522
        %v1537 = vadd.f32 %v1517, %v1522
        %v1538 = vadd.f32 %v1518, %v1522
        %v1539 = vadd.f32 %v1519, %v1522
        %v1540 = vmax.f32 %v1524, 0.0
        %v1541 = vmax.f32 %v1525, 0.0
        %v1542 = vmax.f32 %v1526, 0.0
        %v1543 = vmax.f32 %v1527, 0.0
        %v1544 = vmax.f32 %v1528, 0.0
        %v1545 = vmax.f32 %v1529, 0.0
        %v1546 = vmax.f32 %v1530, 0.0
        %v1547 = vmax.f32 %v1531, 0.0
        %v1548 = vmax.f32 %v1532, 0.0
        %v1549 = vmax.f32 %v1533, 0.0
        %v1550 = vmax.f32 %v1534, 0.0
        %v1551 = vmax.f32 %v1535, 0.0
        %v1552 = vmax.f32 %v1536, 0.0
        %v1553 = vmax.f32 %v1537, 0.0
        %v1554 = vmax.f32 %v1538, 0.0
        %v1555 = vmax.f32 %v1539, 0.0
        %v1556 = vpack.c.bf16 %v1540, %v1540
        %v1557 = vpack.c.bf16 %v1541, %v1541
        %v1558 = vpack.c.bf16 %v1542, %v1542
        %v1559 = vpack.c.bf16 %v1543, %v1543
        %v1560 = vpack.c.bf16 %v1544, %v1544
        %v1561 = vpack.c.bf16 %v1545, %v1545
        %v1562 = vpack.c.bf16 %v1546, %v1546
        %v1563 = vpack.c.bf16 %v1547, %v1547
        %v1564 = vpack.c.bf16 %v1548, %v1548
        %v1565 = vpack.c.bf16 %v1549, %v1549
        %v1566 = vpack.c.bf16 %v1550, %v1550
        %v1567 = vpack.c.bf16 %v1551, %v1551
        %v1568 = vpack.c.bf16 %v1552, %v1552
        %v1569 = vpack.c.bf16 %v1553, %v1553
        %v1570 = vpack.c.bf16 %v1554, %v1554
        %v1571 = vpack.c.bf16 %v1555, %v1555
        %v1572 = vld [vmem:[%s3] sm:$0xf]
        %v1573 = vld [vmem:[%s3 + $0x4] sm:$0xf]
        %v1574 = vld [vmem:[%s3 + $0x8] sm:$0xf]
        %v1575 = vld [vmem:[%s3 + $0xc] sm:$0xf]
        %v1576 = vld [vmem:[%s3 + $0x10] sm:$0xf]
        %v1577 = vld [vmem:[%s3 + $0x14] sm:$0xf]
        %v1578 = vld [vmem:[%s3 + $0x18] sm:$0xf]
        %v1579 = vld [vmem:[%s3 + $0x1c] sm:$0xf]
        %v1580 = vld [vmem:[%s3 + $0x20] sm:$0xf]
        %v1581 = vld [vmem:[%s3 + $0x24] sm:$0xf]
        %v1582 = vld [vmem:[%s3 + $0x28] sm:$0xf]
        %v1583 = vld [vmem:[%s3 + $0x2c] sm:$0xf]
        %v1584 = vld [vmem:[%s3 + $0x30] sm:$0xf]
        %v1585 = vld [vmem:[%s3 + $0x34] sm:$0xf]
        %v1586 = vld [vmem:[%s3 + $0x38] sm:$0xf]
        %v1587 = vld [vmem:[%s3 + $0x3c] sm:$0xf]
        %s1588 = scalar_lea.vmem %s3, 64
        %v1589 = vld [vmem:[%s1588] sm:$0xf]
        %v1590 = vld [vmem:[%s1588 + $0x4] sm:$0xf]
        %v1591 = vld [vmem:[%s1588 + $0x8] sm:$0xf]
        %v1592 = vld [vmem:[%s1588 + $0xc] sm:$0xf]
        %v1593 = vld [vmem:[%s1588 + $0x10] sm:$0xf]
        %v1594 = vld [vmem:[%s1588 + $0x14] sm:$0xf]
        %v1595 = vld [vmem:[%s1588 + $0x18] sm:$0xf]
        %v1596 = vld [vmem:[%s1588 + $0x1c] sm:$0xf]
        %v1597 = vld [vmem:[%s1588 + $0x20] sm:$0xf]
        %v1598 = vld [vmem:[%s1588 + $0x24] sm:$0xf]
        %v1599 = vld [vmem:[%s1588 + $0x28] sm:$0xf]
        %v1600 = vld [vmem:[%s1588 + $0x2c] sm:$0xf]
        %v1601 = vld [vmem:[%s1588 + $0x30] sm:$0xf]
        %v1602 = vld [vmem:[%s1588 + $0x34] sm:$0xf]
        %v1603 = vld [vmem:[%s1588 + $0x38] sm:$0xf]
        %v1604 = vld [vmem:[%s1588 + $0x3c] sm:$0xf]
        %v1621 = vunpack.c.l.b16 %v1589
        %v1622 = vunpack.c.l.b16 %v1590
        %v1623 = vunpack.c.l.b16 %v1591
        %v1624 = vunpack.c.l.b16 %v1592
        %v1625 = vunpack.c.l.b16 %v1593
        %v1626 = vunpack.c.l.b16 %v1594
        %v1627 = vunpack.c.l.b16 %v1595
        %v1628 = vunpack.c.l.b16 %v1596
        %v1629 = vunpack.c.l.b16 %v1597
        %v1630 = vunpack.c.l.b16 %v1598
        %v1631 = vunpack.c.l.b16 %v1599
        %v1632 = vunpack.c.l.b16 %v1600
        %v1633 = vunpack.c.l.b16 %v1601
        %v1634 = vunpack.c.l.b16 %v1602
        %v1635 = vunpack.c.l.b16 %v1603
        %v1636 = vunpack.c.l.b16 %v1604
        %v1637 = vpack.c.b16 %v1622, %v1621
        %v1638 = vpack.c.b16 %v1624, %v1623
        %v1639 = vpack.c.b16 %v1626, %v1625
        %v1640 = vpack.c.b16 %v1628, %v1627
        %v1641 = vpack.c.b16 %v1630, %v1629
        %v1642 = vpack.c.b16 %v1632, %v1631
        %v1643 = vpack.c.b16 %v1634, %v1633
        %v1644 = vpack.c.b16 %v1636, %v1635
        %1653 = vmatpush.bf16.msra.mxu0 %v1644
        %1654 = vmatpush.bf16.msra.mxu0 %v1643
        %1655 = vmatpush.bf16.msra.mxu0 %v1642
        %1656 = vmatpush.bf16.msra.mxu0 %v1641
        %1657 = vmatpush.bf16.msra.mxu0 %v1640
        %1658 = vmatpush.bf16.msra.mxu0 %v1639
        %1659 = vmatpush.bf16.msra.mxu0 %v1638
        %1660 = vmatpush.bf16.msra.mxu0 %v1637
        %1661 = vmatmul.bf16.gmra.mxu0 %v1557
        %v1662 = vpop.f32.mrf.mxu0
        %v1663 = vadd.f32 0.0, %v1662
        %v1664 = vpop.f32.mrf.mxu0
        %1665 = vdwg.mxu0
        %v1682 = vunpack.c.l.b16 %v1572
        %v1683 = vunpack.c.l.b16 %v1573
        %v1684 = vunpack.c.l.b16 %v1574
        %v1685 = vunpack.c.l.b16 %v1575
        %v1686 = vunpack.c.l.b16 %v1576
        %v1687 = vunpack.c.l.b16 %v1577
        %v1688 = vunpack.c.l.b16 %v1578
        %v1689 = vunpack.c.l.b16 %v1579
        %v1690 = vunpack.c.l.b16 %v1580
        %v1691 = vunpack.c.l.b16 %v1581
        %v1692 = vunpack.c.l.b16 %v1582
        %v1693 = vunpack.c.l.b16 %v1583
        %v1694 = vunpack.c.l.b16 %v1584
        %v1695 = vunpack.c.l.b16 %v1585
        %v1696 = vunpack.c.l.b16 %v1586
        %v1697 = vunpack.c.l.b16 %v1587
        %v1698 = vpack.c.b16 %v1683, %v1682
        %v1699 = vpack.c.b16 %v1685, %v1684
        %v1700 = vpack.c.b16 %v1687, %v1686
        %v1701 = vpack.c.b16 %v1689, %v1688
        %v1702 = vpack.c.b16 %v1691, %v1690
        %v1703 = vpack.c.b16 %v1693, %v1692
        %v1704 = vpack.c.b16 %v1695, %v1694
        %v1705 = vpack.c.b16 %v1697, %v1696
        %1714 = vmatpush.bf16.msra.mxu0 %v1705
        %1715 = vmatpush.bf16.msra.mxu0 %v1704
        %1716 = vmatpush.bf16.msra.mxu0 %v1703
        %1717 = vmatpush.bf16.msra.mxu0 %v1702
        %1718 = vmatpush.bf16.msra.mxu0 %v1701
        %1719 = vmatpush.bf16.msra.mxu0 %v1700
        %1720 = vmatpush.bf16.msra.mxu0 %v1699
        %1721 = vmatpush.bf16.msra.mxu0 %v1698
        %1722 = vmatmul.bf16.gmra.mxu0 %v1556
        %v1723 = vpop.f32.mrf.mxu0
        %v1724 = vadd.f32 %v1663, %v1723
        %v1725 = vpop.f32.mrf.mxu0
        %1726 = vdwg.mxu0
        %s1727 = scalar_lea.vmem %s3, 128
        %v1728 = vld [vmem:[%s1727] sm:$0xf]
        %v1729 = vld [vmem:[%s1727 + $0x4] sm:$0xf]
        %v1730 = vld [vmem:[%s1727 + $0x8] sm:$0xf]
        %v1731 = vld [vmem:[%s1727 + $0xc] sm:$0xf]
        %v1732 = vld [vmem:[%s1727 + $0x10] sm:$0xf]
        %v1733 = vld [vmem:[%s1727 + $0x14] sm:$0xf]
        %v1734 = vld [vmem:[%s1727 + $0x18] sm:$0xf]
        %v1735 = vld [vmem:[%s1727 + $0x1c] sm:$0xf]
        %v1736 = vld [vmem:[%s1727 + $0x20] sm:$0xf]
        %v1737 = vld [vmem:[%s1727 + $0x24] sm:$0xf]
        %v1738 = vld [vmem:[%s1727 + $0x28] sm:$0xf]
        %v1739 = vld [vmem:[%s1727 + $0x2c] sm:$0xf]
        %v1740 = vld [vmem:[%s1727 + $0x30] sm:$0xf]
        %v1741 = vld [vmem:[%s1727 + $0x34] sm:$0xf]
        %v1742 = vld [vmem:[%s1727 + $0x38] sm:$0xf]
        %v1743 = vld [vmem:[%s1727 + $0x3c] sm:$0xf]
        %v1760 = vunpack.c.l.b16 %v1728
        %v1761 = vunpack.c.l.b16 %v1729
        %v1762 = vunpack.c.l.b16 %v1730
        %v1763 = vunpack.c.l.b16 %v1731
        %v1764 = vunpack.c.l.b16 %v1732
        %v1765 = vunpack.c.l.b16 %v1733
        %v1766 = vunpack.c.l.b16 %v1734
        %v1767 = vunpack.c.l.b16 %v1735
        %v1768 = vunpack.c.l.b16 %v1736
        %v1769 = vunpack.c.l.b16 %v1737
        %v1770 = vunpack.c.l.b16 %v1738
        %v1771 = vunpack.c.l.b16 %v1739
        %v1772 = vunpack.c.l.b16 %v1740
        %v1773 = vunpack.c.l.b16 %v1741
        %v1774 = vunpack.c.l.b16 %v1742
        %v1775 = vunpack.c.l.b16 %v1743
        %v1776 = vpack.c.b16 %v1761, %v1760
        %v1777 = vpack.c.b16 %v1763, %v1762
        %v1778 = vpack.c.b16 %v1765, %v1764
        %v1779 = vpack.c.b16 %v1767, %v1766
        %v1780 = vpack.c.b16 %v1769, %v1768
        %v1781 = vpack.c.b16 %v1771, %v1770
        %v1782 = vpack.c.b16 %v1773, %v1772
        %v1783 = vpack.c.b16 %v1775, %v1774
        %1792 = vmatpush.bf16.msra.mxu0 %v1783
        %1793 = vmatpush.bf16.msra.mxu0 %v1782
        %1794 = vmatpush.bf16.msra.mxu0 %v1781
        %1795 = vmatpush.bf16.msra.mxu0 %v1780
        %1796 = vmatpush.bf16.msra.mxu0 %v1779
        %1797 = vmatpush.bf16.msra.mxu0 %v1778
        %1798 = vmatpush.bf16.msra.mxu0 %v1777
        %1799 = vmatpush.bf16.msra.mxu0 %v1776
        %1800 = vmatmul.bf16.gmra.mxu0 %v1558
        %v1801 = vpop.f32.mrf.mxu0
        %v1802 = vadd.f32 0.0, %v1801
        %v1803 = vpop.f32.mrf.mxu0
        %1804 = vdwg.mxu0
        %v1805 = vadd.f32 %v1724, %v1802
        %s1806 = scalar_lea.vmem %s3, 192
        %v1807 = vld [vmem:[%s1806] sm:$0xf]
        %v1808 = vld [vmem:[%s1806 + $0x4] sm:$0xf]
        %v1809 = vld [vmem:[%s1806 + $0x8] sm:$0xf]
        %v1810 = vld [vmem:[%s1806 + $0xc] sm:$0xf]
        %v1811 = vld [vmem:[%s1806 + $0x10] sm:$0xf]
        %v1812 = vld [vmem:[%s1806 + $0x14] sm:$0xf]
        %v1813 = vld [vmem:[%s1806 + $0x18] sm:$0xf]
        %v1814 = vld [vmem:[%s1806 + $0x1c] sm:$0xf]
        %v1815 = vld [vmem:[%s1806 + $0x20] sm:$0xf]
        %v1816 = vld [vmem:[%s1806 + $0x24] sm:$0xf]
        %v1817 = vld [vmem:[%s1806 + $0x28] sm:$0xf]
        %v1818 = vld [vmem:[%s1806 + $0x2c] sm:$0xf]
        %v1819 = vld [vmem:[%s1806 + $0x30] sm:$0xf]
        %v1820 = vld [vmem:[%s1806 + $0x34] sm:$0xf]
        %v1821 = vld [vmem:[%s1806 + $0x38] sm:$0xf]
        %v1822 = vld [vmem:[%s1806 + $0x3c] sm:$0xf]
        %v1839 = vunpack.c.l.b16 %v1807
        %v1840 = vunpack.c.l.b16 %v1808
        %v1841 = vunpack.c.l.b16 %v1809
        %v1842 = vunpack.c.l.b16 %v1810
        %v1843 = vunpack.c.l.b16 %v1811
        %v1844 = vunpack.c.l.b16 %v1812
        %v1845 = vunpack.c.l.b16 %v1813
        %v1846 = vunpack.c.l.b16 %v1814
        %v1847 = vunpack.c.l.b16 %v1815
        %v1848 = vunpack.c.l.b16 %v1816
        %v1849 = vunpack.c.l.b16 %v1817
        %v1850 = vunpack.c.l.b16 %v1818
        %v1851 = vunpack.c.l.b16 %v1819
        %v1852 = vunpack.c.l.b16 %v1820
        %v1853 = vunpack.c.l.b16 %v1821
        %v1854 = vunpack.c.l.b16 %v1822
        %v1855 = vpack.c.b16 %v1840, %v1839
        %v1856 = vpack.c.b16 %v1842, %v1841
        %v1857 = vpack.c.b16 %v1844, %v1843
        %v1858 = vpack.c.b16 %v1846, %v1845
        %v1859 = vpack.c.b16 %v1848, %v1847
        %v1860 = vpack.c.b16 %v1850, %v1849
        %v1861 = vpack.c.b16 %v1852, %v1851
        %v1862 = vpack.c.b16 %v1854, %v1853
        %1871 = vmatpush.bf16.msra.mxu0 %v1862
        %1872 = vmatpush.bf16.msra.mxu0 %v1861
        %1873 = vmatpush.bf16.msra.mxu0 %v1860
        %1874 = vmatpush.bf16.msra.mxu0 %v1859
        %1875 = vmatpush.bf16.msra.mxu0 %v1858
        %1876 = vmatpush.bf16.msra.mxu0 %v1857
        %1877 = vmatpush.bf16.msra.mxu0 %v1856
        %1878 = vmatpush.bf16.msra.mxu0 %v1855
        %1879 = vmatmul.bf16.gmra.mxu0 %v1559
        %v1880 = vpop.f32.mrf.mxu0
        %v1881 = vadd.f32 0.0, %v1880
        %v1882 = vpop.f32.mrf.mxu0
        %1883 = vdwg.mxu0
        %v1884 = vadd.f32 %v1805, %v1881
        %s1885 = scalar_lea.vmem %s3, 256
        %v1886 = vld [vmem:[%s1885] sm:$0xf]
        %v1887 = vld [vmem:[%s1885 + $0x4] sm:$0xf]
        %v1888 = vld [vmem:[%s1885 + $0x8] sm:$0xf]
        %v1889 = vld [vmem:[%s1885 + $0xc] sm:$0xf]
        %v1890 = vld [vmem:[%s1885 + $0x10] sm:$0xf]
        %v1891 = vld [vmem:[%s1885 + $0x14] sm:$0xf]
        %v1892 = vld [vmem:[%s1885 + $0x18] sm:$0xf]
        %v1893 = vld [vmem:[%s1885 + $0x1c] sm:$0xf]
        %v1894 = vld [vmem:[%s1885 + $0x20] sm:$0xf]
        %v1895 = vld [vmem:[%s1885 + $0x24] sm:$0xf]
        %v1896 = vld [vmem:[%s1885 + $0x28] sm:$0xf]
        %v1897 = vld [vmem:[%s1885 + $0x2c] sm:$0xf]
        %v1898 = vld [vmem:[%s1885 + $0x30] sm:$0xf]
        %v1899 = vld [vmem:[%s1885 + $0x34] sm:$0xf]
        %v1900 = vld [vmem:[%s1885 + $0x38] sm:$0xf]
        %v1901 = vld [vmem:[%s1885 + $0x3c] sm:$0xf]
        %v1918 = vunpack.c.l.b16 %v1886
        %v1919 = vunpack.c.l.b16 %v1887
        %v1920 = vunpack.c.l.b16 %v1888
        %v1921 = vunpack.c.l.b16 %v1889
        %v1922 = vunpack.c.l.b16 %v1890
        %v1923 = vunpack.c.l.b16 %v1891
        %v1924 = vunpack.c.l.b16 %v1892
        %v1925 = vunpack.c.l.b16 %v1893
        %v1926 = vunpack.c.l.b16 %v1894
        %v1927 = vunpack.c.l.b16 %v1895
        %v1928 = vunpack.c.l.b16 %v1896
        %v1929 = vunpack.c.l.b16 %v1897
        %v1930 = vunpack.c.l.b16 %v1898
        %v1931 = vunpack.c.l.b16 %v1899
        %v1932 = vunpack.c.l.b16 %v1900
        %v1933 = vunpack.c.l.b16 %v1901
        %v1934 = vpack.c.b16 %v1919, %v1918
        %v1935 = vpack.c.b16 %v1921, %v1920
        %v1936 = vpack.c.b16 %v1923, %v1922
        %v1937 = vpack.c.b16 %v1925, %v1924
        %v1938 = vpack.c.b16 %v1927, %v1926
        %v1939 = vpack.c.b16 %v1929, %v1928
        %v1940 = vpack.c.b16 %v1931, %v1930
        %v1941 = vpack.c.b16 %v1933, %v1932
        %1950 = vmatpush.bf16.msra.mxu0 %v1941
        %1951 = vmatpush.bf16.msra.mxu0 %v1940
        %1952 = vmatpush.bf16.msra.mxu0 %v1939
        %1953 = vmatpush.bf16.msra.mxu0 %v1938
        %1954 = vmatpush.bf16.msra.mxu0 %v1937
        %1955 = vmatpush.bf16.msra.mxu0 %v1936
        %1956 = vmatpush.bf16.msra.mxu0 %v1935
        %1957 = vmatpush.bf16.msra.mxu0 %v1934
        %1958 = vmatmul.bf16.gmra.mxu0 %v1560
        %v1959 = vpop.f32.mrf.mxu0
        %v1960 = vadd.f32 0.0, %v1959
        %v1961 = vpop.f32.mrf.mxu0
        %1962 = vdwg.mxu0
        %v1963 = vadd.f32 %v1884, %v1960
        %s1964 = scalar_lea.vmem %s3, 320
        %v1965 = vld [vmem:[%s1964] sm:$0xf]
        %v1966 = vld [vmem:[%s1964 + $0x4] sm:$0xf]
        %v1967 = vld [vmem:[%s1964 + $0x8] sm:$0xf]
        %v1968 = vld [vmem:[%s1964 + $0xc] sm:$0xf]
        %v1969 = vld [vmem:[%s1964 + $0x10] sm:$0xf]
        %v1970 = vld [vmem:[%s1964 + $0x14] sm:$0xf]
        %v1971 = vld [vmem:[%s1964 + $0x18] sm:$0xf]
        %v1972 = vld [vmem:[%s1964 + $0x1c] sm:$0xf]
        %v1973 = vld [vmem:[%s1964 + $0x20] sm:$0xf]
        %v1974 = vld [vmem:[%s1964 + $0x24] sm:$0xf]
        %v1975 = vld [vmem:[%s1964 + $0x28] sm:$0xf]
        %v1976 = vld [vmem:[%s1964 + $0x2c] sm:$0xf]
        %v1977 = vld [vmem:[%s1964 + $0x30] sm:$0xf]
        %v1978 = vld [vmem:[%s1964 + $0x34] sm:$0xf]
        %v1979 = vld [vmem:[%s1964 + $0x38] sm:$0xf]
        %v1980 = vld [vmem:[%s1964 + $0x3c] sm:$0xf]
        %v1997 = vunpack.c.l.b16 %v1965
        %v1998 = vunpack.c.l.b16 %v1966
        %v1999 = vunpack.c.l.b16 %v1967
        %v2000 = vunpack.c.l.b16 %v1968
        %v2001 = vunpack.c.l.b16 %v1969
        %v2002 = vunpack.c.l.b16 %v1970
        %v2003 = vunpack.c.l.b16 %v1971
        %v2004 = vunpack.c.l.b16 %v1972
        %v2005 = vunpack.c.l.b16 %v1973
        %v2006 = vunpack.c.l.b16 %v1974
        %v2007 = vunpack.c.l.b16 %v1975
        %v2008 = vunpack.c.l.b16 %v1976
        %v2009 = vunpack.c.l.b16 %v1977
        %v2010 = vunpack.c.l.b16 %v1978
        %v2011 = vunpack.c.l.b16 %v1979
        %v2012 = vunpack.c.l.b16 %v1980
        %v2013 = vpack.c.b16 %v1998, %v1997
        %v2014 = vpack.c.b16 %v2000, %v1999
        %v2015 = vpack.c.b16 %v2002, %v2001
        %v2016 = vpack.c.b16 %v2004, %v2003
        %v2017 = vpack.c.b16 %v2006, %v2005
        %v2018 = vpack.c.b16 %v2008, %v2007
        %v2019 = vpack.c.b16 %v2010, %v2009
        %v2020 = vpack.c.b16 %v2012, %v2011
        %2029 = vmatpush.bf16.msra.mxu0 %v2020
        %2030 = vmatpush.bf16.msra.mxu0 %v2019
        %2031 = vmatpush.bf16.msra.mxu0 %v2018
        %2032 = vmatpush.bf16.msra.mxu0 %v2017
        %2033 = vmatpush.bf16.msra.mxu0 %v2016
        %2034 = vmatpush.bf16.msra.mxu0 %v2015
        %2035 = vmatpush.bf16.msra.mxu0 %v2014
        %2036 = vmatpush.bf16.msra.mxu0 %v2013
        %2037 = vmatmul.bf16.gmra.mxu0 %v1561
        %v2038 = vpop.f32.mrf.mxu0
        %v2039 = vadd.f32 0.0, %v2038
        %v2040 = vpop.f32.mrf.mxu0
        %2041 = vdwg.mxu0
        %v2042 = vadd.f32 %v1963, %v2039
        %s2043 = scalar_lea.vmem %s3, 384
        %v2044 = vld [vmem:[%s2043] sm:$0xf]
        %v2045 = vld [vmem:[%s2043 + $0x4] sm:$0xf]
        %v2046 = vld [vmem:[%s2043 + $0x8] sm:$0xf]
        %v2047 = vld [vmem:[%s2043 + $0xc] sm:$0xf]
        %v2048 = vld [vmem:[%s2043 + $0x10] sm:$0xf]
        %v2049 = vld [vmem:[%s2043 + $0x14] sm:$0xf]
        %v2050 = vld [vmem:[%s2043 + $0x18] sm:$0xf]
        %v2051 = vld [vmem:[%s2043 + $0x1c] sm:$0xf]
        %v2052 = vld [vmem:[%s2043 + $0x20] sm:$0xf]
        %v2053 = vld [vmem:[%s2043 + $0x24] sm:$0xf]
        %v2054 = vld [vmem:[%s2043 + $0x28] sm:$0xf]
        %v2055 = vld [vmem:[%s2043 + $0x2c] sm:$0xf]
        %v2056 = vld [vmem:[%s2043 + $0x30] sm:$0xf]
        %v2057 = vld [vmem:[%s2043 + $0x34] sm:$0xf]
        %v2058 = vld [vmem:[%s2043 + $0x38] sm:$0xf]
        %v2059 = vld [vmem:[%s2043 + $0x3c] sm:$0xf]
        %v2076 = vunpack.c.l.b16 %v2044
        %v2077 = vunpack.c.l.b16 %v2045
        %v2078 = vunpack.c.l.b16 %v2046
        %v2079 = vunpack.c.l.b16 %v2047
        %v2080 = vunpack.c.l.b16 %v2048
        %v2081 = vunpack.c.l.b16 %v2049
        %v2082 = vunpack.c.l.b16 %v2050
        %v2083 = vunpack.c.l.b16 %v2051
        %v2084 = vunpack.c.l.b16 %v2052
        %v2085 = vunpack.c.l.b16 %v2053
        %v2086 = vunpack.c.l.b16 %v2054
        %v2087 = vunpack.c.l.b16 %v2055
        %v2088 = vunpack.c.l.b16 %v2056
        %v2089 = vunpack.c.l.b16 %v2057
        %v2090 = vunpack.c.l.b16 %v2058
        %v2091 = vunpack.c.l.b16 %v2059
        %v2092 = vpack.c.b16 %v2077, %v2076
        %v2093 = vpack.c.b16 %v2079, %v2078
        %v2094 = vpack.c.b16 %v2081, %v2080
        %v2095 = vpack.c.b16 %v2083, %v2082
        %v2096 = vpack.c.b16 %v2085, %v2084
        %v2097 = vpack.c.b16 %v2087, %v2086
        %v2098 = vpack.c.b16 %v2089, %v2088
        %v2099 = vpack.c.b16 %v2091, %v2090
        %2108 = vmatpush.bf16.msra.mxu0 %v2099
        %2109 = vmatpush.bf16.msra.mxu0 %v2098
        %2110 = vmatpush.bf16.msra.mxu0 %v2097
        %2111 = vmatpush.bf16.msra.mxu0 %v2096
        %2112 = vmatpush.bf16.msra.mxu0 %v2095
        %2113 = vmatpush.bf16.msra.mxu0 %v2094
        %2114 = vmatpush.bf16.msra.mxu0 %v2093
        %2115 = vmatpush.bf16.msra.mxu0 %v2092
        %2116 = vmatmul.bf16.gmra.mxu0 %v1562
        %v2117 = vpop.f32.mrf.mxu0
        %v2118 = vadd.f32 0.0, %v2117
        %v2119 = vpop.f32.mrf.mxu0
        %2120 = vdwg.mxu0
        %v2121 = vadd.f32 %v2042, %v2118
        %s2122 = scalar_lea.vmem %s3, 448
        %v2123 = vld [vmem:[%s2122] sm:$0xf]
        %v2124 = vld [vmem:[%s2122 + $0x4] sm:$0xf]
        %v2125 = vld [vmem:[%s2122 + $0x8] sm:$0xf]
        %v2126 = vld [vmem:[%s2122 + $0xc] sm:$0xf]
        %v2127 = vld [vmem:[%s2122 + $0x10] sm:$0xf]
        %v2128 = vld [vmem:[%s2122 + $0x14] sm:$0xf]
        %v2129 = vld [vmem:[%s2122 + $0x18] sm:$0xf]
        %v2130 = vld [vmem:[%s2122 + $0x1c] sm:$0xf]
        %v2131 = vld [vmem:[%s2122 + $0x20] sm:$0xf]
        %v2132 = vld [vmem:[%s2122 + $0x24] sm:$0xf]
        %v2133 = vld [vmem:[%s2122 + $0x28] sm:$0xf]
        %v2134 = vld [vmem:[%s2122 + $0x2c] sm:$0xf]
        %v2135 = vld [vmem:[%s2122 + $0x30] sm:$0xf]
        %v2136 = vld [vmem:[%s2122 + $0x34] sm:$0xf]
        %v2137 = vld [vmem:[%s2122 + $0x38] sm:$0xf]
        %v2138 = vld [vmem:[%s2122 + $0x3c] sm:$0xf]
        %v2155 = vunpack.c.l.b16 %v2123
        %v2156 = vunpack.c.l.b16 %v2124
        %v2157 = vunpack.c.l.b16 %v2125
        %v2158 = vunpack.c.l.b16 %v2126
        %v2159 = vunpack.c.l.b16 %v2127
        %v2160 = vunpack.c.l.b16 %v2128
        %v2161 = vunpack.c.l.b16 %v2129
        %v2162 = vunpack.c.l.b16 %v2130
        %v2163 = vunpack.c.l.b16 %v2131
        %v2164 = vunpack.c.l.b16 %v2132
        %v2165 = vunpack.c.l.b16 %v2133
        %v2166 = vunpack.c.l.b16 %v2134
        %v2167 = vunpack.c.l.b16 %v2135
        %v2168 = vunpack.c.l.b16 %v2136
        %v2169 = vunpack.c.l.b16 %v2137
        %v2170 = vunpack.c.l.b16 %v2138
        %v2171 = vpack.c.b16 %v2156, %v2155
        %v2172 = vpack.c.b16 %v2158, %v2157
        %v2173 = vpack.c.b16 %v2160, %v2159
        %v2174 = vpack.c.b16 %v2162, %v2161
        %v2175 = vpack.c.b16 %v2164, %v2163
        %v2176 = vpack.c.b16 %v2166, %v2165
        %v2177 = vpack.c.b16 %v2168, %v2167
        %v2178 = vpack.c.b16 %v2170, %v2169
        %2187 = vmatpush.bf16.msra.mxu0 %v2178
        %2188 = vmatpush.bf16.msra.mxu0 %v2177
        %2189 = vmatpush.bf16.msra.mxu0 %v2176
        %2190 = vmatpush.bf16.msra.mxu0 %v2175
        %2191 = vmatpush.bf16.msra.mxu0 %v2174
        %2192 = vmatpush.bf16.msra.mxu0 %v2173
        %2193 = vmatpush.bf16.msra.mxu0 %v2172
        %2194 = vmatpush.bf16.msra.mxu0 %v2171
        %2195 = vmatmul.bf16.gmra.mxu0 %v1563
        %v2196 = vpop.f32.mrf.mxu0
        %v2197 = vadd.f32 0.0, %v2196
        %v2198 = vpop.f32.mrf.mxu0
        %2199 = vdwg.mxu0
        %v2200 = vadd.f32 %v2121, %v2197
        %s2201 = scalar_lea.vmem %s3, 512
        %v2202 = vld [vmem:[%s2201] sm:$0xf]
        %v2203 = vld [vmem:[%s2201 + $0x4] sm:$0xf]
        %v2204 = vld [vmem:[%s2201 + $0x8] sm:$0xf]
        %v2205 = vld [vmem:[%s2201 + $0xc] sm:$0xf]
        %v2206 = vld [vmem:[%s2201 + $0x10] sm:$0xf]
        %v2207 = vld [vmem:[%s2201 + $0x14] sm:$0xf]
        %v2208 = vld [vmem:[%s2201 + $0x18] sm:$0xf]
        %v2209 = vld [vmem:[%s2201 + $0x1c] sm:$0xf]
        %v2210 = vld [vmem:[%s2201 + $0x20] sm:$0xf]
        %v2211 = vld [vmem:[%s2201 + $0x24] sm:$0xf]
        %v2212 = vld [vmem:[%s2201 + $0x28] sm:$0xf]
        %v2213 = vld [vmem:[%s2201 + $0x2c] sm:$0xf]
        %v2214 = vld [vmem:[%s2201 + $0x30] sm:$0xf]
        %v2215 = vld [vmem:[%s2201 + $0x34] sm:$0xf]
        %v2216 = vld [vmem:[%s2201 + $0x38] sm:$0xf]
        %v2217 = vld [vmem:[%s2201 + $0x3c] sm:$0xf]
        %v2234 = vunpack.c.l.b16 %v2202
        %v2235 = vunpack.c.l.b16 %v2203
        %v2236 = vunpack.c.l.b16 %v2204
        %v2237 = vunpack.c.l.b16 %v2205
        %v2238 = vunpack.c.l.b16 %v2206
        %v2239 = vunpack.c.l.b16 %v2207
        %v2240 = vunpack.c.l.b16 %v2208
        %v2241 = vunpack.c.l.b16 %v2209
        %v2242 = vunpack.c.l.b16 %v2210
        %v2243 = vunpack.c.l.b16 %v2211
        %v2244 = vunpack.c.l.b16 %v2212
        %v2245 = vunpack.c.l.b16 %v2213
        %v2246 = vunpack.c.l.b16 %v2214
        %v2247 = vunpack.c.l.b16 %v2215
        %v2248 = vunpack.c.l.b16 %v2216
        %v2249 = vunpack.c.l.b16 %v2217
        %v2250 = vpack.c.b16 %v2235, %v2234
        %v2251 = vpack.c.b16 %v2237, %v2236
        %v2252 = vpack.c.b16 %v2239, %v2238
        %v2253 = vpack.c.b16 %v2241, %v2240
        %v2254 = vpack.c.b16 %v2243, %v2242
        %v2255 = vpack.c.b16 %v2245, %v2244
        %v2256 = vpack.c.b16 %v2247, %v2246
        %v2257 = vpack.c.b16 %v2249, %v2248
        %2266 = vmatpush.bf16.msra.mxu0 %v2257
        %2267 = vmatpush.bf16.msra.mxu0 %v2256
        %2268 = vmatpush.bf16.msra.mxu0 %v2255
        %2269 = vmatpush.bf16.msra.mxu0 %v2254
        %2270 = vmatpush.bf16.msra.mxu0 %v2253
        %2271 = vmatpush.bf16.msra.mxu0 %v2252
        %2272 = vmatpush.bf16.msra.mxu0 %v2251
        %2273 = vmatpush.bf16.msra.mxu0 %v2250
        %2274 = vmatmul.bf16.gmra.mxu0 %v1564
        %v2275 = vpop.f32.mrf.mxu0
        %v2276 = vadd.f32 0.0, %v2275
        %v2277 = vpop.f32.mrf.mxu0
        %2278 = vdwg.mxu0
        %v2279 = vadd.f32 %v2200, %v2276
        %s2280 = scalar_lea.vmem %s3, 576
        %v2281 = vld [vmem:[%s2280] sm:$0xf]
        %v2282 = vld [vmem:[%s2280 + $0x4] sm:$0xf]
        %v2283 = vld [vmem:[%s2280 + $0x8] sm:$0xf]
        %v2284 = vld [vmem:[%s2280 + $0xc] sm:$0xf]
        %v2285 = vld [vmem:[%s2280 + $0x10] sm:$0xf]
        %v2286 = vld [vmem:[%s2280 + $0x14] sm:$0xf]
        %v2287 = vld [vmem:[%s2280 + $0x18] sm:$0xf]
        %v2288 = vld [vmem:[%s2280 + $0x1c] sm:$0xf]
        %v2289 = vld [vmem:[%s2280 + $0x20] sm:$0xf]
        %v2290 = vld [vmem:[%s2280 + $0x24] sm:$0xf]
        %v2291 = vld [vmem:[%s2280 + $0x28] sm:$0xf]
        %v2292 = vld [vmem:[%s2280 + $0x2c] sm:$0xf]
        %v2293 = vld [vmem:[%s2280 + $0x30] sm:$0xf]
        %v2294 = vld [vmem:[%s2280 + $0x34] sm:$0xf]
        %v2295 = vld [vmem:[%s2280 + $0x38] sm:$0xf]
        %v2296 = vld [vmem:[%s2280 + $0x3c] sm:$0xf]
        %v2313 = vunpack.c.l.b16 %v2281
        %v2314 = vunpack.c.l.b16 %v2282
        %v2315 = vunpack.c.l.b16 %v2283
        %v2316 = vunpack.c.l.b16 %v2284
        %v2317 = vunpack.c.l.b16 %v2285
        %v2318 = vunpack.c.l.b16 %v2286
        %v2319 = vunpack.c.l.b16 %v2287
        %v2320 = vunpack.c.l.b16 %v2288
        %v2321 = vunpack.c.l.b16 %v2289
        %v2322 = vunpack.c.l.b16 %v2290
        %v2323 = vunpack.c.l.b16 %v2291
        %v2324 = vunpack.c.l.b16 %v2292
        %v2325 = vunpack.c.l.b16 %v2293
        %v2326 = vunpack.c.l.b16 %v2294
        %v2327 = vunpack.c.l.b16 %v2295
        %v2328 = vunpack.c.l.b16 %v2296
        %v2329 = vpack.c.b16 %v2314, %v2313
        %v2330 = vpack.c.b16 %v2316, %v2315
        %v2331 = vpack.c.b16 %v2318, %v2317
        %v2332 = vpack.c.b16 %v2320, %v2319
        %v2333 = vpack.c.b16 %v2322, %v2321
        %v2334 = vpack.c.b16 %v2324, %v2323
        %v2335 = vpack.c.b16 %v2326, %v2325
        %v2336 = vpack.c.b16 %v2328, %v2327
        %2345 = vmatpush.bf16.msra.mxu0 %v2336
        %2346 = vmatpush.bf16.msra.mxu0 %v2335
        %2347 = vmatpush.bf16.msra.mxu0 %v2334
        %2348 = vmatpush.bf16.msra.mxu0 %v2333
        %2349 = vmatpush.bf16.msra.mxu0 %v2332
        %2350 = vmatpush.bf16.msra.mxu0 %v2331
        %2351 = vmatpush.bf16.msra.mxu0 %v2330
        %2352 = vmatpush.bf16.msra.mxu0 %v2329
        %2353 = vmatmul.bf16.gmra.mxu0 %v1565
        %v2354 = vpop.f32.mrf.mxu0
        %v2355 = vadd.f32 0.0, %v2354
        %v2356 = vpop.f32.mrf.mxu0
        %2357 = vdwg.mxu0
        %v2358 = vadd.f32 %v2279, %v2355
        %s2359 = scalar_lea.vmem %s3, 640
        %v2360 = vld [vmem:[%s2359] sm:$0xf]
        %v2361 = vld [vmem:[%s2359 + $0x4] sm:$0xf]
        %v2362 = vld [vmem:[%s2359 + $0x8] sm:$0xf]
        %v2363 = vld [vmem:[%s2359 + $0xc] sm:$0xf]
        %v2364 = vld [vmem:[%s2359 + $0x10] sm:$0xf]
        %v2365 = vld [vmem:[%s2359 + $0x14] sm:$0xf]
        %v2366 = vld [vmem:[%s2359 + $0x18] sm:$0xf]
        %v2367 = vld [vmem:[%s2359 + $0x1c] sm:$0xf]
        %v2368 = vld [vmem:[%s2359 + $0x20] sm:$0xf]
        %v2369 = vld [vmem:[%s2359 + $0x24] sm:$0xf]
        %v2370 = vld [vmem:[%s2359 + $0x28] sm:$0xf]
        %v2371 = vld [vmem:[%s2359 + $0x2c] sm:$0xf]
        %v2372 = vld [vmem:[%s2359 + $0x30] sm:$0xf]
        %v2373 = vld [vmem:[%s2359 + $0x34] sm:$0xf]
        %v2374 = vld [vmem:[%s2359 + $0x38] sm:$0xf]
        %v2375 = vld [vmem:[%s2359 + $0x3c] sm:$0xf]
        %v2392 = vunpack.c.l.b16 %v2360
        %v2393 = vunpack.c.l.b16 %v2361
        %v2394 = vunpack.c.l.b16 %v2362
        %v2395 = vunpack.c.l.b16 %v2363
        %v2396 = vunpack.c.l.b16 %v2364
        %v2397 = vunpack.c.l.b16 %v2365
        %v2398 = vunpack.c.l.b16 %v2366
        %v2399 = vunpack.c.l.b16 %v2367
        %v2400 = vunpack.c.l.b16 %v2368
        %v2401 = vunpack.c.l.b16 %v2369
        %v2402 = vunpack.c.l.b16 %v2370
        %v2403 = vunpack.c.l.b16 %v2371
        %v2404 = vunpack.c.l.b16 %v2372
        %v2405 = vunpack.c.l.b16 %v2373
        %v2406 = vunpack.c.l.b16 %v2374
        %v2407 = vunpack.c.l.b16 %v2375
        %v2408 = vpack.c.b16 %v2393, %v2392
        %v2409 = vpack.c.b16 %v2395, %v2394
        %v2410 = vpack.c.b16 %v2397, %v2396
        %v2411 = vpack.c.b16 %v2399, %v2398
        %v2412 = vpack.c.b16 %v2401, %v2400
        %v2413 = vpack.c.b16 %v2403, %v2402
        %v2414 = vpack.c.b16 %v2405, %v2404
        %v2415 = vpack.c.b16 %v2407, %v2406
        %2424 = vmatpush.bf16.msra.mxu0 %v2415
        %2425 = vmatpush.bf16.msra.mxu0 %v2414
        %2426 = vmatpush.bf16.msra.mxu0 %v2413
        %2427 = vmatpush.bf16.msra.mxu0 %v2412
        %2428 = vmatpush.bf16.msra.mxu0 %v2411
        %2429 = vmatpush.bf16.msra.mxu0 %v2410
        %2430 = vmatpush.bf16.msra.mxu0 %v2409
        %2431 = vmatpush.bf16.msra.mxu0 %v2408
        %2432 = vmatmul.bf16.gmra.mxu0 %v1566
        %v2433 = vpop.f32.mrf.mxu0
        %v2434 = vadd.f32 0.0, %v2433
        %v2435 = vpop.f32.mrf.mxu0
        %2436 = vdwg.mxu0
        %v2437 = vadd.f32 %v2358, %v2434
        %s2438 = scalar_lea.vmem %s3, 704
        %v2439 = vld [vmem:[%s2438] sm:$0xf]
        %v2440 = vld [vmem:[%s2438 + $0x4] sm:$0xf]
        %v2441 = vld [vmem:[%s2438 + $0x8] sm:$0xf]
        %v2442 = vld [vmem:[%s2438 + $0xc] sm:$0xf]
        %v2443 = vld [vmem:[%s2438 + $0x10] sm:$0xf]
        %v2444 = vld [vmem:[%s2438 + $0x14] sm:$0xf]
        %v2445 = vld [vmem:[%s2438 + $0x18] sm:$0xf]
        %v2446 = vld [vmem:[%s2438 + $0x1c] sm:$0xf]
        %v2447 = vld [vmem:[%s2438 + $0x20] sm:$0xf]
        %v2448 = vld [vmem:[%s2438 + $0x24] sm:$0xf]
        %v2449 = vld [vmem:[%s2438 + $0x28] sm:$0xf]
        %v2450 = vld [vmem:[%s2438 + $0x2c] sm:$0xf]
        %v2451 = vld [vmem:[%s2438 + $0x30] sm:$0xf]
        %v2452 = vld [vmem:[%s2438 + $0x34] sm:$0xf]
        %v2453 = vld [vmem:[%s2438 + $0x38] sm:$0xf]
        %v2454 = vld [vmem:[%s2438 + $0x3c] sm:$0xf]
        %v2471 = vunpack.c.l.b16 %v2439
        %v2472 = vunpack.c.l.b16 %v2440
        %v2473 = vunpack.c.l.b16 %v2441
        %v2474 = vunpack.c.l.b16 %v2442
        %v2475 = vunpack.c.l.b16 %v2443
        %v2476 = vunpack.c.l.b16 %v2444
        %v2477 = vunpack.c.l.b16 %v2445
        %v2478 = vunpack.c.l.b16 %v2446
        %v2479 = vunpack.c.l.b16 %v2447
        %v2480 = vunpack.c.l.b16 %v2448
        %v2481 = vunpack.c.l.b16 %v2449
        %v2482 = vunpack.c.l.b16 %v2450
        %v2483 = vunpack.c.l.b16 %v2451
        %v2484 = vunpack.c.l.b16 %v2452
        %v2485 = vunpack.c.l.b16 %v2453
        %v2486 = vunpack.c.l.b16 %v2454
        %v2487 = vpack.c.b16 %v2472, %v2471
        %v2488 = vpack.c.b16 %v2474, %v2473
        %v2489 = vpack.c.b16 %v2476, %v2475
        %v2490 = vpack.c.b16 %v2478, %v2477
        %v2491 = vpack.c.b16 %v2480, %v2479
        %v2492 = vpack.c.b16 %v2482, %v2481
        %v2493 = vpack.c.b16 %v2484, %v2483
        %v2494 = vpack.c.b16 %v2486, %v2485
        %2503 = vmatpush.bf16.msra.mxu0 %v2494
        %2504 = vmatpush.bf16.msra.mxu0 %v2493
        %2505 = vmatpush.bf16.msra.mxu0 %v2492
        %2506 = vmatpush.bf16.msra.mxu0 %v2491
        %2507 = vmatpush.bf16.msra.mxu0 %v2490
        %2508 = vmatpush.bf16.msra.mxu0 %v2489
        %2509 = vmatpush.bf16.msra.mxu0 %v2488
        %2510 = vmatpush.bf16.msra.mxu0 %v2487
        %2511 = vmatmul.bf16.gmra.mxu0 %v1567
        %v2512 = vpop.f32.mrf.mxu0
        %v2513 = vadd.f32 0.0, %v2512
        %v2514 = vpop.f32.mrf.mxu0
        %2515 = vdwg.mxu0
        %v2516 = vadd.f32 %v2437, %v2513
        %s2517 = scalar_lea.vmem %s3, 768
        %v2518 = vld [vmem:[%s2517] sm:$0xf]
        %v2519 = vld [vmem:[%s2517 + $0x4] sm:$0xf]
        %v2520 = vld [vmem:[%s2517 + $0x8] sm:$0xf]
        %v2521 = vld [vmem:[%s2517 + $0xc] sm:$0xf]
        %v2522 = vld [vmem:[%s2517 + $0x10] sm:$0xf]
        %v2523 = vld [vmem:[%s2517 + $0x14] sm:$0xf]
        %v2524 = vld [vmem:[%s2517 + $0x18] sm:$0xf]
        %v2525 = vld [vmem:[%s2517 + $0x1c] sm:$0xf]
        %v2526 = vld [vmem:[%s2517 + $0x20] sm:$0xf]
        %v2527 = vld [vmem:[%s2517 + $0x24] sm:$0xf]
        %v2528 = vld [vmem:[%s2517 + $0x28] sm:$0xf]
        %v2529 = vld [vmem:[%s2517 + $0x2c] sm:$0xf]
        %v2530 = vld [vmem:[%s2517 + $0x30] sm:$0xf]
        %v2531 = vld [vmem:[%s2517 + $0x34] sm:$0xf]
        %v2532 = vld [vmem:[%s2517 + $0x38] sm:$0xf]
        %v2533 = vld [vmem:[%s2517 + $0x3c] sm:$0xf]
        %v2550 = vunpack.c.l.b16 %v2518
        %v2551 = vunpack.c.l.b16 %v2519
        %v2552 = vunpack.c.l.b16 %v2520
        %v2553 = vunpack.c.l.b16 %v2521
        %v2554 = vunpack.c.l.b16 %v2522
        %v2555 = vunpack.c.l.b16 %v2523
        %v2556 = vunpack.c.l.b16 %v2524
        %v2557 = vunpack.c.l.b16 %v2525
        %v2558 = vunpack.c.l.b16 %v2526
        %v2559 = vunpack.c.l.b16 %v2527
        %v2560 = vunpack.c.l.b16 %v2528
        %v2561 = vunpack.c.l.b16 %v2529
        %v2562 = vunpack.c.l.b16 %v2530
        %v2563 = vunpack.c.l.b16 %v2531
        %v2564 = vunpack.c.l.b16 %v2532
        %v2565 = vunpack.c.l.b16 %v2533
        %v2566 = vpack.c.b16 %v2551, %v2550
        %v2567 = vpack.c.b16 %v2553, %v2552
        %v2568 = vpack.c.b16 %v2555, %v2554
        %v2569 = vpack.c.b16 %v2557, %v2556
        %v2570 = vpack.c.b16 %v2559, %v2558
        %v2571 = vpack.c.b16 %v2561, %v2560
        %v2572 = vpack.c.b16 %v2563, %v2562
        %v2573 = vpack.c.b16 %v2565, %v2564
        %2582 = vmatpush.bf16.msra.mxu0 %v2573
        %2583 = vmatpush.bf16.msra.mxu0 %v2572
        %2584 = vmatpush.bf16.msra.mxu0 %v2571
        %2585 = vmatpush.bf16.msra.mxu0 %v2570
        %2586 = vmatpush.bf16.msra.mxu0 %v2569
        %2587 = vmatpush.bf16.msra.mxu0 %v2568
        %2588 = vmatpush.bf16.msra.mxu0 %v2567
        %2589 = vmatpush.bf16.msra.mxu0 %v2566
        %2590 = vmatmul.bf16.gmra.mxu0 %v1568
        %v2591 = vpop.f32.mrf.mxu0
        %v2592 = vadd.f32 0.0, %v2591
        %v2593 = vpop.f32.mrf.mxu0
        %2594 = vdwg.mxu0
        %v2595 = vadd.f32 %v2516, %v2592
        %s2596 = scalar_lea.vmem %s3, 832
        %v2597 = vld [vmem:[%s2596] sm:$0xf]
        %v2598 = vld [vmem:[%s2596 + $0x4] sm:$0xf]
        %v2599 = vld [vmem:[%s2596 + $0x8] sm:$0xf]
        %v2600 = vld [vmem:[%s2596 + $0xc] sm:$0xf]
        %v2601 = vld [vmem:[%s2596 + $0x10] sm:$0xf]
        %v2602 = vld [vmem:[%s2596 + $0x14] sm:$0xf]
        %v2603 = vld [vmem:[%s2596 + $0x18] sm:$0xf]
        %v2604 = vld [vmem:[%s2596 + $0x1c] sm:$0xf]
        %v2605 = vld [vmem:[%s2596 + $0x20] sm:$0xf]
        %v2606 = vld [vmem:[%s2596 + $0x24] sm:$0xf]
        %v2607 = vld [vmem:[%s2596 + $0x28] sm:$0xf]
        %v2608 = vld [vmem:[%s2596 + $0x2c] sm:$0xf]
        %v2609 = vld [vmem:[%s2596 + $0x30] sm:$0xf]
        %v2610 = vld [vmem:[%s2596 + $0x34] sm:$0xf]
        %v2611 = vld [vmem:[%s2596 + $0x38] sm:$0xf]
        %v2612 = vld [vmem:[%s2596 + $0x3c] sm:$0xf]
        %v2629 = vunpack.c.l.b16 %v2597
        %v2630 = vunpack.c.l.b16 %v2598
        %v2631 = vunpack.c.l.b16 %v2599
        %v2632 = vunpack.c.l.b16 %v2600
        %v2633 = vunpack.c.l.b16 %v2601
        %v2634 = vunpack.c.l.b16 %v2602
        %v2635 = vunpack.c.l.b16 %v2603
        %v2636 = vunpack.c.l.b16 %v2604
        %v2637 = vunpack.c.l.b16 %v2605
        %v2638 = vunpack.c.l.b16 %v2606
        %v2639 = vunpack.c.l.b16 %v2607
        %v2640 = vunpack.c.l.b16 %v2608
        %v2641 = vunpack.c.l.b16 %v2609
        %v2642 = vunpack.c.l.b16 %v2610
        %v2643 = vunpack.c.l.b16 %v2611
        %v2644 = vunpack.c.l.b16 %v2612
        %v2645 = vpack.c.b16 %v2630, %v2629
        %v2646 = vpack.c.b16 %v2632, %v2631
        %v2647 = vpack.c.b16 %v2634, %v2633
        %v2648 = vpack.c.b16 %v2636, %v2635
        %v2649 = vpack.c.b16 %v2638, %v2637
        %v2650 = vpack.c.b16 %v2640, %v2639
        %v2651 = vpack.c.b16 %v2642, %v2641
        %v2652 = vpack.c.b16 %v2644, %v2643
        %2661 = vmatpush.bf16.msra.mxu0 %v2652
        %2662 = vmatpush.bf16.msra.mxu0 %v2651
        %2663 = vmatpush.bf16.msra.mxu0 %v2650
        %2664 = vmatpush.bf16.msra.mxu0 %v2649
        %2665 = vmatpush.bf16.msra.mxu0 %v2648
        %2666 = vmatpush.bf16.msra.mxu0 %v2647
        %2667 = vmatpush.bf16.msra.mxu0 %v2646
        %2668 = vmatpush.bf16.msra.mxu0 %v2645
        %2669 = vmatmul.bf16.gmra.mxu0 %v1569
        %v2670 = vpop.f32.mrf.mxu0
        %v2671 = vadd.f32 0.0, %v2670
        %v2672 = vpop.f32.mrf.mxu0
        %2673 = vdwg.mxu0
        %v2674 = vadd.f32 %v2595, %v2671
        %s2675 = scalar_lea.vmem %s3, 896
        %v2676 = vld [vmem:[%s2675] sm:$0xf]
        %v2677 = vld [vmem:[%s2675 + $0x4] sm:$0xf]
        %v2678 = vld [vmem:[%s2675 + $0x8] sm:$0xf]
        %v2679 = vld [vmem:[%s2675 + $0xc] sm:$0xf]
        %v2680 = vld [vmem:[%s2675 + $0x10] sm:$0xf]
        %v2681 = vld [vmem:[%s2675 + $0x14] sm:$0xf]
        %v2682 = vld [vmem:[%s2675 + $0x18] sm:$0xf]
        %v2683 = vld [vmem:[%s2675 + $0x1c] sm:$0xf]
        %v2684 = vld [vmem:[%s2675 + $0x20] sm:$0xf]
        %v2685 = vld [vmem:[%s2675 + $0x24] sm:$0xf]
        %v2686 = vld [vmem:[%s2675 + $0x28] sm:$0xf]
        %v2687 = vld [vmem:[%s2675 + $0x2c] sm:$0xf]
        %v2688 = vld [vmem:[%s2675 + $0x30] sm:$0xf]
        %v2689 = vld [vmem:[%s2675 + $0x34] sm:$0xf]
        %v2690 = vld [vmem:[%s2675 + $0x38] sm:$0xf]
        %v2691 = vld [vmem:[%s2675 + $0x3c] sm:$0xf]
        %v2708 = vunpack.c.l.b16 %v2676
        %v2709 = vunpack.c.l.b16 %v2677
        %v2710 = vunpack.c.l.b16 %v2678
        %v2711 = vunpack.c.l.b16 %v2679
        %v2712 = vunpack.c.l.b16 %v2680
        %v2713 = vunpack.c.l.b16 %v2681
        %v2714 = vunpack.c.l.b16 %v2682
        %v2715 = vunpack.c.l.b16 %v2683
        %v2716 = vunpack.c.l.b16 %v2684
        %v2717 = vunpack.c.l.b16 %v2685
        %v2718 = vunpack.c.l.b16 %v2686
        %v2719 = vunpack.c.l.b16 %v2687
        %v2720 = vunpack.c.l.b16 %v2688
        %v2721 = vunpack.c.l.b16 %v2689
        %v2722 = vunpack.c.l.b16 %v2690
        %v2723 = vunpack.c.l.b16 %v2691
        %v2724 = vpack.c.b16 %v2709, %v2708
        %v2725 = vpack.c.b16 %v2711, %v2710
        %v2726 = vpack.c.b16 %v2713, %v2712
        %v2727 = vpack.c.b16 %v2715, %v2714
        %v2728 = vpack.c.b16 %v2717, %v2716
        %v2729 = vpack.c.b16 %v2719, %v2718
        %v2730 = vpack.c.b16 %v2721, %v2720
        %v2731 = vpack.c.b16 %v2723, %v2722
        %2740 = vmatpush.bf16.msra.mxu0 %v2731
        %2741 = vmatpush.bf16.msra.mxu0 %v2730
        %2742 = vmatpush.bf16.msra.mxu0 %v2729
        %2743 = vmatpush.bf16.msra.mxu0 %v2728
        %2744 = vmatpush.bf16.msra.mxu0 %v2727
        %2745 = vmatpush.bf16.msra.mxu0 %v2726
        %2746 = vmatpush.bf16.msra.mxu0 %v2725
        %2747 = vmatpush.bf16.msra.mxu0 %v2724
        %2748 = vmatmul.bf16.gmra.mxu0 %v1570
        %v2749 = vpop.f32.mrf.mxu0
        %v2750 = vadd.f32 0.0, %v2749
        %v2751 = vpop.f32.mrf.mxu0
        %2752 = vdwg.mxu0
        %v2753 = vadd.f32 %v2674, %v2750
        %s2754 = scalar_lea.vmem %s3, 960
        %v2755 = vld [vmem:[%s2754] sm:$0xf]
        %v2756 = vld [vmem:[%s2754 + $0x4] sm:$0xf]
        %v2757 = vld [vmem:[%s2754 + $0x8] sm:$0xf]
        %v2758 = vld [vmem:[%s2754 + $0xc] sm:$0xf]
        %v2759 = vld [vmem:[%s2754 + $0x10] sm:$0xf]
        %v2760 = vld [vmem:[%s2754 + $0x14] sm:$0xf]
        %v2761 = vld [vmem:[%s2754 + $0x18] sm:$0xf]
        %v2762 = vld [vmem:[%s2754 + $0x1c] sm:$0xf]
        %v2763 = vld [vmem:[%s2754 + $0x20] sm:$0xf]
        %v2764 = vld [vmem:[%s2754 + $0x24] sm:$0xf]
        %v2765 = vld [vmem:[%s2754 + $0x28] sm:$0xf]
        %v2766 = vld [vmem:[%s2754 + $0x2c] sm:$0xf]
        %v2767 = vld [vmem:[%s2754 + $0x30] sm:$0xf]
        %v2768 = vld [vmem:[%s2754 + $0x34] sm:$0xf]
        %v2769 = vld [vmem:[%s2754 + $0x38] sm:$0xf]
        %v2770 = vld [vmem:[%s2754 + $0x3c] sm:$0xf]
        %v2787 = vunpack.c.l.b16 %v2755
        %v2788 = vunpack.c.l.b16 %v2756
        %v2789 = vunpack.c.l.b16 %v2757
        %v2790 = vunpack.c.l.b16 %v2758
        %v2791 = vunpack.c.l.b16 %v2759
        %v2792 = vunpack.c.l.b16 %v2760
        %v2793 = vunpack.c.l.b16 %v2761
        %v2794 = vunpack.c.l.b16 %v2762
        %v2795 = vunpack.c.l.b16 %v2763
        %v2796 = vunpack.c.l.b16 %v2764
        %v2797 = vunpack.c.l.b16 %v2765
        %v2798 = vunpack.c.l.b16 %v2766
        %v2799 = vunpack.c.l.b16 %v2767
        %v2800 = vunpack.c.l.b16 %v2768
        %v2801 = vunpack.c.l.b16 %v2769
        %v2802 = vunpack.c.l.b16 %v2770
        %v2803 = vpack.c.b16 %v2788, %v2787
        %v2804 = vpack.c.b16 %v2790, %v2789
        %v2805 = vpack.c.b16 %v2792, %v2791
        %v2806 = vpack.c.b16 %v2794, %v2793
        %v2807 = vpack.c.b16 %v2796, %v2795
        %v2808 = vpack.c.b16 %v2798, %v2797
        %v2809 = vpack.c.b16 %v2800, %v2799
        %v2810 = vpack.c.b16 %v2802, %v2801
        %2819 = vmatpush.bf16.msra.mxu0 %v2810
        %2820 = vmatpush.bf16.msra.mxu0 %v2809
        %2821 = vmatpush.bf16.msra.mxu0 %v2808
        %2822 = vmatpush.bf16.msra.mxu0 %v2807
        %2823 = vmatpush.bf16.msra.mxu0 %v2806
        %2824 = vmatpush.bf16.msra.mxu0 %v2805
        %2825 = vmatpush.bf16.msra.mxu0 %v2804
        %2826 = vmatpush.bf16.msra.mxu0 %v2803
        %2827 = vmatmul.bf16.gmra.mxu0 %v1571
        %v2828 = vpop.f32.mrf.mxu0
        %v2829 = vadd.f32 0.0, %v2828
        %v2830 = vpop.f32.mrf.mxu0
        %2831 = vdwg.mxu0
        %v2832 = vadd.f32 %v2753, %v2829
        %v2833 = vld [vmem:[%s4] sm:$0x1]
        %v2835 = vperm.slane %v2833, 0
        %v2837 = vadd.f32 %v2832, %v2835
        %v2838 = vmax.f32 %v2837, 0.0
        %v2839 = vpack.c.bf16 %v2838, %v2838
        %v2840 = vld [vmem:[%s5] sm:$0xf]
        %v2841 = vld [vmem:[%s5 + $0x4] sm:$0xf]
        %v2842 = vld [vmem:[%s5 + $0x8] sm:$0xf]
        %v2843 = vld [vmem:[%s5 + $0xc] sm:$0xf]
        %v2844 = vld [vmem:[%s5 + $0x10] sm:$0xf]
        %v2845 = vld [vmem:[%s5 + $0x14] sm:$0xf]
        %v2846 = vld [vmem:[%s5 + $0x18] sm:$0xf]
        %v2847 = vld [vmem:[%s5 + $0x1c] sm:$0xf]
        %v2848 = vld [vmem:[%s5 + $0x20] sm:$0xf]
        %v2849 = vld [vmem:[%s5 + $0x24] sm:$0xf]
        %v2850 = vld [vmem:[%s5 + $0x28] sm:$0xf]
        %v2851 = vld [vmem:[%s5 + $0x2c] sm:$0xf]
        %v2852 = vld [vmem:[%s5 + $0x30] sm:$0xf]
        %v2853 = vld [vmem:[%s5 + $0x34] sm:$0xf]
        %v2854 = vld [vmem:[%s5 + $0x38] sm:$0xf]
        %v2855 = vld [vmem:[%s5 + $0x3c] sm:$0xf]
        %v2856 = vld [vmem:[%s6] sm:$0x1]
        %v2858 = vperm.slane %v2856, 0
        %v2876 = vunpack.c.l.b16 %v2840
        %v2877 = vunpack.c.l.b16 %v2841
        %v2878 = vunpack.c.l.b16 %v2842
        %v2879 = vunpack.c.l.b16 %v2843
        %v2880 = vunpack.c.l.b16 %v2844
        %v2881 = vunpack.c.l.b16 %v2845
        %v2882 = vunpack.c.l.b16 %v2846
        %v2883 = vunpack.c.l.b16 %v2847
        %v2884 = vunpack.c.l.b16 %v2848
        %v2885 = vunpack.c.l.b16 %v2849
        %v2886 = vunpack.c.l.b16 %v2850
        %v2887 = vunpack.c.l.b16 %v2851
        %v2888 = vunpack.c.l.b16 %v2852
        %v2889 = vunpack.c.l.b16 %v2853
        %v2890 = vunpack.c.l.b16 %v2854
        %v2891 = vunpack.c.l.b16 %v2855
        %v2892 = vpack.c.b16 %v2877, %v2876
        %v2893 = vpack.c.b16 %v2879, %v2878
        %v2894 = vpack.c.b16 %v2881, %v2880
        %v2895 = vpack.c.b16 %v2883, %v2882
        %v2896 = vpack.c.b16 %v2885, %v2884
        %v2897 = vpack.c.b16 %v2887, %v2886
        %v2898 = vpack.c.b16 %v2889, %v2888
        %v2899 = vpack.c.b16 %v2891, %v2890
        %2908 = vmatpush.bf16.msra.mxu0 %v2899
        %2909 = vmatpush.bf16.msra.mxu0 %v2898
        %2910 = vmatpush.bf16.msra.mxu0 %v2897
        %2911 = vmatpush.bf16.msra.mxu0 %v2896
        %2912 = vmatpush.bf16.msra.mxu0 %v2895
        %2913 = vmatpush.bf16.msra.mxu0 %v2894
        %2914 = vmatpush.bf16.msra.mxu0 %v2893
        %2915 = vmatpush.bf16.msra.mxu0 %v2892
        %2916 = vmatmul.bf16.gmra.mxu0 %v2839
        %v2917 = vpop.f32.mrf.mxu0
        %v2918 = vadd.f32 %v2858, %v2917
        %v2919 = vpop.f32.mrf.mxu0
        %2920 = vdwg.mxu0
        %2921 = vmax.xlane.f32.xlu0 %v2918
        %v2922 = vpop.xlane.xlu0 %2921
        %v2923 = vsub.f32 %v2918, %v2922
        %v2924 = vmul.f32 %v2923, 1.442695
        %v2925 = vpow.pop %v2924
        %2926 = vadd.xlane.f32.xlu0 %v2925
        %v2927 = vpop.xlane.xlu0 %2926
        %v2928 = vlog2.pop %v2927
        %v2929 = vmul.f32 %v2928, 0.6931472
        %v2930 = vadd.f32 %v2922, %v2929
        %v2931 = vsub.f32 %v2918, %v2930
        %2932 = vst [vmem:[%s564] sm:$0xff] %v2931
        %p2933 = scmp.lt.s32.totalorder %s18, 1
        %s2934 = scalar_select %p2933, %s18, 1
        %s2935 = smul.addr %s2934, 8
        %s2936 = scalar_lea.vmem %s7, %s2935
        // Predicated region
        $region87: #{net_forward.3} parent=81 // pred_check
          %p2937 = pneg %p188
        $region88: #{net_forward.3} parent=81 // pred_check_branch
          %2939 = sbr.rel (%p2937) target = $region90
        $region89: #{net_forward.3} parent=81 // pred_region
          _
        $region90: #{net_forward.3} parent=81 // pred_fallthru
          _
      $region82: #{net_forward.3} parent=5 // pred_fallthru
        _
      %p2940 = scmp.le.s32.totalorder 2, %s13
      // Predicated region
      $region91: #{net_forward.3} parent=5 // pred_check
        %p2941 = pneg %p2940
      $region92: #{net_forward.3} parent=5 // pred_check_branch
        %2943 = sbr.rel (%p2941) target = $region94
      $region93: #{net_forward.3} parent=5 // pred_region
        %s2944 = ssub.s32 %s13, 2
        // Predicated region
        $region95: #{net_forward.3} parent=93 // pred_check
          %p2945 = pneg %p194
        $region96: #{net_forward.3} parent=93 // pred_check_branch
          %2947 = sbr.rel (%p2945) target = $region98
        $region97: #{net_forward.3} parent=93 // pred_region
          %p2948 = scmp.lt.s32.totalorder %s19, 1
          %s2949 = scalar_select %p2948, %s19, 1
          %s2950 = smul.addr %s2949, 8
          %s2951 = scalar_lea.vmem %s7, %s2950
        $region98: #{net_forward.3} parent=93 // pred_fallthru
          _
      $region94: #{net_forward.3} parent=5 // pred_fallthru
        _
    $region6: #{net_forward.3} parent=1 // loop_footer
      %s17 = sadd.s32 1, %s13
    $region7: #{net_forward.3} parent=1 // loop_footer_branch
      %12 = sbr.rel target = $region3
    $region8: #{net_forward.3} parent=1 // loop_exit
      _

</llo_original>
